<compile_context>
chip_gen: v7x
topology: tpu7x:2x2x1
jax: 0.10.0
libtpu: 0.0.40
codegen_flags: <defaults>
</compile_context>

<pallas_src>
import jax
import jax.numpy as jnp
from jax.experimental import pallas as pl
from jax.experimental.pallas import tpu as pltpu

FEAT_DIM = 64
HIDDEN_DIM = 128

_POOL_CHUNK = 8          # sublane-tile sized chunks for the f32 pool accumulation


def _detector_kernel(fmap_ref, wcomb_ref, bcomb_ref, whh_ref, bhn_ref,
                     w1_ref, b1_ref, w2_ref, b2_ref, out_ref):
    TB, T, S, C = fmap_ref.shape
    H = whh_ref.shape[0]

    # --- AdaptiveAvgPool2d(1): sum over S, accumulated in f32 in small chunks
    #     (the 1/S scale is folded into wcomb host-side).  Chunking keeps the
    #     f32 intermediate bounded instead of a 2x-tile-size VMEM copy. ---
    pooled = jnp.zeros((TB, T, C), jnp.float32)
    for s0 in range(0, S, _POOL_CHUNK):
        s1 = min(s0 + _POOL_CHUNK, S)
        chunk = fmap_ref[:, :, s0:s1, :].astype(jnp.float32)       # (TB,T,cs,C)
        pooled = pooled + jnp.sum(chunk, axis=2)                   # (TB,T,C)

    # --- fused fc + GRU input projection: one (TB*T,1280)@(1280,3H) matmul ---
    x = pooled.reshape(TB * T, C).astype(jnp.bfloat16)
    gi_all = (jnp.dot(x, wcomb_ref[...], preferred_element_type=jnp.float32)
              + bcomb_ref[...]).reshape(TB, T, 3 * H)              # (TB,T,3H) f32

    # --- GRU recurrence (batch_first, PyTorch gate order r,z,n).
    #     b_hh for r/z is folded into bcomb; only the n-gate b_hh stays inside
    #     the r*(.) term.  T is a small static constant -> unrolled; for large
    #     T switch to lax.fori_loop over a VMEM scratch holding gi_all. ---
    whh = whh_ref[...]                                             # (H,3H) bf16
    bhn = bhn_ref[...]                                             # (1,H)  f32
    h = jnp.zeros((TB, H), jnp.float32)
    for t in range(T):
        gi = gi_all[:, t, :]                                       # (TB,3H)
        gh = jnp.dot(h.astype(jnp.bfloat16), whh,
                     preferred_element_type=jnp.float32)           # (TB,3H)
        r = jax.nn.sigmoid(gi[:, 0:H] + gh[:, 0:H])
        z = jax.nn.sigmoid(gi[:, H:2 * H] + gh[:, H:2 * H])
        n = jnp.tanh(gi[:, 2 * H:] + r * (gh[:, 2 * H:] + bhn))
        h = (1.0 - z) * n + z * h

    # --- head: Linear(H,64) -> ReLU -> Linear(64,1) -> Sigmoid ---
    h1 = jnp.maximum(
        jnp.dot(h.astype(jnp.bfloat16), w1_ref[...],
                preferred_element_type=jnp.float32) + b1_ref[...], 0.0)   # (TB,64)
    logit = jnp.sum(h1 * w2_ref[...], axis=-1, keepdims=True) + b2_ref[...]  # (TB,1)
    prob_col = jax.nn.sigmoid(logit)                               # (TB,1)

    # Lane-dense output: move the (TB,1) column onto a (1,TB) row with a
    # one-hot mask + sublane reduce (avoids transpose/reshape relayouts).
    ri = jax.lax.broadcasted_iota(jnp.int32, (TB, TB), 0)
    ci = jax.lax.broadcasted_iota(jnp.int32, (TB, TB), 1)
    row = jnp.sum(jnp.where(ri == ci, prob_col, 0.0), axis=0, keepdims=True)  # (1,TB)
    out_ref[...] = row[None, :, :]                                 # (1,1,TB)


def gru_anomaly_detector(fmap, params, *, tb=32):
    """fmap: (B, T, S, 1280) backbone feature maps (bf16 preferred, f32 ok).
    Returns (B,) anomaly probabilities."""
    B, T, S, C = fmap.shape
    H = HIDDEN_DIM

    # ---- batch-tile sizing: double-buffered fmap tile must fit VMEM on every
    # generation (v7x: 64 MiB physical), and we keep >= 2 grid steps when
    # possible so v7x's two TensorCores both get work. ----
    row_bytes = T * S * C * fmap.dtype.itemsize
    tile_budget = 40 * 1024 * 1024
    tb = int(max(1, min(tb, tile_budget // (2 * row_bytes), B)))
    if B >= 2 and pl.cdiv(B, tb) < 2:
        tb = max(1, (B + 1) // 2)
    n_tiles = pl.cdiv(B, tb)
    B_pad = n_tiles * tb
    if B_pad != B:   # rare ragged fallback; prefer B % tb == 0 upstream
        fmap = jnp.pad(fmap, ((0, B_pad - B), (0, 0), (0, 0), (0, 0)))

    # ---- fold fc (and the 1/S pool scale) into the GRU input projection ----
    fc_w = params["fc_w"].astype(jnp.float32)                  # (F, 1280)
    w_ih = params["w_ih"].astype(jnp.float32)                  # (3H, F)
    w_comb = (fc_w.T / S) @ w_ih.T                             # (1280, 3H) f32
    b_comb = params["fc_b"].astype(jnp.float32) @ w_ih.T + params["b_ih"]
    b_comb = b_comb.at[:2 * H].add(params["b_hh"][:2 * H])     # fold r/z hidden bias
    b_hn = params["b_hh"][2 * H:]                              # n-gate hidden bias

    args = (
        fmap,                                                  # (B_pad,T,S,C) producer dtype
        w_comb.astype(jnp.bfloat16),                           # (1280, 3H)
        b_comb[None, :].astype(jnp.float32),                   # (1, 3H)
        params["w_hh"].T.astype(jnp.bfloat16),                 # (H, 3H)
        b_hn[None, :].astype(jnp.float32),                     # (1, H)
        params["h1_w"].T.astype(jnp.bfloat16),                 # (H, 64)
        params["h1_b"][None, :].astype(jnp.float32),           # (1, 64)
        params["h2_w"].astype(jnp.float32),                    # (1, 64)
        params["h2_b"][None, :].astype(jnp.float32),           # (1, 1)
    )

    const = lambda i: (0, 0)    # weights stay VMEM-resident across grid steps
    in_specs = [
        pl.BlockSpec((tb, T, S, C), lambda i: (i, 0, 0, 0)),   # fmap batch tile
        pl.BlockSpec((C, 3 * H), const),
        pl.BlockSpec((1, 3 * H), const),
        pl.BlockSpec((H, 3 * H), const),
        pl.BlockSpec((1, H), const),
        pl.BlockSpec((H, 64), const),
        pl.BlockSpec((1, 64), const),
        pl.BlockSpec((1, 64), const),
        pl.BlockSpec((1, 1), const),
    ]

    vmem_limit = int(min(64 * 1024 * 1024,
                         2 * tb * row_bytes + 16 * 1024 * 1024))
    out = pl.pallas_call(
        _detector_kernel,
        out_shape=jax.ShapeDtypeStruct((n_tiles, 1, tb), jnp.float32),
        grid=(n_tiles,),
        in_specs=in_specs,
        out_specs=pl.BlockSpec((1, 1, tb), lambda i: (i, 0, 0)),  # lane-dense rows
        compiler_params=pltpu.CompilerParams(
            dimension_semantics=("parallel",),
            vmem_limit_bytes=vmem_limit),
    )(*args)
    return out.reshape(-1)[:B]            # matches .squeeze(1) -> (B,)


def reference(fmap, params):
    """Pure-JAX f32 reproduction of the PyTorch forward (from the pool onward)."""
    H = HIDDEN_DIM
    pooled = jnp.mean(fmap, axis=2)                                 # (B, T, 1280)
    feats = pooled @ params["fc_w"].T + params["fc_b"]              # (B, T, F)
    B, T, _ = feats.shape
    h = jnp.zeros((B, H), jnp.float32)
    for t in range(T):
        x = feats[:, t, :]
        gi = x @ params["w_ih"].T + params["b_ih"]
        gh = h @ params["w_hh"].T + params["b_hh"]
        r = jax.nn.sigmoid(gi[:, :H] + gh[:, :H])
        z = jax.nn.sigmoid(gi[:, H:2 * H] + gh[:, H:2 * H])
        n = jnp.tanh(gi[:, 2 * H:] + r * gh[:, 2 * H:])
        h = (1.0 - z) * n + z * h
    h1 = jax.nn.relu(h @ params["h1_w"].T + params["h1_b"])
    logit = h1 @ params["h2_w"].T + params["h2_b"]
    return jax.nn.sigmoid(logit)[:, 0]


def make_params(key):
    """Deterministic parameter init matching the PyTorch module's shapes."""
    ks = jax.random.split(key, 10)
    F, H = FEAT_DIM, HIDDEN_DIM

    def u(k, shape, fan_in):
        bound = 1.0 / jnp.sqrt(fan_in)
        return jax.random.uniform(k, shape, jnp.float32, -bound, bound)

    return {
        # MobileNetEncoder.fc : Linear(1280, FEAT_DIM)
        "fc_w": u(ks[0], (F, 1280), 1280), "fc_b": u(ks[1], (F,), 1280),
        # nn.GRU(FEAT_DIM, HIDDEN_DIM, batch_first=True)  (gate order r,z,n)
        "w_ih": u(ks[2], (3 * H, F), H), "w_hh": u(ks[3], (3 * H, H), H),
        "b_ih": u(ks[4], (3 * H,), H), "b_hh": u(ks[5], (3 * H,), H),
        # head: Linear(H,64) -> ReLU -> Linear(64,1) -> Sigmoid
        "h1_w": u(ks[6], (64, H), H), "h1_b": u(ks[7], (64,), H),
        "h2_w": u(ks[8], (1, 64), 64), "h2_b": u(ks[9], (1,), 64),
    }


if __name__ == "__main__":
    B, T, Hf, Wf, C = 2, 4, 4, 4, 1280   # backbone output: 1280 channels, small spatial
    key = jax.random.PRNGKey(0)
    k_x, k_p = jax.random.split(key)

    # Synthetic MobileNetV2 feature maps, emitted by the "backbone" directly in
    # bf16 (post-ReLU6 => non-negative), layout (B, T, S, C).
    fmap = jax.random.uniform(
        k_x, (B, T, Hf * Wf, C), jnp.float32, 0.0, 2.0).astype(jnp.bfloat16)
    params = make_params(k_p)

    prob = jax.block_until_ready(gru_anomaly_detector(fmap, params))
    ref = jax.block_until_ready(reference(fmap.astype(jnp.float32), params))

    assert prob.shape == (B,)
    # bf16 activations/weights in the kernel vs f32 reference -> relaxed tolerance.
    assert jnp.allclose(prob, ref, rtol=3e-2, atol=3e-2), (prob, ref)
    print("KERNEL_OK")
</pallas_src>

<mosaic_0001>
module attributes {stable_mosaic.version = 11 : i64} {
  func.func @_detector_kernel(%arg0: i32, %arg1: memref<1x4x16x1280xbf16, #tpu.memory_space<vmem>>, %arg2: memref<1280x384xbf16, #tpu.memory_space<vmem>>, %arg3: memref<1x384xf32, #tpu.memory_space<vmem>>, %arg4: memref<128x384xbf16, #tpu.memory_space<vmem>>, %arg5: memref<1x128xf32, #tpu.memory_space<vmem>>, %arg6: memref<128x64xbf16, #tpu.memory_space<vmem>>, %arg7: memref<1x64xf32, #tpu.memory_space<vmem>>, %arg8: memref<1x64xf32, #tpu.memory_space<vmem>>, %arg9: memref<1x1xf32, #tpu.memory_space<vmem>>, %arg10: memref<1x1x1xf32, #tpu.memory_space<vmem>>) attributes {dimension_semantics = [#tpu.dimension_semantics<parallel>], iteration_bounds = array<i64: 2>, scalar_prefetch = 0 : i64, scratch_operands = 0 : i64, tpu.core_type = #tpu.core_type<tc>, window_params = [{transform_indices = @transform_0, window_bounds = array<i64: 1, 4, 16, 1280>}, {pipeline_mode = #tpu.pipeline_mode<synchronous>, transform_indices = @transform_1, window_bounds = array<i64: 1280, 384>}, {pipeline_mode = #tpu.pipeline_mode<synchronous>, transform_indices = @transform_2, window_bounds = array<i64: 1, 384>}, {pipeline_mode = #tpu.pipeline_mode<synchronous>, transform_indices = @transform_3, window_bounds = array<i64: 128, 384>}, {pipeline_mode = #tpu.pipeline_mode<synchronous>, transform_indices = @transform_4, window_bounds = array<i64: 1, 128>}, {pipeline_mode = #tpu.pipeline_mode<synchronous>, transform_indices = @transform_5, window_bounds = array<i64: 128, 64>}, {pipeline_mode = #tpu.pipeline_mode<synchronous>, transform_indices = @transform_6, window_bounds = array<i64: 1, 64>}, {pipeline_mode = #tpu.pipeline_mode<synchronous>, transform_indices = @transform_7, window_bounds = array<i64: 1, 64>}, {pipeline_mode = #tpu.pipeline_mode<synchronous>, transform_indices = @transform_8, window_bounds = array<i64: 1, 1>}, {transform_indices = @transform_9, window_bounds = array<i64: 1, 1, 1>}]} {
    %cst = arith.constant 0.000000e+00 : f32
    %0 = vector.broadcast %cst : f32 to vector<1x4x1280xf32>
    %c0 = arith.constant 0 : index
    %c0_0 = arith.constant 0 : index
    %c0_1 = arith.constant 0 : index
    %c0_2 = arith.constant 0 : index
    %1 = vector.load %arg1[%c0, %c0_0, %c0_1, %c0_2] : memref<1x4x16x1280xbf16, #tpu.memory_space<vmem>>, vector<1x4x8x1280xbf16>
    %2 = arith.extf %1 : vector<1x4x8x1280xbf16> to vector<1x4x8x1280xf32>
    %cst_3 = arith.constant dense<0.000000e+00> : vector<1x4x1280xf32>
    %3 = vector.multi_reduction <add>, %2, %cst_3 [2] : vector<1x4x8x1280xf32> to vector<1x4x1280xf32>
    %4 = arith.addf %0, %3 : vector<1x4x1280xf32>
    %c0_4 = arith.constant 0 : index
    %c0_5 = arith.constant 0 : index
    %c8 = arith.constant 8 : index
    %c0_6 = arith.constant 0 : index
    %5 = vector.load %arg1[%c0_4, %c0_5, %c8, %c0_6] : memref<1x4x16x1280xbf16, #tpu.memory_space<vmem>>, vector<1x4x8x1280xbf16>
    %6 = arith.extf %5 : vector<1x4x8x1280xbf16> to vector<1x4x8x1280xf32>
    %cst_7 = arith.constant dense<0.000000e+00> : vector<1x4x1280xf32>
    %7 = vector.multi_reduction <add>, %6, %cst_7 [2] : vector<1x4x8x1280xf32> to vector<1x4x1280xf32>
    %8 = arith.addf %4, %7 : vector<1x4x1280xf32>
    %9 = vector.shape_cast %8 : vector<1x4x1280xf32> to vector<4x1280xf32>
    %10 = arith.truncf %9 : vector<4x1280xf32> to vector<4x1280xbf16>
    %c0_8 = arith.constant 0 : index
    %c0_9 = arith.constant 0 : index
    %11 = vector.load %arg2[%c0_8, %c0_9] : memref<1280x384xbf16, #tpu.memory_space<vmem>>, vector<1280x384xbf16>
    %cst_10 = arith.constant dense<0.000000e+00> : vector<4x384xf32>
    %12 = tpu.matmul %10, %11, %cst_10 {dimension_numbers = #tpu.dot_dimension_numbers<[1], [0], [0], [1], [0, 0, 1, 1], [], []>} : vector<4x1280xbf16>, vector<1280x384xbf16>, vector<4x384xf32> -> vector<4x384xf32>
    %c0_11 = arith.constant 0 : index
    %c0_12 = arith.constant 0 : index
    %13 = vector.load %arg3[%c0_11, %c0_12] : memref<1x384xf32, #tpu.memory_space<vmem>>, vector<1x384xf32>
    %14 = vector.broadcast %13 : vector<1x384xf32> to vector<4x384xf32>
    %15 = arith.addf %12, %14 : vector<4x384xf32>
    %16 = vector.shape_cast %15 : vector<4x384xf32> to vector<1x4x384xf32>
    %c0_13 = arith.constant 0 : index
    %c0_14 = arith.constant 0 : index
    %17 = vector.load %arg4[%c0_13, %c0_14] : memref<128x384xbf16, #tpu.memory_space<vmem>>, vector<128x384xbf16>
    %c0_15 = arith.constant 0 : index
    %c0_16 = arith.constant 0 : index
    %18 = vector.load %arg5[%c0_15, %c0_16] : memref<1x128xf32, #tpu.memory_space<vmem>>, vector<1x128xf32>
    %cst_17 = arith.constant 0.000000e+00 : f32
    %19 = vector.broadcast %cst_17 : f32 to vector<1x128xf32>
    %20 = vector.extract_strided_slice %16 {offsets = [0, 0, 0], sizes = [1, 1, 384], strides = [1, 1, 1]} : vector<1x4x384xf32> to vector<1x1x384xf32>
    %21 = vector.shape_cast %20 : vector<1x1x384xf32> to vector<1x384xf32>
    %22 = arith.truncf %19 : vector<1x128xf32> to vector<1x128xbf16>
    %cst_18 = arith.constant dense<0.000000e+00> : vector<1x384xf32>
    %23 = tpu.matmul %22, %17, %cst_18 {dimension_numbers = #tpu.dot_dimension_numbers<[1], [0], [0], [1], [0, 0, 1, 1], [], []>} : vector<1x128xbf16>, vector<128x384xbf16>, vector<1x384xf32> -> vector<1x384xf32>
    %24 = vector.extract_strided_slice %21 {offsets = [0, 0], sizes = [1, 128], strides = [1, 1]} : vector<1x384xf32> to vector<1x128xf32>
    %25 = vector.extract_strided_slice %23 {offsets = [0, 0], sizes = [1, 128], strides = [1, 1]} : vector<1x384xf32> to vector<1x128xf32>
    %26 = arith.addf %24, %25 : vector<1x128xf32>
    %27 = arith.negf %26 : vector<1x128xf32>
    %28 = math.exp %27 : vector<1x128xf32>
    %cst_19 = arith.constant 1.000000e+00 : f32
    %29 = vector.broadcast %cst_19 : f32 to vector<1x128xf32>
    %30 = arith.addf %29, %28 : vector<1x128xf32>
    %31 = arith.divf %29, %30 : vector<1x128xf32>
    %32 = vector.extract_strided_slice %21 {offsets = [0, 128], sizes = [1, 128], strides = [1, 1]} : vector<1x384xf32> to vector<1x128xf32>
    %33 = vector.extract_strided_slice %23 {offsets = [0, 128], sizes = [1, 128], strides = [1, 1]} : vector<1x384xf32> to vector<1x128xf32>
    %34 = arith.addf %32, %33 : vector<1x128xf32>
    %35 = arith.negf %34 : vector<1x128xf32>
    %36 = math.exp %35 : vector<1x128xf32>
    %cst_20 = arith.constant 1.000000e+00 : f32
    %37 = vector.broadcast %cst_20 : f32 to vector<1x128xf32>
    %38 = arith.addf %37, %36 : vector<1x128xf32>
    %39 = arith.divf %37, %38 : vector<1x128xf32>
    %40 = vector.extract_strided_slice %21 {offsets = [0, 256], sizes = [1, 128], strides = [1, 1]} : vector<1x384xf32> to vector<1x128xf32>
    %41 = vector.extract_strided_slice %23 {offsets = [0, 256], sizes = [1, 128], strides = [1, 1]} : vector<1x384xf32> to vector<1x128xf32>
    %42 = arith.addf %41, %18 : vector<1x128xf32>
    %43 = arith.mulf %31, %42 : vector<1x128xf32>
    %44 = arith.addf %40, %43 : vector<1x128xf32>
    %45 = math.tanh %44 : vector<1x128xf32>
    %cst_21 = arith.constant 1.000000e+00 : f32
    %46 = vector.broadcast %cst_21 : f32 to vector<1x128xf32>
    %47 = arith.subf %46, %39 : vector<1x128xf32>
    %48 = arith.mulf %47, %45 : vector<1x128xf32>
    %49 = arith.mulf %39, %19 : vector<1x128xf32>
    %50 = arith.addf %48, %49 : vector<1x128xf32>
    %51 = vector.extract_strided_slice %16 {offsets = [0, 1, 0], sizes = [1, 1, 384], strides = [1, 1, 1]} : vector<1x4x384xf32> to vector<1x1x384xf32>
    %52 = vector.shape_cast %51 : vector<1x1x384xf32> to vector<1x384xf32>
    %53 = arith.truncf %50 : vector<1x128xf32> to vector<1x128xbf16>
    %cst_22 = arith.constant dense<0.000000e+00> : vector<1x384xf32>
    %54 = tpu.matmul %53, %17, %cst_22 {dimension_numbers = #tpu.dot_dimension_numbers<[1], [0], [0], [1], [0, 0, 1, 1], [], []>} : vector<1x128xbf16>, vector<128x384xbf16>, vector<1x384xf32> -> vector<1x384xf32>
    %55 = vector.extract_strided_slice %52 {offsets = [0, 0], sizes = [1, 128], strides = [1, 1]} : vector<1x384xf32> to vector<1x128xf32>
    %56 = vector.extract_strided_slice %54 {offsets = [0, 0], sizes = [1, 128], strides = [1, 1]} : vector<1x384xf32> to vector<1x128xf32>
    %57 = arith.addf %55, %56 : vector<1x128xf32>
    %58 = arith.negf %57 : vector<1x128xf32>
    %59 = math.exp %58 : vector<1x128xf32>
    %cst_23 = arith.constant 1.000000e+00 : f32
    %60 = vector.broadcast %cst_23 : f32 to vector<1x128xf32>
    %61 = arith.addf %60, %59 : vector<1x128xf32>
    %62 = arith.divf %60, %61 : vector<1x128xf32>
    %63 = vector.extract_strided_slice %52 {offsets = [0, 128], sizes = [1, 128], strides = [1, 1]} : vector<1x384xf32> to vector<1x128xf32>
    %64 = vector.extract_strided_slice %54 {offsets = [0, 128], sizes = [1, 128], strides = [1, 1]} : vector<1x384xf32> to vector<1x128xf32>
    %65 = arith.addf %63, %64 : vector<1x128xf32>
    %66 = arith.negf %65 : vector<1x128xf32>
    %67 = math.exp %66 : vector<1x128xf32>
    %cst_24 = arith.constant 1.000000e+00 : f32
    %68 = vector.broadcast %cst_24 : f32 to vector<1x128xf32>
    %69 = arith.addf %68, %67 : vector<1x128xf32>
    %70 = arith.divf %68, %69 : vector<1x128xf32>
    %71 = vector.extract_strided_slice %52 {offsets = [0, 256], sizes = [1, 128], strides = [1, 1]} : vector<1x384xf32> to vector<1x128xf32>
    %72 = vector.extract_strided_slice %54 {offsets = [0, 256], sizes = [1, 128], strides = [1, 1]} : vector<1x384xf32> to vector<1x128xf32>
    %73 = arith.addf %72, %18 : vector<1x128xf32>
    %74 = arith.mulf %62, %73 : vector<1x128xf32>
    %75 = arith.addf %71, %74 : vector<1x128xf32>
    %76 = math.tanh %75 : vector<1x128xf32>
    %cst_25 = arith.constant 1.000000e+00 : f32
    %77 = vector.broadcast %cst_25 : f32 to vector<1x128xf32>
    %78 = arith.subf %77, %70 : vector<1x128xf32>
    %79 = arith.mulf %78, %76 : vector<1x128xf32>
    %80 = arith.mulf %70, %50 : vector<1x128xf32>
    %81 = arith.addf %79, %80 : vector<1x128xf32>
    %82 = vector.extract_strided_slice %16 {offsets = [0, 2, 0], sizes = [1, 1, 384], strides = [1, 1, 1]} : vector<1x4x384xf32> to vector<1x1x384xf32>
    %83 = vector.shape_cast %82 : vector<1x1x384xf32> to vector<1x384xf32>
    %84 = arith.truncf %81 : vector<1x128xf32> to vector<1x128xbf16>
    %cst_26 = arith.constant dense<0.000000e+00> : vector<1x384xf32>
    %85 = tpu.matmul %84, %17, %cst_26 {dimension_numbers = #tpu.dot_dimension_numbers<[1], [0], [0], [1], [0, 0, 1, 1], [], []>} : vector<1x128xbf16>, vector<128x384xbf16>, vector<1x384xf32> -> vector<1x384xf32>
    %86 = vector.extract_strided_slice %83 {offsets = [0, 0], sizes = [1, 128], strides = [1, 1]} : vector<1x384xf32> to vector<1x128xf32>
    %87 = vector.extract_strided_slice %85 {offsets = [0, 0], sizes = [1, 128], strides = [1, 1]} : vector<1x384xf32> to vector<1x128xf32>
    %88 = arith.addf %86, %87 : vector<1x128xf32>
    %89 = arith.negf %88 : vector<1x128xf32>
    %90 = math.exp %89 : vector<1x128xf32>
    %cst_27 = arith.constant 1.000000e+00 : f32
    %91 = vector.broadcast %cst_27 : f32 to vector<1x128xf32>
    %92 = arith.addf %91, %90 : vector<1x128xf32>
    %93 = arith.divf %91, %92 : vector<1x128xf32>
    %94 = vector.extract_strided_slice %83 {offsets = [0, 128], sizes = [1, 128], strides = [1, 1]} : vector<1x384xf32> to vector<1x128xf32>
    %95 = vector.extract_strided_slice %85 {offsets = [0, 128], sizes = [1, 128], strides = [1, 1]} : vector<1x384xf32> to vector<1x128xf32>
    %96 = arith.addf %94, %95 : vector<1x128xf32>
    %97 = arith.negf %96 : vector<1x128xf32>
    %98 = math.exp %97 : vector<1x128xf32>
    %cst_28 = arith.constant 1.000000e+00 : f32
    %99 = vector.broadcast %cst_28 : f32 to vector<1x128xf32>
    %100 = arith.addf %99, %98 : vector<1x128xf32>
    %101 = arith.divf %99, %100 : vector<1x128xf32>
    %102 = vector.extract_strided_slice %83 {offsets = [0, 256], sizes = [1, 128], strides = [1, 1]} : vector<1x384xf32> to vector<1x128xf32>
    %103 = vector.extract_strided_slice %85 {offsets = [0, 256], sizes = [1, 128], strides = [1, 1]} : vector<1x384xf32> to vector<1x128xf32>
    %104 = arith.addf %103, %18 : vector<1x128xf32>
    %105 = arith.mulf %93, %104 : vector<1x128xf32>
    %106 = arith.addf %102, %105 : vector<1x128xf32>
    %107 = math.tanh %106 : vector<1x128xf32>
    %cst_29 = arith.constant 1.000000e+00 : f32
    %108 = vector.broadcast %cst_29 : f32 to vector<1x128xf32>
    %109 = arith.subf %108, %101 : vector<1x128xf32>
    %110 = arith.mulf %109, %107 : vector<1x128xf32>
    %111 = arith.mulf %101, %81 : vector<1x128xf32>
    %112 = arith.addf %110, %111 : vector<1x128xf32>
    %113 = vector.extract_strided_slice %16 {offsets = [0, 3, 0], sizes = [1, 1, 384], strides = [1, 1, 1]} : vector<1x4x384xf32> to vector<1x1x384xf32>
    %114 = vector.shape_cast %113 : vector<1x1x384xf32> to vector<1x384xf32>
    %115 = arith.truncf %112 : vector<1x128xf32> to vector<1x128xbf16>
    %cst_30 = arith.constant dense<0.000000e+00> : vector<1x384xf32>
    %116 = tpu.matmul %115, %17, %cst_30 {dimension_numbers = #tpu.dot_dimension_numbers<[1], [0], [0], [1], [0, 0, 1, 1], [], []>} : vector<1x128xbf16>, vector<128x384xbf16>, vector<1x384xf32> -> vector<1x384xf32>
    %117 = vector.extract_strided_slice %114 {offsets = [0, 0], sizes = [1, 128], strides = [1, 1]} : vector<1x384xf32> to vector<1x128xf32>
    %118 = vector.extract_strided_slice %116 {offsets = [0, 0], sizes = [1, 128], strides = [1, 1]} : vector<1x384xf32> to vector<1x128xf32>
    %119 = arith.addf %117, %118 : vector<1x128xf32>
    %120 = arith.negf %119 : vector<1x128xf32>
    %121 = math.exp %120 : vector<1x128xf32>
    %cst_31 = arith.constant 1.000000e+00 : f32
    %122 = vector.broadcast %cst_31 : f32 to vector<1x128xf32>
    %123 = arith.addf %122, %121 : vector<1x128xf32>
    %124 = arith.divf %122, %123 : vector<1x128xf32>
    %125 = vector.extract_strided_slice %114 {offsets = [0, 128], sizes = [1, 128], strides = [1, 1]} : vector<1x384xf32> to vector<1x128xf32>
    %126 = vector.extract_strided_slice %116 {offsets = [0, 128], sizes = [1, 128], strides = [1, 1]} : vector<1x384xf32> to vector<1x128xf32>
    %127 = arith.addf %125, %126 : vector<1x128xf32>
    %128 = arith.negf %127 : vector<1x128xf32>
    %129 = math.exp %128 : vector<1x128xf32>
    %cst_32 = arith.constant 1.000000e+00 : f32
    %130 = vector.broadcast %cst_32 : f32 to vector<1x128xf32>
    %131 = arith.addf %130, %129 : vector<1x128xf32>
    %132 = arith.divf %130, %131 : vector<1x128xf32>
    %133 = vector.extract_strided_slice %114 {offsets = [0, 256], sizes = [1, 128], strides = [1, 1]} : vector<1x384xf32> to vector<1x128xf32>
    %134 = vector.extract_strided_slice %116 {offsets = [0, 256], sizes = [1, 128], strides = [1, 1]} : vector<1x384xf32> to vector<1x128xf32>
    %135 = arith.addf %134, %18 : vector<1x128xf32>
    %136 = arith.mulf %124, %135 : vector<1x128xf32>
    %137 = arith.addf %133, %136 : vector<1x128xf32>
    %138 = math.tanh %137 : vector<1x128xf32>
    %cst_33 = arith.constant 1.000000e+00 : f32
    %139 = vector.broadcast %cst_33 : f32 to vector<1x128xf32>
    %140 = arith.subf %139, %132 : vector<1x128xf32>
    %141 = arith.mulf %140, %138 : vector<1x128xf32>
    %142 = arith.mulf %132, %112 : vector<1x128xf32>
    %143 = arith.addf %141, %142 : vector<1x128xf32>
    %144 = arith.truncf %143 : vector<1x128xf32> to vector<1x128xbf16>
    %c0_34 = arith.constant 0 : index
    %c0_35 = arith.constant 0 : index
    %145 = vector.load %arg6[%c0_34, %c0_35] : memref<128x64xbf16, #tpu.memory_space<vmem>>, vector<128x64xbf16>
    %cst_36 = arith.constant dense<0.000000e+00> : vector<1x64xf32>
    %146 = tpu.matmul %144, %145, %cst_36 {dimension_numbers = #tpu.dot_dimension_numbers<[1], [0], [0], [1], [0, 0, 1, 1], [], []>} : vector<1x128xbf16>, vector<128x64xbf16>, vector<1x64xf32> -> vector<1x64xf32>
    %c0_37 = arith.constant 0 : index
    %c0_38 = arith.constant 0 : index
    %147 = vector.load %arg7[%c0_37, %c0_38] : memref<1x64xf32, #tpu.memory_space<vmem>>, vector<1x64xf32>
    %148 = arith.addf %146, %147 : vector<1x64xf32>
    %cst_39 = arith.constant 0.000000e+00 : f32
    %149 = vector.broadcast %cst_39 : f32 to vector<1x64xf32>
    %150 = arith.maximumf %148, %149 : vector<1x64xf32>
    %c0_40 = arith.constant 0 : index
    %c0_41 = arith.constant 0 : index
    %151 = vector.load %arg8[%c0_40, %c0_41] : memref<1x64xf32, #tpu.memory_space<vmem>>, vector<1x64xf32>
    %152 = arith.mulf %150, %151 : vector<1x64xf32>
    %cst_42 = arith.constant dense<0.000000e+00> : vector<1xf32>
    %153 = vector.multi_reduction <add>, %152, %cst_42 [1] : vector<1x64xf32> to vector<1xf32>
    %154 = vector.shape_cast %153 : vector<1xf32> to vector<1x1xf32>
    %c0_43 = arith.constant 0 : index
    %c0_44 = arith.constant 0 : index
    %155 = vector.load %arg9[%c0_43, %c0_44] : memref<1x1xf32, #tpu.memory_space<vmem>>, vector<1x1xf32>
    %156 = arith.addf %154, %155 : vector<1x1xf32>
    %157 = arith.negf %156 : vector<1x1xf32>
    %158 = math.exp %157 : vector<1x1xf32>
    %cst_45 = arith.constant 1.000000e+00 : f32
    %159 = vector.broadcast %cst_45 : f32 to vector<1x1xf32>
    %160 = arith.addf %159, %158 : vector<1x1xf32>
    %161 = arith.divf %159, %160 : vector<1x1xf32>
    %162 = tpu.iota {dimensions = array<i32: 0>} : vector<1x1xi32>
    %163 = tpu.iota {dimensions = array<i32: 1>} : vector<1x1xi32>
    %164 = arith.cmpi eq, %162, %163 : vector<1x1xi32>
    %cst_46 = arith.constant 0.000000e+00 : f32
    %165 = vector.broadcast %cst_46 : f32 to vector<1x1xf32>
    %166 = arith.select %164, %161, %165 : vector<1x1xi1>, vector<1x1xf32>
    %cst_47 = arith.constant dense<0.000000e+00> : vector<1xf32>
    %167 = vector.multi_reduction <add>, %166, %cst_47 [0] : vector<1x1xf32> to vector<1xf32>
    %168 = vector.shape_cast %167 : vector<1xf32> to vector<1x1xf32>
    %169 = vector.shape_cast %168 : vector<1x1xf32> to vector<1x1x1xf32>
    %c0_48 = arith.constant 0 : index
    %c0_49 = arith.constant 0 : index
    %c0_50 = arith.constant 0 : index
    %170 = vector.load %arg10[%c0_48, %c0_49, %c0_50] : memref<1x1x1xf32, #tpu.memory_space<vmem>>, vector<1x1x1xf32>
    tpu.vector_store %arg10[%c0_48, %c0_49, %c0_50], %169 {strides = array<i32>} : memref<1x1x1xf32, #tpu.memory_space<vmem>>, vector<1x1x1xf32>,
    return
  }
  func.func @transform_0(%arg0: i32) -> (i32, i32, i32, i32) {
    %c0_i32 = arith.constant 0 : i32
    %c0_i32_0 = arith.constant 0 : i32
    %c0_i32_1 = arith.constant 0 : i32
    %c0_i32_2 = arith.constant 0 : i32
    return %arg0, %c0_i32, %c0_i32_0, %c0_i32_1 : i32, i32, i32, i32
  }
  func.func @transform_1(%arg0: i32) -> (i32, i32) {
    %c0_i32 = arith.constant 0 : i32
    %c0_i32_0 = arith.constant 0 : i32
    %c0_i32_1 = arith.constant 0 : i32
    return %c0_i32, %c0_i32_0 : i32, i32
  }
  func.func @transform_2(%arg0: i32) -> (i32, i32) {
    %c0_i32 = arith.constant 0 : i32
    %c0_i32_0 = arith.constant 0 : i32
    %c0_i32_1 = arith.constant 0 : i32
    return %c0_i32, %c0_i32_0 : i32, i32
  }
  func.func @transform_3(%arg0: i32) -> (i32, i32) {
    %c0_i32 = arith.constant 0 : i32
    %c0_i32_0 = arith.constant 0 : i32
    %c0_i32_1 = arith.constant 0 : i32
    return %c0_i32, %c0_i32_0 : i32, i32
  }
  func.func @transform_4(%arg0: i32) -> (i32, i32) {
    %c0_i32 = arith.constant 0 : i32
    %c0_i32_0 = arith.constant 0 : i32
    %c0_i32_1 = arith.constant 0 : i32
    return %c0_i32, %c0_i32_0 : i32, i32
  }
  func.func @transform_5(%arg0: i32) -> (i32, i32) {
    %c0_i32 = arith.constant 0 : i32
    %c0_i32_0 = arith.constant 0 : i32
    %c0_i32_1 = arith.constant 0 : i32
    return %c0_i32, %c0_i32_0 : i32, i32
  }
  func.func @transform_6(%arg0: i32) -> (i32, i32) {
    %c0_i32 = arith.constant 0 : i32
    %c0_i32_0 = arith.constant 0 : i32
    %c0_i32_1 = arith.constant 0 : i32
    return %c0_i32, %c0_i32_0 : i32, i32
  }
  func.func @transform_7(%arg0: i32) -> (i32, i32) {
    %c0_i32 = arith.constant 0 : i32
    %c0_i32_0 = arith.constant 0 : i32
    %c0_i32_1 = arith.constant 0 : i32
    return %c0_i32, %c0_i32_0 : i32, i32
  }
  func.func @transform_8(%arg0: i32) -> (i32, i32) {
    %c0_i32 = arith.constant 0 : i32
    %c0_i32_0 = arith.constant 0 : i32
    %c0_i32_1 = arith.constant 0 : i32
    return %c0_i32, %c0_i32_0 : i32, i32
  }
  func.func @transform_9(%arg0: i32) -> (i32, i32, i32) {
    %c0_i32 = arith.constant 0 : i32
    %c0_i32_0 = arith.constant 0 : i32
    %c0_i32_1 = arith.constant 0 : i32
    return %arg0, %c0_i32, %c0_i32_0 : i32, i32, i32
  }
}

</mosaic_0001>

<llo_original>
// kernel: tpu_custom_call.1
$region0: #{tpu_custom_call.1}
  #allocation0 [shape = 'u32[]', space=smem, size = 0x4, offset = 0x4, fixed_abs, tag = 'smem constant byte address 0x4 - core index']
  #allocation1 [shape = 'u32[144,128]{1,0:T(1,128)}', space=vmem, size = 0x12000, scoped, tag = 'internal scratch']
  #allocation2 [shape = 'f32[1,1]{1,0:T(1,128)S(1)}', space=vmem, size = 0x200, scoped, tag = 'scoped memory for tpu_custom_call.1']
  %s0 = inlined_call_operand.hbm [shape: bf16[2,4,16,1280], index: 0, kind: input, shape index: {}]
  %s1 = inlined_call_operand.hbm [shape: bf16[1280,384], index: 1, kind: input, shape index: {}]
  %s2 = inlined_call_operand.vmem [shape: f32[1,384], index: 2, kind: input, shape index: {}]
  %s3 = inlined_call_operand.hbm [shape: bf16[128,384], index: 3, kind: input, shape index: {}]
  %s4 = inlined_call_operand.vmem [shape: f32[1,128], index: 4, kind: input, shape index: {}]
  %s5 = inlined_call_operand.vmem [shape: bf16[128,64], index: 5, kind: input, shape index: {}]
  %s6 = inlined_call_operand.vmem [shape: f32[1,64], index: 6, kind: input, shape index: {}]
  %s7 = inlined_call_operand.vmem [shape: f32[1,64], index: 7, kind: input, shape index: {}]
  %s8 = inlined_call_operand.<no memory space> [shape: f32[1,1], index: 8, kind: input, shape index: {}]
  %s9 = inlined_call_operand.vmem [shape: f32[2,1,1], index: 9, kind: output, shape index: {}]
  %s10 = sld [smem:[#allocation0]]
  $region81: #{tpu_custom_call.1} parent=0
    _
  %s12 = ssub.s32 1, %s10
  %s13 = scalar_select 0, %s12, %s10
  %v14 = vstv %s8
  %15 = vst [vmem:[#allocation2] sm:$0x1] %v14
  $region1: #{tpu_custom_call.1} parent=0
    #allocation3 [shape = 'u8[327680]{0}', space=vmem, size = 0x50000, scoped, tag = 'input window, operand 0']
    #allocation4 [shape = 's32[2]{0}', space=sflag, size = 0x8, scoped, tag = 'scoped memory for tpu_custom_call.1']
    #allocation5 [shape = 'u8[983040]{0}', space=vmem, size = 0xf0000, scoped, tag = 'input window, operand 1, single buffered']
    #allocation6 [shape = 's32[1]{0}', space=sflag, size = 0x4, scoped, tag = 'scoped memory for tpu_custom_call.1']
    #allocation7 [shape = 'u8[98304]{0}', space=vmem, size = 0x18000, scoped, tag = 'input window, operand 3, single buffered']
    %16 = vsyncpa [#allocation4], 0
    %s17 = scalar_lea.sflag [#allocation4], 1
    %18 = vsyncpa %s17, 0
    %19 = vsyncpa [#allocation6], 0
    loop: start=0, step=1, limit=4
    $region2: #{tpu_custom_call.1} parent=1 // loop_pre_header
      _
    $region3: #{tpu_custom_call.1} parent=1 // loop_header
      %s21 = sphi 0, %s25
      %p22 = scmp.ge.s32.totalorder %s21, 4
      %s31 = sphi 0, %s33
      %s34 = sphi 0, %s31
      %s35 = sphi 0, %s34
      %s51 = sphi 0, %s35
      %s55 = sphi 0, %s55
      %s57 = sphi 0, %s55
      %s58 = sphi 0, %s57
      %s72 = sphi 0, %s58
      %s76 = sphi 0, %s76
      %s78 = sphi 0, %s76
      %s79 = sphi 0, %s78
      %s93 = sphi 0, %s79
      %s97 = sphi 0, %s97
      %s99 = sphi 0, %s97
      %s100 = sphi 0, %s99
      %s114 = sphi 0, %s100
      %s118 = sphi 0, %s118
      %s120 = sphi 0, %s118
      %s121 = sphi 0, %s120
      %s135 = sphi 0, %s121
      %s139 = sphi 0, %s139
      %s141 = sphi 0, %s139
      %s142 = sphi 0, %s141
      %s156 = sphi 0, %s142
      %s160 = sphi 0, %s160
      %s162 = sphi 0, %s160
      %s163 = sphi 0, %s162
      %s177 = sphi 0, %s163
      %s181 = sphi 0, %s181
      %s183 = sphi 0, %s181
      %s184 = sphi 0, %s183
      %s198 = sphi 0, %s184
      %s202 = sphi 0, %s202
      %s204 = sphi 0, %s202
      %s205 = sphi 0, %s204
      %s219 = sphi 0, %s205
      %s225 = sphi 0, %s227
      %s228 = sphi 0, %s225
      %s229 = sphi 0, %s228
      %s245 = sphi 0, %s229
    $region4: #{tpu_custom_call.1} parent=1 // loop_header_branch
      %24 = sbr.rel (%p22) target = $region8
    $region5: #{tpu_custom_call.1} parent=1 // loop_body
      %s26 = ssub.s32 %s21, 1
      %s27 = ssub.s32 %s21, 2
      %s28 = sadd.s32 %s21, 1
      %s29 = ssub.s32 %s21, %s28
      %p30 = scmp.eq.s32.totalorder %s29, 0
      %s32 = sadd.s32 %s31, 1
      %s33 = scalar_select %p30, %s31, %s32
      %p36 = pneg %p30
      %p37 = scmp.eq.s32.totalorder %s21, 1
      %p38 = por %p36, %p37
      %p39 = scmp.ne.s32.totalorder %s31, %s34
      %p40 = scmp.eq.s32.totalorder %s21, 0
      %p41 = por %p39, %p40
      %p42 = scmp.ne.s32.totalorder %s31, %s34
      %p43 = scmp.eq.s32.totalorder %s26, 1
      %p44 = por %p42, %p43
      %p45 = scmp.ne.s32.totalorder %s34, %s35
      %p46 = scmp.eq.s32.totalorder %s26, 0
      %p47 = por %p45, %p46
      %p48 = scmp.ne.s32.totalorder %s34, %s35
      %p49 = scmp.eq.s32.totalorder %s27, 1
      %p50 = por %p48, %p49
      %p52 = scmp.ne.s32.totalorder %s35, %s51
      %p53 = scmp.eq.s32.totalorder %s27, 0
      %p54 = por %p52, %p53
      %s56 = sadd.s32 %s55, 1
      %p59 = scmp.eq.s32.totalorder %s21, 1
      %p60 = scmp.ne.s32.totalorder %s55, %s57
      %p61 = scmp.eq.s32.totalorder %s21, 0
      %p62 = por %p60, %p61
      %p63 = scmp.ne.s32.totalorder %s55, %s57
      %p64 = scmp.eq.s32.totalorder %s26, 1
      %p65 = por %p63, %p64
      %p66 = scmp.ne.s32.totalorder %s57, %s58
      %p67 = scmp.eq.s32.totalorder %s26, 0
      %p68 = por %p66, %p67
      %p69 = scmp.ne.s32.totalorder %s57, %s58
      %p70 = scmp.eq.s32.totalorder %s27, 1
      %p71 = por %p69, %p70
      %p73 = scmp.ne.s32.totalorder %s58, %s72
      %p74 = scmp.eq.s32.totalorder %s27, 0
      %p75 = por %p73, %p74
      %s77 = sadd.s32 %s76, 1
      %p80 = scmp.eq.s32.totalorder %s21, 1
      %p81 = scmp.ne.s32.totalorder %s76, %s78
      %p82 = scmp.eq.s32.totalorder %s21, 0
      %p83 = por %p81, %p82
      %p84 = scmp.ne.s32.totalorder %s76, %s78
      %p85 = scmp.eq.s32.totalorder %s26, 1
      %p86 = por %p84, %p85
      %p87 = scmp.ne.s32.totalorder %s78, %s79
      %p88 = scmp.eq.s32.totalorder %s26, 0
      %p89 = por %p87, %p88
      %p90 = scmp.ne.s32.totalorder %s78, %s79
      %p91 = scmp.eq.s32.totalorder %s27, 1
      %p92 = por %p90, %p91
      %p94 = scmp.ne.s32.totalorder %s79, %s93
      %p95 = scmp.eq.s32.totalorder %s27, 0
      %p96 = por %p94, %p95
      %s98 = sadd.s32 %s97, 1
      %p101 = scmp.eq.s32.totalorder %s21, 1
      %p102 = scmp.ne.s32.totalorder %s97, %s99
      %p103 = scmp.eq.s32.totalorder %s21, 0
      %p104 = por %p102, %p103
      %p105 = scmp.ne.s32.totalorder %s97, %s99
      %p106 = scmp.eq.s32.totalorder %s26, 1
      %p107 = por %p105, %p106
      %p108 = scmp.ne.s32.totalorder %s99, %s100
      %p109 = scmp.eq.s32.totalorder %s26, 0
      %p110 = por %p108, %p109
      %p111 = scmp.ne.s32.totalorder %s99, %s100
      %p112 = scmp.eq.s32.totalorder %s27, 1
      %p113 = por %p111, %p112
      %p115 = scmp.ne.s32.totalorder %s100, %s114
      %p116 = scmp.eq.s32.totalorder %s27, 0
      %p117 = por %p115, %p116
      %s119 = sadd.s32 %s118, 1
      %p122 = scmp.eq.s32.totalorder %s21, 1
      %p123 = scmp.ne.s32.totalorder %s118, %s120
      %p124 = scmp.eq.s32.totalorder %s21, 0
      %p125 = por %p123, %p124
      %p126 = scmp.ne.s32.totalorder %s118, %s120
      %p127 = scmp.eq.s32.totalorder %s26, 1
      %p128 = por %p126, %p127
      %p129 = scmp.ne.s32.totalorder %s120, %s121
      %p130 = scmp.eq.s32.totalorder %s26, 0
      %p131 = por %p129, %p130
      %p132 = scmp.ne.s32.totalorder %s120, %s121
      %p133 = scmp.eq.s32.totalorder %s27, 1
      %p134 = por %p132, %p133
      %p136 = scmp.ne.s32.totalorder %s121, %s135
      %p137 = scmp.eq.s32.totalorder %s27, 0
      %p138 = por %p136, %p137
      %s140 = sadd.s32 %s139, 1
      %p143 = scmp.eq.s32.totalorder %s21, 1
      %p144 = scmp.ne.s32.totalorder %s139, %s141
      %p145 = scmp.eq.s32.totalorder %s21, 0
      %p146 = por %p144, %p145
      %p147 = scmp.ne.s32.totalorder %s139, %s141
      %p148 = scmp.eq.s32.totalorder %s26, 1
      %p149 = por %p147, %p148
      %p150 = scmp.ne.s32.totalorder %s141, %s142
      %p151 = scmp.eq.s32.totalorder %s26, 0
      %p152 = por %p150, %p151
      %p153 = scmp.ne.s32.totalorder %s141, %s142
      %p154 = scmp.eq.s32.totalorder %s27, 1
      %p155 = por %p153, %p154
      %p157 = scmp.ne.s32.totalorder %s142, %s156
      %p158 = scmp.eq.s32.totalorder %s27, 0
      %p159 = por %p157, %p158
      %s161 = sadd.s32 %s160, 1
      %p164 = scmp.eq.s32.totalorder %s21, 1
      %p165 = scmp.ne.s32.totalorder %s160, %s162
      %p166 = scmp.eq.s32.totalorder %s21, 0
      %p167 = por %p165, %p166
      %p168 = scmp.ne.s32.totalorder %s160, %s162
      %p169 = scmp.eq.s32.totalorder %s26, 1
      %p170 = por %p168, %p169
      %p171 = scmp.ne.s32.totalorder %s162, %s163
      %p172 = scmp.eq.s32.totalorder %s26, 0
      %p173 = por %p171, %p172
      %p174 = scmp.ne.s32.totalorder %s162, %s163
      %p175 = scmp.eq.s32.totalorder %s27, 1
      %p176 = por %p174, %p175
      %p178 = scmp.ne.s32.totalorder %s163, %s177
      %p179 = scmp.eq.s32.totalorder %s27, 0
      %p180 = por %p178, %p179
      %s182 = sadd.s32 %s181, 1
      %p185 = scmp.eq.s32.totalorder %s21, 1
      %p186 = scmp.ne.s32.totalorder %s181, %s183
      %p187 = scmp.eq.s32.totalorder %s21, 0
      %p188 = por %p186, %p187
      %p189 = scmp.ne.s32.totalorder %s181, %s183
      %p190 = scmp.eq.s32.totalorder %s26, 1
      %p191 = por %p189, %p190
      %p192 = scmp.ne.s32.totalorder %s183, %s184
      %p193 = scmp.eq.s32.totalorder %s26, 0
      %p194 = por %p192, %p193
      %p195 = scmp.ne.s32.totalorder %s183, %s184
      %p196 = scmp.eq.s32.totalorder %s27, 1
      %p197 = por %p195, %p196
      %p199 = scmp.ne.s32.totalorder %s184, %s198
      %p200 = scmp.eq.s32.totalorder %s27, 0
      %p201 = por %p199, %p200
      %s203 = sadd.s32 %s202, 1
      %p206 = scmp.eq.s32.totalorder %s21, 1
      %p207 = scmp.ne.s32.totalorder %s202, %s204
      %p208 = scmp.eq.s32.totalorder %s21, 0
      %p209 = por %p207, %p208
      %p210 = scmp.ne.s32.totalorder %s202, %s204
      %p211 = scmp.eq.s32.totalorder %s26, 1
      %p212 = por %p210, %p211
      %p213 = scmp.ne.s32.totalorder %s204, %s205
      %p214 = scmp.eq.s32.totalorder %s26, 0
      %p215 = por %p213, %p214
      %p216 = scmp.ne.s32.totalorder %s204, %s205
      %p217 = scmp.eq.s32.totalorder %s27, 1
      %p218 = por %p216, %p217
      %p220 = scmp.ne.s32.totalorder %s205, %s219
      %p221 = scmp.eq.s32.totalorder %s27, 0
      %p222 = por %p220, %p221
      %s223 = ssub.s32 %s21, %s28
      %p224 = scmp.eq.s32.totalorder %s223, 0
      %s226 = sadd.s32 %s225, 1
      %s227 = scalar_select %p224, %s225, %s226
      %p230 = pneg %p224
      %p231 = scmp.eq.s32.totalorder %s21, 1
      %p232 = por %p230, %p231
      %p233 = scmp.ne.s32.totalorder %s225, %s228
      %p234 = scmp.eq.s32.totalorder %s21, 0
      %p235 = por %p233, %p234
      %p236 = scmp.ne.s32.totalorder %s225, %s228
      %p237 = scmp.eq.s32.totalorder %s26, 1
      %p238 = por %p236, %p237
      %p239 = scmp.ne.s32.totalorder %s228, %s229
      %p240 = scmp.eq.s32.totalorder %s26, 0
      %p241 = por %p239, %p240
      %p242 = scmp.ne.s32.totalorder %s228, %s229
      %p243 = scmp.eq.s32.totalorder %s27, 1
      %p244 = por %p242, %p243
      %p246 = scmp.ne.s32.totalorder %s229, %s245
      %p247 = scmp.eq.s32.totalorder %s27, 0
      %p248 = por %p246, %p247
      %p249 = scmp.le.s32.totalorder 1, %s21
      %p250 = scmp.lt.s32.totalorder %s21, 3
      %p251 = pnand %p249, %p250
      %p252 = pneg %p251
      // Predicated region
      $region9: #{tpu_custom_call.1} parent=5 // pred_check
        _
      $region10: #{tpu_custom_call.1} parent=5 // pred_check_branch
        %254 = sbr.rel (%p251) target = $region12
      $region11: #{tpu_custom_call.1} parent=5 // pred_region
        %s255 = ssub.s32 %s21, 1
        // Predicated region
        $region13: #{tpu_custom_call.1} parent=11 // pred_check
          %p256 = pneg %p68
        $region14: #{tpu_custom_call.1} parent=11 // pred_check_branch
          %258 = sbr.rel (%p256) target = $region16
        $region15: #{tpu_custom_call.1} parent=11 // pred_region
          %s260 = ssub.s32 30720, 30720
          %261 = vsyncadd [#allocation6], %s260
          %s262 = sshll.u32 [#allocation5], 4
          %s263 = int_to_ptr.vmem [resolvable:$true] %s262
          %268 = dma.hbm_to_vmem [thread:$0]  %s1, 30720, %s263, [#allocation6], 192, 192, 12
        $region16: #{tpu_custom_call.1} parent=11 // pred_fallthru
          _
        // Predicated region
        $region17: #{tpu_custom_call.1} parent=11 // pred_check
          %p269 = pneg %p89
        $region18: #{tpu_custom_call.1} parent=11 // pred_check_branch
          %271 = sbr.rel (%p269) target = $region20
        $region19: #{tpu_custom_call.1} parent=11 // pred_region
          _
        $region20: #{tpu_custom_call.1} parent=11 // pred_fallthru
          _
        // Predicated region
        $region21: #{tpu_custom_call.1} parent=11 // pred_check
          %p272 = pneg %p110
        $region22: #{tpu_custom_call.1} parent=11 // pred_check_branch
          %274 = sbr.rel (%p272) target = $region24
        $region23: #{tpu_custom_call.1} parent=11 // pred_region
          %s276 = ssub.s32 3072, 3072
          %277 = vsyncadd [#allocation6], %s276
          %s278 = sshll.u32 [#allocation7], 4
          %s279 = int_to_ptr.vmem [resolvable:$true] %s278
          %284 = dma.hbm_to_vmem [thread:$0]  %s3, 3072, %s279, [#allocation6], 192, 192, 12
        $region24: #{tpu_custom_call.1} parent=11 // pred_fallthru
          _
        // Predicated region
        $region25: #{tpu_custom_call.1} parent=11 // pred_check
          %p285 = pneg %p131
        $region26: #{tpu_custom_call.1} parent=11 // pred_check_branch
          %287 = sbr.rel (%p285) target = $region28
        $region27: #{tpu_custom_call.1} parent=11 // pred_region
          _
        $region28: #{tpu_custom_call.1} parent=11 // pred_fallthru
          _
        // Predicated region
        $region29: #{tpu_custom_call.1} parent=11 // pred_check
          %p288 = pneg %p152
        $region30: #{tpu_custom_call.1} parent=11 // pred_check_branch
          %290 = sbr.rel (%p288) target = $region32
        $region31: #{tpu_custom_call.1} parent=11 // pred_region
          _
        $region32: #{tpu_custom_call.1} parent=11 // pred_fallthru
          _
        // Predicated region
        $region33: #{tpu_custom_call.1} parent=11 // pred_check
          %p291 = pneg %p173
        $region34: #{tpu_custom_call.1} parent=11 // pred_check_branch
          %293 = sbr.rel (%p291) target = $region36
        $region35: #{tpu_custom_call.1} parent=11 // pred_region
          _
        $region36: #{tpu_custom_call.1} parent=11 // pred_fallthru
          _
        // Predicated region
        $region37: #{tpu_custom_call.1} parent=11 // pred_check
          %p294 = pneg %p194
        $region38: #{tpu_custom_call.1} parent=11 // pred_check_branch
          %296 = sbr.rel (%p294) target = $region40
        $region39: #{tpu_custom_call.1} parent=11 // pred_region
          _
        $region40: #{tpu_custom_call.1} parent=11 // pred_fallthru
          _
        // Predicated region
        $region41: #{tpu_custom_call.1} parent=11 // pred_check
          %p297 = pneg %p215
        $region42: #{tpu_custom_call.1} parent=11 // pred_check_branch
          %299 = sbr.rel (%p297) target = $region44
        $region43: #{tpu_custom_call.1} parent=11 // pred_region
          _
        $region44: #{tpu_custom_call.1} parent=11 // pred_fallthru
          _
      $region12: #{tpu_custom_call.1} parent=5 // pred_fallthru
        _
      %p300 = scmp.lt.s32.totalorder %s21, 2
      // Predicated region
      $region45: #{tpu_custom_call.1} parent=5 // pred_check
        %p301 = pneg %p300
      $region46: #{tpu_custom_call.1} parent=5 // pred_check_branch
        %303 = sbr.rel (%p301) target = $region48
      $region47: #{tpu_custom_call.1} parent=5 // pred_region
        // Predicated region
        $region49: #{tpu_custom_call.1} parent=47 // pred_check
          %p304 = pneg %p41
        $region50: #{tpu_custom_call.1} parent=47 // pred_check_branch
          %306 = sbr.rel (%p304) target = $region52
        $region51: #{tpu_custom_call.1} parent=47 // pred_region
          %s307 = sand.u32 %s31, 1
          %s308 = scalar_lea.sflag [#allocation4], %s307
          %s309 = sand.u32 %s31, 1
          %s310 = smul.addr %s309, 320
          %s311 = scalar_lea.vmem [#allocation3], %s310
          %s313 = ssub.s32 5120, 5120
          %314 = vsyncadd %s308, %s313
          %s315 = smul.addr %s21, 80
          %s316 = smul.addr %s315, 64
          %s317 = scalar_lea.hbm %s0, %s316
          %s318 = sshll.u32 %s311, 4
          %s319 = int_to_ptr.vmem [resolvable:$true] %s318
          %324 = dma.hbm_to_vmem [thread:$0]  %s317, 5120, %s319, %s308, 640, 640, 40
        $region52: #{tpu_custom_call.1} parent=47 // pred_fallthru
          _
      $region48: #{tpu_custom_call.1} parent=5 // pred_fallthru
        _
      %p325 = scmp.le.s32.totalorder 1, %s21
      %p326 = scmp.lt.s32.totalorder %s21, 3
      %p327 = pnand %p325, %p326
      %p328 = pneg %p327
      // Predicated region
      $region53: #{tpu_custom_call.1} parent=5 // pred_check
        _
      $region54: #{tpu_custom_call.1} parent=5 // pred_check_branch
        %330 = sbr.rel (%p327) target = $region56
      $region55: #{tpu_custom_call.1} parent=5 // pred_region
        %s331 = ssub.s32 %s21, 1
        %s332 = sand.u32 %s34, 1
        %s333 = scalar_lea.sflag [#allocation4], %s332
        %s334 = sand.u32 %s34, 1
        %s335 = smul.addr %s334, 320
        %s336 = scalar_lea.vmem [#allocation3], %s335
        // Predicated region
        $region57: #{tpu_custom_call.1} parent=55 // pred_check
          %p337 = pneg %p47
        $region58: #{tpu_custom_call.1} parent=55 // pred_check_branch
          %339 = sbr.rel (%p337) target = $region60
        $region59: #{tpu_custom_call.1} parent=55 // pred_region
          %340 = dma.done %s333, 5120
        $region60: #{tpu_custom_call.1} parent=55 // pred_fallthru
          _
        // Predicated region
        $region61: #{tpu_custom_call.1} parent=55 // pred_check
          %p341 = pneg %p68
        $region62: #{tpu_custom_call.1} parent=55 // pred_check_branch
          %343 = sbr.rel (%p341) target = $region64
        $region63: #{tpu_custom_call.1} parent=55 // pred_region
          %344 = dma.done [#allocation6], 30720
        $region64: #{tpu_custom_call.1} parent=55 // pred_fallthru
          _
        // Predicated region
        $region65: #{tpu_custom_call.1} parent=55 // pred_check
          %p345 = pneg %p110
        $region66: #{tpu_custom_call.1} parent=55 // pred_check_branch
          %347 = sbr.rel (%p345) target = $region68
        $region67: #{tpu_custom_call.1} parent=55 // pred_region
          %348 = dma.done [#allocation6], 3072
        $region68: #{tpu_custom_call.1} parent=55 // pred_fallthru
          _
        %s349 = sand.u32 %s34, 1
        %s350 = scalar_lea.sflag [#allocation4], %s349
        %s351 = sand.u32 %s34, 1
        %s352 = smul.addr %s351, 320
        %s353 = scalar_lea.vmem [#allocation3], %s352
        %p354 = pneg %p47
        %p355 = pneg %p44
        %p356 = pneg %p68
        %p357 = pneg %p65
        %p358 = pneg %p89
        %p359 = pneg %p86
        %p360 = pneg %p110
        %p361 = pneg %p107
        %p362 = pneg %p131
        %p363 = pneg %p128
        %p364 = pneg %p152
        %p365 = pneg %p149
        %p366 = pneg %p173
        %p367 = pneg %p170
        %p368 = pneg %p194
        %p369 = pneg %p191
        %p370 = pneg %p215
        %p371 = pneg %p212
        %p372 = pneg %p241
        %p373 = pneg %p238
        %p374 = scmp.lt.s32.totalorder %s26, 1
        %s375 = scalar_select %p374, %s26, 1
        %s376 = scalar_lea.vmem %s9, %s375
        %p377 = scmp.lt.s32.totalorder %s26, 1
        %s378 = scalar_select %p377, %s26, 1
        %s379 = scalar_lea.vmem %s9, %s378
        %v381 = vld [vmem:[%s336] sm:$0xff]
        %v382 = vld [vmem:[%s336 + $0x8] sm:$0xff]
        %v383 = vld [vmem:[%s336 + $0x10] sm:$0xff]
        %v384 = vld [vmem:[%s336 + $0x18] sm:$0xff]
        %v385 = vld [vmem:[%s336 + $0x20] sm:$0xff]
        %v386 = vld [vmem:[%s336 + $0x50] sm:$0xff]
        %v387 = vld [vmem:[%s336 + $0x58] sm:$0xff]
        %v388 = vld [vmem:[%s336 + $0x60] sm:$0xff]
        %v389 = vld [vmem:[%s336 + $0x68] sm:$0xff]
        %v390 = vld [vmem:[%s336 + $0x70] sm:$0xff]
        %v391 = vld [vmem:[%s336 + $0xa0] sm:$0xff]
        %v392 = vld [vmem:[%s336 + $0xa8] sm:$0xff]
        %v393 = vld [vmem:[%s336 + $0xb0] sm:$0xff]
        %v394 = vld [vmem:[%s336 + $0xb8] sm:$0xff]
        %v395 = vld [vmem:[%s336 + $0xc0] sm:$0xff]
        %v396 = vld [vmem:[%s336 + $0xf0] sm:$0xff]
        %v397 = vld [vmem:[%s336 + $0xf8] sm:$0xff]
        %v398 = vld [vmem:[%s336 + $0x100] sm:$0xff]
        %v399 = vld [vmem:[%s336 + $0x108] sm:$0xff]
        %v400 = vld [vmem:[%s336 + $0x110] sm:$0xff]
        %v401 = vunpack.c.l.bf16 %v381
        %v402 = vunpack.c.h.bf16 %v381
        %v403 = vunpack.c.l.bf16 %v382
        %v404 = vunpack.c.h.bf16 %v382
        %v405 = vunpack.c.l.bf16 %v383
        %v406 = vunpack.c.h.bf16 %v383
        %v407 = vunpack.c.l.bf16 %v384
        %v408 = vunpack.c.h.bf16 %v384
        %v409 = vunpack.c.l.bf16 %v385
        %v410 = vunpack.c.h.bf16 %v385
        %v411 = vunpack.c.l.bf16 %v386
        %v412 = vunpack.c.h.bf16 %v386
        %v413 = vunpack.c.l.bf16 %v387
        %v414 = vunpack.c.h.bf16 %v387
        %v415 = vunpack.c.l.bf16 %v388
        %v416 = vunpack.c.h.bf16 %v388
        %v417 = vunpack.c.l.bf16 %v389
        %v418 = vunpack.c.h.bf16 %v389
        %v419 = vunpack.c.l.bf16 %v390
        %v420 = vunpack.c.h.bf16 %v390
        %v421 = vunpack.c.l.bf16 %v391
        %v422 = vunpack.c.h.bf16 %v391
        %v423 = vunpack.c.l.bf16 %v392
        %v424 = vunpack.c.h.bf16 %v392
        %v425 = vunpack.c.l.bf16 %v393
        %v426 = vunpack.c.h.bf16 %v393
        %v427 = vunpack.c.l.bf16 %v394
        %v428 = vunpack.c.h.bf16 %v394
        %v429 = vunpack.c.l.bf16 %v395
        %v430 = vunpack.c.h.bf16 %v395
        %v431 = vunpack.c.l.bf16 %v396
        %v432 = vunpack.c.h.bf16 %v396
        %v433 = vunpack.c.l.bf16 %v397
        %v434 = vunpack.c.h.bf16 %v397
        %v435 = vunpack.c.l.bf16 %v398
        %v436 = vunpack.c.h.bf16 %v398
        %v437 = vunpack.c.l.bf16 %v399
        %v438 = vunpack.c.h.bf16 %v399
        %v439 = vunpack.c.l.bf16 %v400
        %v440 = vunpack.c.h.bf16 %v400
        %v441 = vrot.slane %v401, 4
        %v442 = vadd.f32 %v401, %v441
        %v443 = vrot.slane %v442, 2
        %v444 = vadd.f32 %v442, %v443
        %v445 = vrot.slane %v444, 1
        %v446 = vadd.f32 %v444, %v445
        %v447 = vrot.slane %v402, 4
        %v448 = vadd.f32 %v402, %v447
        %v449 = vrot.slane %v448, 2
        %v450 = vadd.f32 %v448, %v449
        %v451 = vrot.slane %v450, 1
        %v452 = vadd.f32 %v450, %v451
        %v453 = vrot.slane %v403, 4
        %v454 = vadd.f32 %v403, %v453
        %v455 = vrot.slane %v454, 2
        %v456 = vadd.f32 %v454, %v455
        %v457 = vrot.slane %v456, 1
        %v458 = vadd.f32 %v456, %v457
        %v459 = vrot.slane %v404, 4
        %v460 = vadd.f32 %v404, %v459
        %v461 = vrot.slane %v460, 2
        %v462 = vadd.f32 %v460, %v461
        %v463 = vrot.slane %v462, 1
        %v464 = vadd.f32 %v462, %v463
        %v465 = vrot.slane %v405, 4
        %v466 = vadd.f32 %v405, %v465
        %v467 = vrot.slane %v466, 2
        %v468 = vadd.f32 %v466, %v467
        %v469 = vrot.slane %v468, 1
        %v470 = vadd.f32 %v468, %v469
        %v471 = vrot.slane %v406, 4
        %v472 = vadd.f32 %v406, %v471
        %v473 = vrot.slane %v472, 2
        %v474 = vadd.f32 %v472, %v473
        %v475 = vrot.slane %v474, 1
        %v476 = vadd.f32 %v474, %v475
        %v477 = vrot.slane %v407, 4
        %v478 = vadd.f32 %v407, %v477
        %v479 = vrot.slane %v478, 2
        %v480 = vadd.f32 %v478, %v479
        %v481 = vrot.slane %v480, 1
        %v482 = vadd.f32 %v480, %v481
        %v483 = vrot.slane %v408, 4
        %v484 = vadd.f32 %v408, %v483
        %v485 = vrot.slane %v484, 2
        %v486 = vadd.f32 %v484, %v485
        %v487 = vrot.slane %v486, 1
        %v488 = vadd.f32 %v486, %v487
        %v489 = vrot.slane %v409, 4
        %v490 = vadd.f32 %v409, %v489
        %v491 = vrot.slane %v490, 2
        %v492 = vadd.f32 %v490, %v491
        %v493 = vrot.slane %v492, 1
        %v494 = vadd.f32 %v492, %v493
        %v495 = vrot.slane %v410, 4
        %v496 = vadd.f32 %v410, %v495
        %v497 = vrot.slane %v496, 2
        %v498 = vadd.f32 %v496, %v497
        %v499 = vrot.slane %v498, 1
        %v500 = vadd.f32 %v498, %v499
        %v501 = vrot.slane %v411, 4
        %v502 = vadd.f32 %v411, %v501
        %v503 = vrot.slane %v502, 2
        %v504 = vadd.f32 %v502, %v503
        %v505 = vrot.slane %v504, 1
        %v506 = vadd.f32 %v504, %v505
        %v507 = vrot.slane %v412, 4
        %v508 = vadd.f32 %v412, %v507
        %v509 = vrot.slane %v508, 2
        %v510 = vadd.f32 %v508, %v509
        %v511 = vrot.slane %v510, 1
        %v512 = vadd.f32 %v510, %v511
        %v513 = vrot.slane %v413, 4
        %v514 = vadd.f32 %v413, %v513
        %v515 = vrot.slane %v514, 2
        %v516 = vadd.f32 %v514, %v515
        %v517 = vrot.slane %v516, 1
        %v518 = vadd.f32 %v516, %v517
        %v519 = vrot.slane %v414, 4
        %v520 = vadd.f32 %v414, %v519
        %v521 = vrot.slane %v520, 2
        %v522 = vadd.f32 %v520, %v521
        %v523 = vrot.slane %v522, 1
        %v524 = vadd.f32 %v522, %v523
        %v525 = vrot.slane %v415, 4
        %v526 = vadd.f32 %v415, %v525
        %v527 = vrot.slane %v526, 2
        %v528 = vadd.f32 %v526, %v527
        %v529 = vrot.slane %v528, 1
        %v530 = vadd.f32 %v528, %v529
        %v531 = vrot.slane %v416, 4
        %v532 = vadd.f32 %v416, %v531
        %v533 = vrot.slane %v532, 2
        %v534 = vadd.f32 %v532, %v533
        %v535 = vrot.slane %v534, 1
        %v536 = vadd.f32 %v534, %v535
        %v537 = vrot.slane %v417, 4
        %v538 = vadd.f32 %v417, %v537
        %v539 = vrot.slane %v538, 2
        %v540 = vadd.f32 %v538, %v539
        %v541 = vrot.slane %v540, 1
        %v542 = vadd.f32 %v540, %v541
        %v543 = vrot.slane %v418, 4
        %v544 = vadd.f32 %v418, %v543
        %v545 = vrot.slane %v544, 2
        %v546 = vadd.f32 %v544, %v545
        %v547 = vrot.slane %v546, 1
        %v548 = vadd.f32 %v546, %v547
        %v549 = vrot.slane %v419, 4
        %v550 = vadd.f32 %v419, %v549
        %v551 = vrot.slane %v550, 2
        %v552 = vadd.f32 %v550, %v551
        %v553 = vrot.slane %v552, 1
        %v554 = vadd.f32 %v552, %v553
        %v555 = vrot.slane %v420, 4
        %v556 = vadd.f32 %v420, %v555
        %v557 = vrot.slane %v556, 2
        %v558 = vadd.f32 %v556, %v557
        %v559 = vrot.slane %v558, 1
        %v560 = vadd.f32 %v558, %v559
        %v561 = vrot.slane %v421, 4
        %v562 = vadd.f32 %v421, %v561
        %v563 = vrot.slane %v562, 2
        %v564 = vadd.f32 %v562, %v563
        %v565 = vrot.slane %v564, 1
        %v566 = vadd.f32 %v564, %v565
        %v567 = vrot.slane %v422, 4
        %v568 = vadd.f32 %v422, %v567
        %v569 = vrot.slane %v568, 2
        %v570 = vadd.f32 %v568, %v569
        %v571 = vrot.slane %v570, 1
        %v572 = vadd.f32 %v570, %v571
        %v573 = vrot.slane %v423, 4
        %v574 = vadd.f32 %v423, %v573
        %v575 = vrot.slane %v574, 2
        %v576 = vadd.f32 %v574, %v575
        %v577 = vrot.slane %v576, 1
        %v578 = vadd.f32 %v576, %v577
        %v579 = vrot.slane %v424, 4
        %v580 = vadd.f32 %v424, %v579
        %v581 = vrot.slane %v580, 2
        %v582 = vadd.f32 %v580, %v581
        %v583 = vrot.slane %v582, 1
        %v584 = vadd.f32 %v582, %v583
        %v585 = vrot.slane %v425, 4
        %v586 = vadd.f32 %v425, %v585
        %v587 = vrot.slane %v586, 2
        %v588 = vadd.f32 %v586, %v587
        %v589 = vrot.slane %v588, 1
        %v590 = vadd.f32 %v588, %v589
        %v591 = vrot.slane %v426, 4
        %v592 = vadd.f32 %v426, %v591
        %v593 = vrot.slane %v592, 2
        %v594 = vadd.f32 %v592, %v593
        %v595 = vrot.slane %v594, 1
        %v596 = vadd.f32 %v594, %v595
        %v597 = vrot.slane %v427, 4
        %v598 = vadd.f32 %v427, %v597
        %v599 = vrot.slane %v598, 2
        %v600 = vadd.f32 %v598, %v599
        %v601 = vrot.slane %v600, 1
        %v602 = vadd.f32 %v600, %v601
        %v603 = vrot.slane %v428, 4
        %v604 = vadd.f32 %v428, %v603
        %v605 = vrot.slane %v604, 2
        %v606 = vadd.f32 %v604, %v605
        %v607 = vrot.slane %v606, 1
        %v608 = vadd.f32 %v606, %v607
        %v609 = vrot.slane %v429, 4
        %v610 = vadd.f32 %v429, %v609
        %v611 = vrot.slane %v610, 2
        %v612 = vadd.f32 %v610, %v611
        %v613 = vrot.slane %v612, 1
        %v614 = vadd.f32 %v612, %v613
        %v615 = vrot.slane %v430, 4
        %v616 = vadd.f32 %v430, %v615
        %v617 = vrot.slane %v616, 2
        %v618 = vadd.f32 %v616, %v617
        %v619 = vrot.slane %v618, 1
        %v620 = vadd.f32 %v618, %v619
        %v621 = vrot.slane %v431, 4
        %v622 = vadd.f32 %v431, %v621
        %v623 = vrot.slane %v622, 2
        %v624 = vadd.f32 %v622, %v623
        %v625 = vrot.slane %v624, 1
        %v626 = vadd.f32 %v624, %v625
        %v627 = vrot.slane %v432, 4
        %v628 = vadd.f32 %v432, %v627
        %v629 = vrot.slane %v628, 2
        %v630 = vadd.f32 %v628, %v629
        %v631 = vrot.slane %v630, 1
        %v632 = vadd.f32 %v630, %v631
        %v633 = vrot.slane %v433, 4
        %v634 = vadd.f32 %v433, %v633
        %v635 = vrot.slane %v634, 2
        %v636 = vadd.f32 %v634, %v635
        %v637 = vrot.slane %v636, 1
        %v638 = vadd.f32 %v636, %v637
        %v639 = vrot.slane %v434, 4
        %v640 = vadd.f32 %v434, %v639
        %v641 = vrot.slane %v640, 2
        %v642 = vadd.f32 %v640, %v641
        %v643 = vrot.slane %v642, 1
        %v644 = vadd.f32 %v642, %v643
        %v645 = vrot.slane %v435, 4
        %v646 = vadd.f32 %v435, %v645
        %v647 = vrot.slane %v646, 2
        %v648 = vadd.f32 %v646, %v647
        %v649 = vrot.slane %v648, 1
        %v650 = vadd.f32 %v648, %v649
        %v651 = vrot.slane %v436, 4
        %v652 = vadd.f32 %v436, %v651
        %v653 = vrot.slane %v652, 2
        %v654 = vadd.f32 %v652, %v653
        %v655 = vrot.slane %v654, 1
        %v656 = vadd.f32 %v654, %v655
        %v657 = vrot.slane %v437, 4
        %v658 = vadd.f32 %v437, %v657
        %v659 = vrot.slane %v658, 2
        %v660 = vadd.f32 %v658, %v659
        %v661 = vrot.slane %v660, 1
        %v662 = vadd.f32 %v660, %v661
        %v663 = vrot.slane %v438, 4
        %v664 = vadd.f32 %v438, %v663
        %v665 = vrot.slane %v664, 2
        %v666 = vadd.f32 %v664, %v665
        %v667 = vrot.slane %v666, 1
        %v668 = vadd.f32 %v666, %v667
        %v669 = vrot.slane %v439, 4
        %v670 = vadd.f32 %v439, %v669
        %v671 = vrot.slane %v670, 2
        %v672 = vadd.f32 %v670, %v671
        %v673 = vrot.slane %v672, 1
        %v674 = vadd.f32 %v672, %v673
        %v675 = vrot.slane %v440, 4
        %v676 = vadd.f32 %v440, %v675
        %v677 = vrot.slane %v676, 2
        %v678 = vadd.f32 %v676, %v677
        %v679 = vrot.slane %v678, 1
        %v680 = vadd.f32 %v678, %v679
        %v681 = vadd.f32 %v446, 0.0
        %v682 = vadd.f32 %v452, 0.0
        %v683 = vadd.f32 %v458, 0.0
        %v684 = vadd.f32 %v464, 0.0
        %v685 = vadd.f32 %v470, 0.0
        %v686 = vadd.f32 %v476, 0.0
        %v687 = vadd.f32 %v482, 0.0
        %v688 = vadd.f32 %v488, 0.0
        %v689 = vadd.f32 %v494, 0.0
        %v690 = vadd.f32 %v500, 0.0
        %v691 = vadd.f32 %v506, 0.0
        %v692 = vadd.f32 %v512, 0.0
        %v693 = vadd.f32 %v518, 0.0
        %v694 = vadd.f32 %v524, 0.0
        %v695 = vadd.f32 %v530, 0.0
        %v696 = vadd.f32 %v536, 0.0
        %v697 = vadd.f32 %v542, 0.0
        %v698 = vadd.f32 %v548, 0.0
        %v699 = vadd.f32 %v554, 0.0
        %v700 = vadd.f32 %v560, 0.0
        %v701 = vadd.f32 %v566, 0.0
        %v702 = vadd.f32 %v572, 0.0
        %v703 = vadd.f32 %v578, 0.0
        %v704 = vadd.f32 %v584, 0.0
        %v705 = vadd.f32 %v590, 0.0
        %v706 = vadd.f32 %v596, 0.0
        %v707 = vadd.f32 %v602, 0.0
        %v708 = vadd.f32 %v608, 0.0
        %v709 = vadd.f32 %v614, 0.0
        %v710 = vadd.f32 %v620, 0.0
        %v711 = vadd.f32 %v626, 0.0
        %v712 = vadd.f32 %v632, 0.0
        %v713 = vadd.f32 %v638, 0.0
        %v714 = vadd.f32 %v644, 0.0
        %v715 = vadd.f32 %v650, 0.0
        %v716 = vadd.f32 %v656, 0.0
        %v717 = vadd.f32 %v662, 0.0
        %v718 = vadd.f32 %v668, 0.0
        %v719 = vadd.f32 %v674, 0.0
        %v720 = vadd.f32 %v680, 0.0
        %v721 = vld [vmem:[%s336 + $0x28] sm:$0xff]
        %v722 = vld [vmem:[%s336 + $0x30] sm:$0xff]
        %v723 = vld [vmem:[%s336 + $0x38] sm:$0xff]
        %v724 = vld [vmem:[%s336 + $0x40] sm:$0xff]
        %v725 = vld [vmem:[%s336 + $0x48] sm:$0xff]
        %v726 = vld [vmem:[%s336 + $0x78] sm:$0xff]
        %v727 = vld [vmem:[%s336 + $0x80] sm:$0xff]
        %v728 = vld [vmem:[%s336 + $0x88] sm:$0xff]
        %v729 = vld [vmem:[%s336 + $0x90] sm:$0xff]
        %v730 = vld [vmem:[%s336 + $0x98] sm:$0xff]
        %v731 = vld [vmem:[%s336 + $0xc8] sm:$0xff]
        %v732 = vld [vmem:[%s336 + $0xd0] sm:$0xff]
        %v733 = vld [vmem:[%s336 + $0xd8] sm:$0xff]
        %v734 = vld [vmem:[%s336 + $0xe0] sm:$0xff]
        %v735 = vld [vmem:[%s336 + $0xe8] sm:$0xff]
        %v736 = vld [vmem:[%s336 + $0x118] sm:$0xff]
        %v737 = vld [vmem:[%s336 + $0x120] sm:$0xff]
        %v738 = vld [vmem:[%s336 + $0x128] sm:$0xff]
        %v739 = vld [vmem:[%s336 + $0x130] sm:$0xff]
        %v740 = vld [vmem:[%s336 + $0x138] sm:$0xff]
        %v741 = vunpack.c.l.bf16 %v721
        %v742 = vunpack.c.h.bf16 %v721
        %v743 = vunpack.c.l.bf16 %v722
        %v744 = vunpack.c.h.bf16 %v722
        %v745 = vunpack.c.l.bf16 %v723
        %v746 = vunpack.c.h.bf16 %v723
        %v747 = vunpack.c.l.bf16 %v724
        %v748 = vunpack.c.h.bf16 %v724
        %v749 = vunpack.c.l.bf16 %v725
        %v750 = vunpack.c.h.bf16 %v725
        %v751 = vunpack.c.l.bf16 %v726
        %v752 = vunpack.c.h.bf16 %v726
        %v753 = vunpack.c.l.bf16 %v727
        %v754 = vunpack.c.h.bf16 %v727
        %v755 = vunpack.c.l.bf16 %v728
        %v756 = vunpack.c.h.bf16 %v728
        %v757 = vunpack.c.l.bf16 %v729
        %v758 = vunpack.c.h.bf16 %v729
        %v759 = vunpack.c.l.bf16 %v730
        %v760 = vunpack.c.h.bf16 %v730
        %v761 = vunpack.c.l.bf16 %v731
        %v762 = vunpack.c.h.bf16 %v731
        %v763 = vunpack.c.l.bf16 %v732
        %v764 = vunpack.c.h.bf16 %v732
        %v765 = vunpack.c.l.bf16 %v733
        %v766 = vunpack.c.h.bf16 %v733
        %v767 = vunpack.c.l.bf16 %v734
        %v768 = vunpack.c.h.bf16 %v734
        %v769 = vunpack.c.l.bf16 %v735
        %v770 = vunpack.c.h.bf16 %v735
        %v771 = vunpack.c.l.bf16 %v736
        %v772 = vunpack.c.h.bf16 %v736
        %v773 = vunpack.c.l.bf16 %v737
        %v774 = vunpack.c.h.bf16 %v737
        %v775 = vunpack.c.l.bf16 %v738
        %v776 = vunpack.c.h.bf16 %v738
        %v777 = vunpack.c.l.bf16 %v739
        %v778 = vunpack.c.h.bf16 %v739
        %v779 = vunpack.c.l.bf16 %v740
        %v780 = vunpack.c.h.bf16 %v740
        %v781 = vrot.slane %v741, 4
        %v782 = vadd.f32 %v741, %v781
        %v783 = vrot.slane %v782, 2
        %v784 = vadd.f32 %v782, %v783
        %v785 = vrot.slane %v784, 1
        %v786 = vadd.f32 %v784, %v785
        %v787 = vrot.slane %v742, 4
        %v788 = vadd.f32 %v742, %v787
        %v789 = vrot.slane %v788, 2
        %v790 = vadd.f32 %v788, %v789
        %v791 = vrot.slane %v790, 1
        %v792 = vadd.f32 %v790, %v791
        %v793 = vrot.slane %v743, 4
        %v794 = vadd.f32 %v743, %v793
        %v795 = vrot.slane %v794, 2
        %v796 = vadd.f32 %v794, %v795
        %v797 = vrot.slane %v796, 1
        %v798 = vadd.f32 %v796, %v797
        %v799 = vrot.slane %v744, 4
        %v800 = vadd.f32 %v744, %v799
        %v801 = vrot.slane %v800, 2
        %v802 = vadd.f32 %v800, %v801
        %v803 = vrot.slane %v802, 1
        %v804 = vadd.f32 %v802, %v803
        %v805 = vrot.slane %v745, 4
        %v806 = vadd.f32 %v745, %v805
        %v807 = vrot.slane %v806, 2
        %v808 = vadd.f32 %v806, %v807
        %v809 = vrot.slane %v808, 1
        %v810 = vadd.f32 %v808, %v809
        %v811 = vrot.slane %v746, 4
        %v812 = vadd.f32 %v746, %v811
        %v813 = vrot.slane %v812, 2
        %v814 = vadd.f32 %v812, %v813
        %v815 = vrot.slane %v814, 1
        %v816 = vadd.f32 %v814, %v815
        %v817 = vrot.slane %v747, 4
        %v818 = vadd.f32 %v747, %v817
        %v819 = vrot.slane %v818, 2
        %v820 = vadd.f32 %v818, %v819
        %v821 = vrot.slane %v820, 1
        %v822 = vadd.f32 %v820, %v821
        %v823 = vrot.slane %v748, 4
        %v824 = vadd.f32 %v748, %v823
        %v825 = vrot.slane %v824, 2
        %v826 = vadd.f32 %v824, %v825
        %v827 = vrot.slane %v826, 1
        %v828 = vadd.f32 %v826, %v827
        %v829 = vrot.slane %v749, 4
        %v830 = vadd.f32 %v749, %v829
        %v831 = vrot.slane %v830, 2
        %v832 = vadd.f32 %v830, %v831
        %v833 = vrot.slane %v832, 1
        %v834 = vadd.f32 %v832, %v833
        %v835 = vrot.slane %v750, 4
        %v836 = vadd.f32 %v750, %v835
        %v837 = vrot.slane %v836, 2
        %v838 = vadd.f32 %v836, %v837
        %v839 = vrot.slane %v838, 1
        %v840 = vadd.f32 %v838, %v839
        %v841 = vrot.slane %v751, 4
        %v842 = vadd.f32 %v751, %v841
        %v843 = vrot.slane %v842, 2
        %v844 = vadd.f32 %v842, %v843
        %v845 = vrot.slane %v844, 1
        %v846 = vadd.f32 %v844, %v845
        %v847 = vrot.slane %v752, 4
        %v848 = vadd.f32 %v752, %v847
        %v849 = vrot.slane %v848, 2
        %v850 = vadd.f32 %v848, %v849
        %v851 = vrot.slane %v850, 1
        %v852 = vadd.f32 %v850, %v851
        %v853 = vrot.slane %v753, 4
        %v854 = vadd.f32 %v753, %v853
        %v855 = vrot.slane %v854, 2
        %v856 = vadd.f32 %v854, %v855
        %v857 = vrot.slane %v856, 1
        %v858 = vadd.f32 %v856, %v857
        %v859 = vrot.slane %v754, 4
        %v860 = vadd.f32 %v754, %v859
        %v861 = vrot.slane %v860, 2
        %v862 = vadd.f32 %v860, %v861
        %v863 = vrot.slane %v862, 1
        %v864 = vadd.f32 %v862, %v863
        %v865 = vrot.slane %v755, 4
        %v866 = vadd.f32 %v755, %v865
        %v867 = vrot.slane %v866, 2
        %v868 = vadd.f32 %v866, %v867
        %v869 = vrot.slane %v868, 1
        %v870 = vadd.f32 %v868, %v869
        %v871 = vrot.slane %v756, 4
        %v872 = vadd.f32 %v756, %v871
        %v873 = vrot.slane %v872, 2
        %v874 = vadd.f32 %v872, %v873
        %v875 = vrot.slane %v874, 1
        %v876 = vadd.f32 %v874, %v875
        %v877 = vrot.slane %v757, 4
        %v878 = vadd.f32 %v757, %v877
        %v879 = vrot.slane %v878, 2
        %v880 = vadd.f32 %v878, %v879
        %v881 = vrot.slane %v880, 1
        %v882 = vadd.f32 %v880, %v881
        %v883 = vrot.slane %v758, 4
        %v884 = vadd.f32 %v758, %v883
        %v885 = vrot.slane %v884, 2
        %v886 = vadd.f32 %v884, %v885
        %v887 = vrot.slane %v886, 1
        %v888 = vadd.f32 %v886, %v887
        %v889 = vrot.slane %v759, 4
        %v890 = vadd.f32 %v759, %v889
        %v891 = vrot.slane %v890, 2
        %v892 = vadd.f32 %v890, %v891
        %v893 = vrot.slane %v892, 1
        %v894 = vadd.f32 %v892, %v893
        %v895 = vrot.slane %v760, 4
        %v896 = vadd.f32 %v760, %v895
        %v897 = vrot.slane %v896, 2
        %v898 = vadd.f32 %v896, %v897
        %v899 = vrot.slane %v898, 1
        %v900 = vadd.f32 %v898, %v899
        %v901 = vrot.slane %v761, 4
        %v902 = vadd.f32 %v761, %v901
        %v903 = vrot.slane %v902, 2
        %v904 = vadd.f32 %v902, %v903
        %v905 = vrot.slane %v904, 1
        %v906 = vadd.f32 %v904, %v905
        %v907 = vrot.slane %v762, 4
        %v908 = vadd.f32 %v762, %v907
        %v909 = vrot.slane %v908, 2
        %v910 = vadd.f32 %v908, %v909
        %v911 = vrot.slane %v910, 1
        %v912 = vadd.f32 %v910, %v911
        %v913 = vrot.slane %v763, 4
        %v914 = vadd.f32 %v763, %v913
        %v915 = vrot.slane %v914, 2
        %v916 = vadd.f32 %v914, %v915
        %v917 = vrot.slane %v916, 1
        %v918 = vadd.f32 %v916, %v917
        %v919 = vrot.slane %v764, 4
        %v920 = vadd.f32 %v764, %v919
        %v921 = vrot.slane %v920, 2
        %v922 = vadd.f32 %v920, %v921
        %v923 = vrot.slane %v922, 1
        %v924 = vadd.f32 %v922, %v923
        %v925 = vrot.slane %v765, 4
        %v926 = vadd.f32 %v765, %v925
        %v927 = vrot.slane %v926, 2
        %v928 = vadd.f32 %v926, %v927
        %v929 = vrot.slane %v928, 1
        %v930 = vadd.f32 %v928, %v929
        %v931 = vrot.slane %v766, 4
        %v932 = vadd.f32 %v766, %v931
        %v933 = vrot.slane %v932, 2
        %v934 = vadd.f32 %v932, %v933
        %v935 = vrot.slane %v934, 1
        %v936 = vadd.f32 %v934, %v935
        %v937 = vrot.slane %v767, 4
        %v938 = vadd.f32 %v767, %v937
        %v939 = vrot.slane %v938, 2
        %v940 = vadd.f32 %v938, %v939
        %v941 = vrot.slane %v940, 1
        %v942 = vadd.f32 %v940, %v941
        %v943 = vrot.slane %v768, 4
        %v944 = vadd.f32 %v768, %v943
        %v945 = vrot.slane %v944, 2
        %v946 = vadd.f32 %v944, %v945
        %v947 = vrot.slane %v946, 1
        %v948 = vadd.f32 %v946, %v947
        %v949 = vrot.slane %v769, 4
        %v950 = vadd.f32 %v769, %v949
        %v951 = vrot.slane %v950, 2
        %v952 = vadd.f32 %v950, %v951
        %v953 = vrot.slane %v952, 1
        %v954 = vadd.f32 %v952, %v953
        %v955 = vrot.slane %v770, 4
        %v956 = vadd.f32 %v770, %v955
        %v957 = vrot.slane %v956, 2
        %v958 = vadd.f32 %v956, %v957
        %v959 = vrot.slane %v958, 1
        %v960 = vadd.f32 %v958, %v959
        %v961 = vrot.slane %v771, 4
        %v962 = vadd.f32 %v771, %v961
        %v963 = vrot.slane %v962, 2
        %v964 = vadd.f32 %v962, %v963
        %v965 = vrot.slane %v964, 1
        %v966 = vadd.f32 %v964, %v965
        %v967 = vrot.slane %v772, 4
        %v968 = vadd.f32 %v772, %v967
        %v969 = vrot.slane %v968, 2
        %v970 = vadd.f32 %v968, %v969
        %v971 = vrot.slane %v970, 1
        %v972 = vadd.f32 %v970, %v971
        %v973 = vrot.slane %v773, 4
        %v974 = vadd.f32 %v773, %v973
        %v975 = vrot.slane %v974, 2
        %v976 = vadd.f32 %v974, %v975
        %v977 = vrot.slane %v976, 1
        %v978 = vadd.f32 %v976, %v977
        %v979 = vrot.slane %v774, 4
        %v980 = vadd.f32 %v774, %v979
        %v981 = vrot.slane %v980, 2
        %v982 = vadd.f32 %v980, %v981
        %v983 = vrot.slane %v982, 1
        %v984 = vadd.f32 %v982, %v983
        %v985 = vrot.slane %v775, 4
        %v986 = vadd.f32 %v775, %v985
        %v987 = vrot.slane %v986, 2
        %v988 = vadd.f32 %v986, %v987
        %v989 = vrot.slane %v988, 1
        %v990 = vadd.f32 %v988, %v989
        %v991 = vrot.slane %v776, 4
        %v992 = vadd.f32 %v776, %v991
        %v993 = vrot.slane %v992, 2
        %v994 = vadd.f32 %v992, %v993
        %v995 = vrot.slane %v994, 1
        %v996 = vadd.f32 %v994, %v995
        %v997 = vrot.slane %v777, 4
        %v998 = vadd.f32 %v777, %v997
        %v999 = vrot.slane %v998, 2
        %v1000 = vadd.f32 %v998, %v999
        %v1001 = vrot.slane %v1000, 1
        %v1002 = vadd.f32 %v1000, %v1001
        %v1003 = vrot.slane %v778, 4
        %v1004 = vadd.f32 %v778, %v1003
        %v1005 = vrot.slane %v1004, 2
        %v1006 = vadd.f32 %v1004, %v1005
        %v1007 = vrot.slane %v1006, 1
        %v1008 = vadd.f32 %v1006, %v1007
        %v1009 = vrot.slane %v779, 4
        %v1010 = vadd.f32 %v779, %v1009
        %v1011 = vrot.slane %v1010, 2
        %v1012 = vadd.f32 %v1010, %v1011
        %v1013 = vrot.slane %v1012, 1
        %v1014 = vadd.f32 %v1012, %v1013
        %v1015 = vrot.slane %v780, 4
        %v1016 = vadd.f32 %v780, %v1015
        %v1017 = vrot.slane %v1016, 2
        %v1018 = vadd.f32 %v1016, %v1017
        %v1019 = vrot.slane %v1018, 1
        %v1020 = vadd.f32 %v1018, %v1019
        %v1021 = vadd.f32 %v681, %v786
        %v1022 = vadd.f32 %v682, %v792
        %v1023 = vadd.f32 %v683, %v798
        %v1024 = vadd.f32 %v684, %v804
        %v1025 = vadd.f32 %v685, %v810
        %v1026 = vadd.f32 %v686, %v816
        %v1027 = vadd.f32 %v687, %v822
        %v1028 = vadd.f32 %v688, %v828
        %v1029 = vadd.f32 %v689, %v834
        %v1030 = vadd.f32 %v690, %v840
        %v1031 = vadd.f32 %v691, %v846
        %v1032 = vadd.f32 %v692, %v852
        %v1033 = vadd.f32 %v693, %v858
        %v1034 = vadd.f32 %v694, %v864
        %v1035 = vadd.f32 %v695, %v870
        %v1036 = vadd.f32 %v696, %v876
        %v1037 = vadd.f32 %v697, %v882
        %v1038 = vadd.f32 %v698, %v888
        %v1039 = vadd.f32 %v699, %v894
        %v1040 = vadd.f32 %v700, %v900
        %v1041 = vadd.f32 %v701, %v906
        %v1042 = vadd.f32 %v702, %v912
        %v1043 = vadd.f32 %v703, %v918
        %v1044 = vadd.f32 %v704, %v924
        %v1045 = vadd.f32 %v705, %v930
        %v1046 = vadd.f32 %v706, %v936
        %v1047 = vadd.f32 %v707, %v942
        %v1048 = vadd.f32 %v708, %v948
        %v1049 = vadd.f32 %v709, %v954
        %v1050 = vadd.f32 %v710, %v960
        %v1051 = vadd.f32 %v711, %v966
        %v1052 = vadd.f32 %v712, %v972
        %v1053 = vadd.f32 %v713, %v978
        %v1054 = vadd.f32 %v714, %v984
        %v1055 = vadd.f32 %v715, %v990
        %v1056 = vadd.f32 %v716, %v996
        %v1057 = vadd.f32 %v717, %v1002
        %v1058 = vadd.f32 %v718, %v1008
        %v1059 = vadd.f32 %v719, %v1014
        %v1060 = vadd.f32 %v720, %v1020
        %v1061 = vpack.c.bf16 %v1021, %v1021
        %v1062 = vpack.c.bf16 %v1022, %v1022
        %v1063 = vpack.c.bf16 %v1023, %v1023
        %v1064 = vpack.c.bf16 %v1024, %v1024
        %v1065 = vpack.c.bf16 %v1025, %v1025
        %v1066 = vpack.c.bf16 %v1026, %v1026
        %v1067 = vpack.c.bf16 %v1027, %v1027
        %v1068 = vpack.c.bf16 %v1028, %v1028
        %v1069 = vpack.c.bf16 %v1029, %v1029
        %v1070 = vpack.c.bf16 %v1030, %v1030
        %v1071 = vpack.c.bf16 %v1031, %v1031
        %v1072 = vpack.c.bf16 %v1032, %v1032
        %v1073 = vpack.c.bf16 %v1033, %v1033
        %v1074 = vpack.c.bf16 %v1034, %v1034
        %v1075 = vpack.c.bf16 %v1035, %v1035
        %v1076 = vpack.c.bf16 %v1036, %v1036
        %v1077 = vpack.c.bf16 %v1037, %v1037
        %v1078 = vpack.c.bf16 %v1038, %v1038
        %v1079 = vpack.c.bf16 %v1039, %v1039
        %v1080 = vpack.c.bf16 %v1040, %v1040
        %v1081 = vpack.c.bf16 %v1041, %v1041
        %v1082 = vpack.c.bf16 %v1042, %v1042
        %v1083 = vpack.c.bf16 %v1043, %v1043
        %v1084 = vpack.c.bf16 %v1044, %v1044
        %v1085 = vpack.c.bf16 %v1045, %v1045
        %v1086 = vpack.c.bf16 %v1046, %v1046
        %v1087 = vpack.c.bf16 %v1047, %v1047
        %v1088 = vpack.c.bf16 %v1048, %v1048
        %v1089 = vpack.c.bf16 %v1049, %v1049
        %v1090 = vpack.c.bf16 %v1050, %v1050
        %v1091 = vpack.c.bf16 %v1051, %v1051
        %v1092 = vpack.c.bf16 %v1052, %v1052
        %v1093 = vpack.c.bf16 %v1053, %v1053
        %v1094 = vpack.c.bf16 %v1054, %v1054
        %v1095 = vpack.c.bf16 %v1055, %v1055
        %v1096 = vpack.c.bf16 %v1056, %v1056
        %v1097 = vpack.c.bf16 %v1057, %v1057
        %v1098 = vpack.c.bf16 %v1058, %v1058
        %v1099 = vpack.c.bf16 %v1059, %v1059
        %v1100 = vpack.c.bf16 %v1060, %v1060
        %v1101 = vld [vmem:[#allocation5] sm:$0xff]
        %v1102 = vld [vmem:[#allocation5 + $0x8] sm:$0xf]
        %v1103 = vld [vmem:[#allocation5 + $0xc] sm:$0xff]
        %v1104 = vld [vmem:[#allocation5 + $0x14] sm:$0xf]
        %v1105 = vld [vmem:[#allocation5 + $0x18] sm:$0xff]
        %v1106 = vld [vmem:[#allocation5 + $0x20] sm:$0xf]
        %v1107 = vld [vmem:[#allocation5 + $0x24] sm:$0xff]
        %v1108 = vld [vmem:[#allocation5 + $0x2c] sm:$0xf]
        %v1109 = vld [vmem:[#allocation5 + $0x30] sm:$0xff]
        %v1110 = vld [vmem:[#allocation5 + $0x38] sm:$0xf]
        %v1111 = vld [vmem:[#allocation5 + $0x3c] sm:$0xff]
        %v1112 = vld [vmem:[#allocation5 + $0x44] sm:$0xf]
        %v1113 = vld [vmem:[#allocation5 + $0x48] sm:$0xff]
        %v1114 = vld [vmem:[#allocation5 + $0x50] sm:$0xf]
        %v1115 = vld [vmem:[#allocation5 + $0x54] sm:$0xff]
        %v1116 = vld [vmem:[#allocation5 + $0x5c] sm:$0xf]
        %v1117 = vld [vmem:[#allocation5 + $0x60] sm:$0xff]
        %v1118 = vld [vmem:[#allocation5 + $0x68] sm:$0xf]
        %v1119 = vld [vmem:[#allocation5 + $0x6c] sm:$0xff]
        %v1120 = vld [vmem:[#allocation5 + $0x74] sm:$0xf]
        %v1121 = vld [vmem:[#allocation5 + $0x78] sm:$0xff]
        %v1122 = vld [vmem:[#allocation5 + $0x80] sm:$0xf]
        %v1123 = vld [vmem:[#allocation5 + $0x84] sm:$0xff]
        %v1124 = vld [vmem:[#allocation5 + $0x8c] sm:$0xf]
        %v1125 = vld [vmem:[#allocation5 + $0x90] sm:$0xff]
        %v1126 = vld [vmem:[#allocation5 + $0x98] sm:$0xf]
        %v1127 = vld [vmem:[#allocation5 + $0x9c] sm:$0xff]
        %v1128 = vld [vmem:[#allocation5 + $0xa4] sm:$0xf]
        %v1129 = vld [vmem:[#allocation5 + $0xa8] sm:$0xff]
        %v1130 = vld [vmem:[#allocation5 + $0xb0] sm:$0xf]
        %v1131 = vld [vmem:[#allocation5 + $0xb4] sm:$0xff]
        %v1132 = vld [vmem:[#allocation5 + $0xbc] sm:$0xf]
        %v1133 = vld [vmem:[#allocation5 + $0xc0] sm:$0xff]
        %v1134 = vld [vmem:[#allocation5 + $0xc8] sm:$0xf]
        %v1135 = vld [vmem:[#allocation5 + $0xcc] sm:$0xff]
        %v1136 = vld [vmem:[#allocation5 + $0xd4] sm:$0xf]
        %v1137 = vld [vmem:[#allocation5 + $0xd8] sm:$0xff]
        %v1138 = vld [vmem:[#allocation5 + $0xe0] sm:$0xf]
        %v1139 = vld [vmem:[#allocation5 + $0xe4] sm:$0xff]
        %v1140 = vld [vmem:[#allocation5 + $0xec] sm:$0xf]
        %v1141 = vld [vmem:[#allocation5 + $0xf0] sm:$0xff]
        %v1142 = vld [vmem:[#allocation5 + $0xf8] sm:$0xf]
        %v1143 = vld [vmem:[#allocation5 + $0xfc] sm:$0xff]
        %v1144 = vld [vmem:[#allocation5 + $0x104] sm:$0xf]
        %v1145 = vld [vmem:[#allocation5 + $0x108] sm:$0xff]
        %v1146 = vld [vmem:[#allocation5 + $0x110] sm:$0xf]
        %v1147 = vld [vmem:[#allocation5 + $0x114] sm:$0xff]
        %v1148 = vld [vmem:[#allocation5 + $0x11c] sm:$0xf]
        %v1149 = vld [vmem:[#allocation5 + $0x120] sm:$0xff]
        %v1150 = vld [vmem:[#allocation5 + $0x128] sm:$0xf]
        %v1151 = vld [vmem:[#allocation5 + $0x12c] sm:$0xff]
        %v1152 = vld [vmem:[#allocation5 + $0x134] sm:$0xf]
        %v1153 = vld [vmem:[#allocation5 + $0x138] sm:$0xff]
        %v1154 = vld [vmem:[#allocation5 + $0x140] sm:$0xf]
        %v1155 = vld [vmem:[#allocation5 + $0x144] sm:$0xff]
        %v1156 = vld [vmem:[#allocation5 + $0x14c] sm:$0xf]
        %v1157 = vld [vmem:[#allocation5 + $0x150] sm:$0xff]
        %v1158 = vld [vmem:[#allocation5 + $0x158] sm:$0xf]
        %v1159 = vld [vmem:[#allocation5 + $0x15c] sm:$0xff]
        %v1160 = vld [vmem:[#allocation5 + $0x164] sm:$0xf]
        %v1161 = vld [vmem:[#allocation5 + $0x168] sm:$0xff]
        %v1162 = vld [vmem:[#allocation5 + $0x170] sm:$0xf]
        %v1163 = vld [vmem:[#allocation5 + $0x174] sm:$0xff]
        %v1164 = vld [vmem:[#allocation5 + $0x17c] sm:$0xf]
        %v1165 = vld [vmem:[#allocation5 + $0x180] sm:$0xff]
        %v1166 = vld [vmem:[#allocation5 + $0x188] sm:$0xf]
        %v1167 = vld [vmem:[#allocation5 + $0x18c] sm:$0xff]
        %v1168 = vld [vmem:[#allocation5 + $0x194] sm:$0xf]
        %v1169 = vld [vmem:[#allocation5 + $0x198] sm:$0xff]
        %v1170 = vld [vmem:[#allocation5 + $0x1a0] sm:$0xf]
        %v1171 = vld [vmem:[#allocation5 + $0x1a4] sm:$0xff]
        %v1172 = vld [vmem:[#allocation5 + $0x1ac] sm:$0xf]
        %v1173 = vld [vmem:[#allocation5 + $0x1b0] sm:$0xff]
        %v1174 = vld [vmem:[#allocation5 + $0x1b8] sm:$0xf]
        %v1175 = vld [vmem:[#allocation5 + $0x1bc] sm:$0xff]
        %v1176 = vld [vmem:[#allocation5 + $0x1c4] sm:$0xf]
        %v1177 = vld [vmem:[#allocation5 + $0x1c8] sm:$0xff]
        %v1178 = vld [vmem:[#allocation5 + $0x1d0] sm:$0xf]
        %v1179 = vld [vmem:[#allocation5 + $0x1d4] sm:$0xff]
        %v1180 = vld [vmem:[#allocation5 + $0x1dc] sm:$0xf]
        %v1181 = vld [vmem:[#allocation5 + $0x1e0] sm:$0xff]
        %v1182 = vld [vmem:[#allocation5 + $0x1e8] sm:$0xf]
        %v1183 = vld [vmem:[#allocation5 + $0x1ec] sm:$0xff]
        %v1184 = vld [vmem:[#allocation5 + $0x1f4] sm:$0xf]
        %v1185 = vld [vmem:[#allocation5 + $0x1f8] sm:$0xff]
        %v1186 = vld [vmem:[#allocation5 + $0x200] sm:$0xf]
        %v1187 = vld [vmem:[#allocation5 + $0x204] sm:$0xff]
        %v1188 = vld [vmem:[#allocation5 + $0x20c] sm:$0xf]
        %v1189 = vld [vmem:[#allocation5 + $0x210] sm:$0xff]
        %v1190 = vld [vmem:[#allocation5 + $0x218] sm:$0xf]
        %v1191 = vld [vmem:[#allocation5 + $0x21c] sm:$0xff]
        %v1192 = vld [vmem:[#allocation5 + $0x224] sm:$0xf]
        %v1193 = vld [vmem:[#allocation5 + $0x228] sm:$0xff]
        %v1194 = vld [vmem:[#allocation5 + $0x230] sm:$0xf]
        %v1195 = vld [vmem:[#allocation5 + $0x234] sm:$0xff]
        %v1196 = vld [vmem:[#allocation5 + $0x23c] sm:$0xf]
        %v1197 = vld [vmem:[#allocation5 + $0x240] sm:$0xff]
        %v1198 = vld [vmem:[#allocation5 + $0x248] sm:$0xf]
        %v1199 = vld [vmem:[#allocation5 + $0x24c] sm:$0xff]
        %v1200 = vld [vmem:[#allocation5 + $0x254] sm:$0xf]
        %v1201 = vld [vmem:[#allocation5 + $0x258] sm:$0xff]
        %v1202 = vld [vmem:[#allocation5 + $0x260] sm:$0xf]
        %v1203 = vld [vmem:[#allocation5 + $0x264] sm:$0xff]
        %v1204 = vld [vmem:[#allocation5 + $0x26c] sm:$0xf]
        %v1205 = vld [vmem:[#allocation5 + $0x270] sm:$0xff]
        %v1206 = vld [vmem:[#allocation5 + $0x278] sm:$0xf]
        %v1207 = vld [vmem:[#allocation5 + $0x27c] sm:$0xff]
        %v1208 = vld [vmem:[#allocation5 + $0x284] sm:$0xf]
        %v1209 = vld [vmem:[#allocation5 + $0x288] sm:$0xff]
        %v1210 = vld [vmem:[#allocation5 + $0x290] sm:$0xf]
        %v1211 = vld [vmem:[#allocation5 + $0x294] sm:$0xff]
        %v1212 = vld [vmem:[#allocation5 + $0x29c] sm:$0xf]
        %v1213 = vld [vmem:[#allocation5 + $0x2a0] sm:$0xff]
        %v1214 = vld [vmem:[#allocation5 + $0x2a8] sm:$0xf]
        %v1215 = vld [vmem:[#allocation5 + $0x2ac] sm:$0xff]
        %v1216 = vld [vmem:[#allocation5 + $0x2b4] sm:$0xf]
        %v1217 = vld [vmem:[#allocation5 + $0x2b8] sm:$0xff]
        %v1218 = vld [vmem:[#allocation5 + $0x2c0] sm:$0xf]
        %v1219 = vld [vmem:[#allocation5 + $0x2c4] sm:$0xff]
        %v1220 = vld [vmem:[#allocation5 + $0x2cc] sm:$0xf]
        %v1221 = vld [vmem:[#allocation5 + $0x2d0] sm:$0xff]
        %v1222 = vld [vmem:[#allocation5 + $0x2d8] sm:$0xf]
        %v1223 = vld [vmem:[#allocation5 + $0x2dc] sm:$0xff]
        %v1224 = vld [vmem:[#allocation5 + $0x2e4] sm:$0xf]
        %v1225 = vld [vmem:[#allocation5 + $0x2e8] sm:$0xff]
        %v1226 = vld [vmem:[#allocation5 + $0x2f0] sm:$0xf]
        %v1227 = vld [vmem:[#allocation5 + $0x2f4] sm:$0xff]
        %v1228 = vld [vmem:[#allocation5 + $0x2fc] sm:$0xf]
        %v1229 = vld [vmem:[#allocation5 + $0x300] sm:$0xff]
        %v1230 = vld [vmem:[#allocation5 + $0x308] sm:$0xf]
        %v1231 = vld [vmem:[#allocation5 + $0x30c] sm:$0xff]
        %v1232 = vld [vmem:[#allocation5 + $0x314] sm:$0xf]
        %v1233 = vld [vmem:[#allocation5 + $0x318] sm:$0xff]
        %v1234 = vld [vmem:[#allocation5 + $0x320] sm:$0xf]
        %v1235 = vld [vmem:[#allocation5 + $0x324] sm:$0xff]
        %v1236 = vld [vmem:[#allocation5 + $0x32c] sm:$0xf]
        %v1237 = vld [vmem:[#allocation5 + $0x330] sm:$0xff]
        %v1238 = vld [vmem:[#allocation5 + $0x338] sm:$0xf]
        %v1239 = vld [vmem:[#allocation5 + $0x33c] sm:$0xff]
        %v1240 = vld [vmem:[#allocation5 + $0x344] sm:$0xf]
        %v1241 = vld [vmem:[#allocation5 + $0x348] sm:$0xff]
        %v1242 = vld [vmem:[#allocation5 + $0x350] sm:$0xf]
        %v1243 = vld [vmem:[#allocation5 + $0x354] sm:$0xff]
        %v1244 = vld [vmem:[#allocation5 + $0x35c] sm:$0xf]
        %v1245 = vld [vmem:[#allocation5 + $0x360] sm:$0xff]
        %v1246 = vld [vmem:[#allocation5 + $0x368] sm:$0xf]
        %v1247 = vld [vmem:[#allocation5 + $0x36c] sm:$0xff]
        %v1248 = vld [vmem:[#allocation5 + $0x374] sm:$0xf]
        %v1249 = vld [vmem:[#allocation5 + $0x378] sm:$0xff]
        %v1250 = vld [vmem:[#allocation5 + $0x380] sm:$0xf]
        %v1251 = vld [vmem:[#allocation5 + $0x384] sm:$0xff]
        %v1252 = vld [vmem:[#allocation5 + $0x38c] sm:$0xf]
        %v1253 = vld [vmem:[#allocation5 + $0x390] sm:$0xff]
        %v1254 = vld [vmem:[#allocation5 + $0x398] sm:$0xf]
        %v1255 = vld [vmem:[#allocation5 + $0x39c] sm:$0xff]
        %v1256 = vld [vmem:[#allocation5 + $0x3a4] sm:$0xf]
        %v1257 = vld [vmem:[#allocation5 + $0x3a8] sm:$0xff]
        %v1258 = vld [vmem:[#allocation5 + $0x3b0] sm:$0xf]
        %v1259 = vld [vmem:[#allocation5 + $0x3b4] sm:$0xff]
        %v1260 = vld [vmem:[#allocation5 + $0x3bc] sm:$0xf]
        %v1261 = vld [vmem:[#allocation5 + $0x3c0] sm:$0xff]
        %v1262 = vld [vmem:[#allocation5 + $0x3c8] sm:$0xf]
        %v1263 = vld [vmem:[#allocation5 + $0x3cc] sm:$0xff]
        %v1264 = vld [vmem:[#allocation5 + $0x3d4] sm:$0xf]
        %v1265 = vld [vmem:[#allocation5 + $0x3d8] sm:$0xff]
        %v1266 = vld [vmem:[#allocation5 + $0x3e0] sm:$0xf]
        %v1267 = vld [vmem:[#allocation5 + $0x3e4] sm:$0xff]
        %v1268 = vld [vmem:[#allocation5 + $0x3ec] sm:$0xf]
        %v1269 = vld [vmem:[#allocation5 + $0x3f0] sm:$0xff]
        %v1270 = vld [vmem:[#allocation5 + $0x3f8] sm:$0xf]
        %v1271 = vld [vmem:[#allocation5 + $0x3fc] sm:$0xff]
        %v1272 = vld [vmem:[#allocation5 + $0x404] sm:$0xf]
        %v1273 = vld [vmem:[#allocation5 + $0x408] sm:$0xff]
        %v1274 = vld [vmem:[#allocation5 + $0x410] sm:$0xf]
        %v1275 = vld [vmem:[#allocation5 + $0x414] sm:$0xff]
        %v1276 = vld [vmem:[#allocation5 + $0x41c] sm:$0xf]
        %v1277 = vld [vmem:[#allocation5 + $0x420] sm:$0xff]
        %v1278 = vld [vmem:[#allocation5 + $0x428] sm:$0xf]
        %v1279 = vld [vmem:[#allocation5 + $0x42c] sm:$0xff]
        %v1280 = vld [vmem:[#allocation5 + $0x434] sm:$0xf]
        %v1281 = vld [vmem:[#allocation5 + $0x438] sm:$0xff]
        %v1282 = vld [vmem:[#allocation5 + $0x440] sm:$0xf]
        %v1283 = vld [vmem:[#allocation5 + $0x444] sm:$0xff]
        %v1284 = vld [vmem:[#allocation5 + $0x44c] sm:$0xf]
        %v1285 = vld [vmem:[#allocation5 + $0x450] sm:$0xff]
        %v1286 = vld [vmem:[#allocation5 + $0x458] sm:$0xf]
        %v1287 = vld [vmem:[#allocation5 + $0x45c] sm:$0xff]
        %v1288 = vld [vmem:[#allocation5 + $0x464] sm:$0xf]
        %v1289 = vld [vmem:[#allocation5 + $0x468] sm:$0xff]
        %v1290 = vld [vmem:[#allocation5 + $0x470] sm:$0xf]
        %v1291 = vld [vmem:[#allocation5 + $0x474] sm:$0xff]
        %v1292 = vld [vmem:[#allocation5 + $0x47c] sm:$0xf]
        %v1293 = vld [vmem:[#allocation5 + $0x480] sm:$0xff]
        %v1294 = vld [vmem:[#allocation5 + $0x488] sm:$0xf]
        %v1295 = vld [vmem:[#allocation5 + $0x48c] sm:$0xff]
        %v1296 = vld [vmem:[#allocation5 + $0x494] sm:$0xf]
        %v1297 = vld [vmem:[#allocation5 + $0x498] sm:$0xff]
        %v1298 = vld [vmem:[#allocation5 + $0x4a0] sm:$0xf]
        %v1299 = vld [vmem:[#allocation5 + $0x4a4] sm:$0xff]
        %v1300 = vld [vmem:[#allocation5 + $0x4ac] sm:$0xf]
        %v1301 = vld [vmem:[#allocation5 + $0x4b0] sm:$0xff]
        %v1302 = vld [vmem:[#allocation5 + $0x4b8] sm:$0xf]
        %v1303 = vld [vmem:[#allocation5 + $0x4bc] sm:$0xff]
        %v1304 = vld [vmem:[#allocation5 + $0x4c4] sm:$0xf]
        %v1305 = vld [vmem:[#allocation5 + $0x4c8] sm:$0xff]
        %v1306 = vld [vmem:[#allocation5 + $0x4d0] sm:$0xf]
        %v1307 = vld [vmem:[#allocation5 + $0x4d4] sm:$0xff]
        %v1308 = vld [vmem:[#allocation5 + $0x4dc] sm:$0xf]
        %v1309 = vld [vmem:[#allocation5 + $0x4e0] sm:$0xff]
        %v1310 = vld [vmem:[#allocation5 + $0x4e8] sm:$0xf]
        %v1311 = vld [vmem:[#allocation5 + $0x4ec] sm:$0xff]
        %v1312 = vld [vmem:[#allocation5 + $0x4f4] sm:$0xf]
        %v1313 = vld [vmem:[#allocation5 + $0x4f8] sm:$0xff]
        %v1314 = vld [vmem:[#allocation5 + $0x500] sm:$0xf]
        %v1315 = vld [vmem:[#allocation5 + $0x504] sm:$0xff]
        %v1316 = vld [vmem:[#allocation5 + $0x50c] sm:$0xf]
        %v1317 = vld [vmem:[#allocation5 + $0x510] sm:$0xff]
        %v1318 = vld [vmem:[#allocation5 + $0x518] sm:$0xf]
        %v1319 = vld [vmem:[#allocation5 + $0x51c] sm:$0xff]
        %v1320 = vld [vmem:[#allocation5 + $0x524] sm:$0xf]
        %v1321 = vld [vmem:[#allocation5 + $0x528] sm:$0xff]
        %v1322 = vld [vmem:[#allocation5 + $0x530] sm:$0xf]
        %v1323 = vld [vmem:[#allocation5 + $0x534] sm:$0xff]
        %v1324 = vld [vmem:[#allocation5 + $0x53c] sm:$0xf]
        %v1325 = vld [vmem:[#allocation5 + $0x540] sm:$0xff]
        %v1326 = vld [vmem:[#allocation5 + $0x548] sm:$0xf]
        %v1327 = vld [vmem:[#allocation5 + $0x54c] sm:$0xff]
        %v1328 = vld [vmem:[#allocation5 + $0x554] sm:$0xf]
        %v1329 = vld [vmem:[#allocation5 + $0x558] sm:$0xff]
        %v1330 = vld [vmem:[#allocation5 + $0x560] sm:$0xf]
        %v1331 = vld [vmem:[#allocation5 + $0x564] sm:$0xff]
        %v1332 = vld [vmem:[#allocation5 + $0x56c] sm:$0xf]
        %v1333 = vld [vmem:[#allocation5 + $0x570] sm:$0xff]
        %v1334 = vld [vmem:[#allocation5 + $0x578] sm:$0xf]
        %v1335 = vld [vmem:[#allocation5 + $0x57c] sm:$0xff]
        %v1336 = vld [vmem:[#allocation5 + $0x584] sm:$0xf]
        %v1337 = vld [vmem:[#allocation5 + $0x588] sm:$0xff]
        %v1338 = vld [vmem:[#allocation5 + $0x590] sm:$0xf]
        %v1339 = vld [vmem:[#allocation5 + $0x594] sm:$0xff]
        %v1340 = vld [vmem:[#allocation5 + $0x59c] sm:$0xf]
        %v1341 = vld [vmem:[#allocation5 + $0x5a0] sm:$0xff]
        %v1342 = vld [vmem:[#allocation5 + $0x5a8] sm:$0xf]
        %v1343 = vld [vmem:[#allocation5 + $0x5ac] sm:$0xff]
        %v1344 = vld [vmem:[#allocation5 + $0x5b4] sm:$0xf]
        %v1345 = vld [vmem:[#allocation5 + $0x5b8] sm:$0xff]
        %v1346 = vld [vmem:[#allocation5 + $0x5c0] sm:$0xf]
        %v1347 = vld [vmem:[#allocation5 + $0x5c4] sm:$0xff]
        %v1348 = vld [vmem:[#allocation5 + $0x5cc] sm:$0xf]
        %v1349 = vld [vmem:[#allocation5 + $0x5d0] sm:$0xff]
        %v1350 = vld [vmem:[#allocation5 + $0x5d8] sm:$0xf]
        %v1351 = vld [vmem:[#allocation5 + $0x5dc] sm:$0xff]
        %v1352 = vld [vmem:[#allocation5 + $0x5e4] sm:$0xf]
        %v1353 = vld [vmem:[#allocation5 + $0x5e8] sm:$0xff]
        %v1354 = vld [vmem:[#allocation5 + $0x5f0] sm:$0xf]
        %v1355 = vld [vmem:[#allocation5 + $0x5f4] sm:$0xff]
        %v1356 = vld [vmem:[#allocation5 + $0x5fc] sm:$0xf]
        %v1357 = vld [vmem:[#allocation5 + $0x600] sm:$0xff]
        %v1358 = vld [vmem:[#allocation5 + $0x608] sm:$0xf]
        %v1359 = vld [vmem:[#allocation5 + $0x60c] sm:$0xff]
        %v1360 = vld [vmem:[#allocation5 + $0x614] sm:$0xf]
        %v1361 = vld [vmem:[#allocation5 + $0x618] sm:$0xff]
        %v1362 = vld [vmem:[#allocation5 + $0x620] sm:$0xf]
        %v1363 = vld [vmem:[#allocation5 + $0x624] sm:$0xff]
        %v1364 = vld [vmem:[#allocation5 + $0x62c] sm:$0xf]
        %v1365 = vld [vmem:[#allocation5 + $0x630] sm:$0xff]
        %v1366 = vld [vmem:[#allocation5 + $0x638] sm:$0xf]
        %v1367 = vld [vmem:[#allocation5 + $0x63c] sm:$0xff]
        %v1368 = vld [vmem:[#allocation5 + $0x644] sm:$0xf]
        %v1369 = vld [vmem:[#allocation5 + $0x648] sm:$0xff]
        %v1370 = vld [vmem:[#allocation5 + $0x650] sm:$0xf]
        %v1371 = vld [vmem:[#allocation5 + $0x654] sm:$0xff]
        %v1372 = vld [vmem:[#allocation5 + $0x65c] sm:$0xf]
        %v1373 = vld [vmem:[#allocation5 + $0x660] sm:$0xff]
        %v1374 = vld [vmem:[#allocation5 + $0x668] sm:$0xf]
        %v1375 = vld [vmem:[#allocation5 + $0x66c] sm:$0xff]
        %v1376 = vld [vmem:[#allocation5 + $0x674] sm:$0xf]
        %v1377 = vld [vmem:[#allocation5 + $0x678] sm:$0xff]
        %v1378 = vld [vmem:[#allocation5 + $0x680] sm:$0xf]
        %v1379 = vld [vmem:[#allocation5 + $0x684] sm:$0xff]
        %v1380 = vld [vmem:[#allocation5 + $0x68c] sm:$0xf]
        %v1381 = vld [vmem:[#allocation5 + $0x690] sm:$0xff]
        %v1382 = vld [vmem:[#allocation5 + $0x698] sm:$0xf]
        %v1383 = vld [vmem:[#allocation5 + $0x69c] sm:$0xff]
        %v1384 = vld [vmem:[#allocation5 + $0x6a4] sm:$0xf]
        %v1385 = vld [vmem:[#allocation5 + $0x6a8] sm:$0xff]
        %v1386 = vld [vmem:[#allocation5 + $0x6b0] sm:$0xf]
        %v1387 = vld [vmem:[#allocation5 + $0x6b4] sm:$0xff]
        %v1388 = vld [vmem:[#allocation5 + $0x6bc] sm:$0xf]
        %v1389 = vld [vmem:[#allocation5 + $0x6c0] sm:$0xff]
        %v1390 = vld [vmem:[#allocation5 + $0x6c8] sm:$0xf]
        %v1391 = vld [vmem:[#allocation5 + $0x6cc] sm:$0xff]
        %v1392 = vld [vmem:[#allocation5 + $0x6d4] sm:$0xf]
        %v1393 = vld [vmem:[#allocation5 + $0x6d8] sm:$0xff]
        %v1394 = vld [vmem:[#allocation5 + $0x6e0] sm:$0xf]
        %v1395 = vld [vmem:[#allocation5 + $0x6e4] sm:$0xff]
        %v1396 = vld [vmem:[#allocation5 + $0x6ec] sm:$0xf]
        %v1397 = vld [vmem:[#allocation5 + $0x6f0] sm:$0xff]
        %v1398 = vld [vmem:[#allocation5 + $0x6f8] sm:$0xf]
        %v1399 = vld [vmem:[#allocation5 + $0x6fc] sm:$0xff]
        %v1400 = vld [vmem:[#allocation5 + $0x704] sm:$0xf]
        %v1401 = vld [vmem:[#allocation5 + $0x708] sm:$0xff]
        %v1402 = vld [vmem:[#allocation5 + $0x710] sm:$0xf]
        %v1403 = vld [vmem:[#allocation5 + $0x714] sm:$0xff]
        %v1404 = vld [vmem:[#allocation5 + $0x71c] sm:$0xf]
        %v1405 = vld [vmem:[#allocation5 + $0x720] sm:$0xff]
        %v1406 = vld [vmem:[#allocation5 + $0x728] sm:$0xf]
        %v1407 = vld [vmem:[#allocation5 + $0x72c] sm:$0xff]
        %v1408 = vld [vmem:[#allocation5 + $0x734] sm:$0xf]
        %v1409 = vld [vmem:[#allocation5 + $0x738] sm:$0xff]
        %v1410 = vld [vmem:[#allocation5 + $0x740] sm:$0xf]
        %v1411 = vld [vmem:[#allocation5 + $0x744] sm:$0xff]
        %v1412 = vld [vmem:[#allocation5 + $0x74c] sm:$0xf]
        %v1413 = vld [vmem:[#allocation5 + $0x750] sm:$0xff]
        %v1414 = vld [vmem:[#allocation5 + $0x758] sm:$0xf]
        %v1415 = vld [vmem:[#allocation5 + $0x75c] sm:$0xff]
        %v1416 = vld [vmem:[#allocation5 + $0x764] sm:$0xf]
        %v1417 = vld [vmem:[#allocation5 + $0x768] sm:$0xff]
        %v1418 = vld [vmem:[#allocation5 + $0x770] sm:$0xf]
        %v1419 = vld [vmem:[#allocation5 + $0x774] sm:$0xff]
        %v1420 = vld [vmem:[#allocation5 + $0x77c] sm:$0xf]
        %v1421 = vld [vmem:[%s2] sm:$0x7]
        %v1423 = vlaneseq
        %v1424 = vshrl.u32 %v1423, 7
        %v1425 = vsub.s32 0, %v1424
        %v1426 = vrot.slane %v1421, %v1425
        %v1427 = vlaneseq
        %v1428 = vshrl.u32 %v1427, 7
        %v1429 = vsub.s32 1, %v1428
        %v1430 = vrot.slane %v1421, %v1429
        %v1431 = vlaneseq
        %v1432 = vshrl.u32 %v1431, 7
        %v1433 = vsub.s32 2, %v1432
        %v1434 = vrot.slane %v1421, %v1433
        %v1478 = vunpack.c.l.b16 %v1061
        %v1479 = vunpack.c.l.b16 %v1062
        %v1480 = vunpack.c.l.b16 %v1063
        %v1481 = vunpack.c.l.b16 %v1064
        %v1482 = vunpack.c.l.b16 %v1065
        %v1483 = vunpack.c.l.b16 %v1066
        %v1484 = vunpack.c.l.b16 %v1067
        %v1485 = vunpack.c.l.b16 %v1068
        %v1486 = vunpack.c.l.b16 %v1069
        %v1487 = vunpack.c.l.b16 %v1070
        %v1488 = vunpack.c.l.b16 %v1071
        %v1489 = vunpack.c.l.b16 %v1072
        %v1490 = vunpack.c.l.b16 %v1073
        %v1491 = vunpack.c.l.b16 %v1074
        %v1492 = vunpack.c.l.b16 %v1075
        %v1493 = vunpack.c.l.b16 %v1076
        %v1494 = vunpack.c.l.b16 %v1077
        %v1495 = vunpack.c.l.b16 %v1078
        %v1496 = vunpack.c.l.b16 %v1079
        %v1497 = vunpack.c.l.b16 %v1080
        %v1498 = vunpack.c.l.b16 %v1081
        %v1499 = vunpack.c.l.b16 %v1082
        %v1500 = vunpack.c.l.b16 %v1083
        %v1501 = vunpack.c.l.b16 %v1084
        %v1502 = vunpack.c.l.b16 %v1085
        %v1503 = vunpack.c.l.b16 %v1086
        %v1504 = vunpack.c.l.b16 %v1087
        %v1505 = vunpack.c.l.b16 %v1088
        %v1506 = vunpack.c.l.b16 %v1089
        %v1507 = vunpack.c.l.b16 %v1090
        %v1508 = vunpack.c.l.b16 %v1091
        %v1509 = vunpack.c.l.b16 %v1092
        %v1510 = vunpack.c.l.b16 %v1093
        %v1511 = vunpack.c.l.b16 %v1094
        %v1512 = vunpack.c.l.b16 %v1095
        %v1513 = vunpack.c.l.b16 %v1096
        %v1514 = vunpack.c.l.b16 %v1097
        %v1515 = vunpack.c.l.b16 %v1098
        %v1516 = vunpack.c.l.b16 %v1099
        %v1517 = vunpack.c.l.b16 %v1100
        %vm1518 = vcmask 1041409
        %v1519 = vsel %vm1518, %v1488, %v1478
        %vm1520 = vcmask 1042434
        %v1521 = vsel %vm1520, %v1498, %v1519
        %vm1522 = vcmask 1043459
        %v1523 = vsel %vm1522, %v1508, %v1521
        %v1524 = vsel %vm1518, %v1489, %v1479
        %v1525 = vsel %vm1520, %v1499, %v1524
        %v1526 = vsel %vm1522, %v1509, %v1525
        %v1527 = vsel %vm1518, %v1490, %v1480
        %v1528 = vsel %vm1520, %v1500, %v1527
        %v1529 = vsel %vm1522, %v1510, %v1528
        %v1530 = vsel %vm1518, %v1491, %v1481
        %v1531 = vsel %vm1520, %v1501, %v1530
        %v1532 = vsel %vm1522, %v1511, %v1531
        %v1533 = vsel %vm1518, %v1492, %v1482
        %v1534 = vsel %vm1520, %v1502, %v1533
        %v1535 = vsel %vm1522, %v1512, %v1534
        %v1536 = vsel %vm1518, %v1493, %v1483
        %v1537 = vsel %vm1520, %v1503, %v1536
        %v1538 = vsel %vm1522, %v1513, %v1537
        %v1539 = vsel %vm1518, %v1494, %v1484
        %v1540 = vsel %vm1520, %v1504, %v1539
        %v1541 = vsel %vm1522, %v1514, %v1540
        %v1542 = vsel %vm1518, %v1495, %v1485
        %v1543 = vsel %vm1520, %v1505, %v1542
        %v1544 = vsel %vm1522, %v1515, %v1543
        %v1545 = vsel %vm1518, %v1496, %v1486
        %v1546 = vsel %vm1520, %v1506, %v1545
        %v1547 = vsel %vm1522, %v1516, %v1546
        %v1548 = vsel %vm1518, %v1497, %v1487
        %v1549 = vsel %vm1520, %v1507, %v1548
        %v1550 = vsel %vm1522, %v1517, %v1549
        %v1551 = vpack.c.b16 %v1523, %v1523
        %v1552 = vpack.c.b16 %v1526, %v1526
        %v1553 = vpack.c.b16 %v1529, %v1529
        %v1554 = vpack.c.b16 %v1532, %v1532
        %v1555 = vpack.c.b16 %v1535, %v1535
        %v1556 = vpack.c.b16 %v1538, %v1538
        %v1557 = vpack.c.b16 %v1541, %v1541
        %v1558 = vpack.c.b16 %v1544, %v1544
        %v1559 = vpack.c.b16 %v1547, %v1547
        %v1560 = vpack.c.b16 %v1550, %v1550
        %v1891 = vunpack.c.l.b16 %v1101
        %v1892 = vunpack.c.h.b16 %v1101
        %v1893 = vunpack.c.l.b16 %v1102
        %v1894 = vunpack.c.l.b16 %v1103
        %v1895 = vunpack.c.h.b16 %v1103
        %v1896 = vunpack.c.l.b16 %v1104
        %v1897 = vunpack.c.l.b16 %v1105
        %v1898 = vunpack.c.h.b16 %v1105
        %v1899 = vunpack.c.l.b16 %v1106
        %v1900 = vunpack.c.l.b16 %v1107
        %v1901 = vunpack.c.h.b16 %v1107
        %v1902 = vunpack.c.l.b16 %v1108
        %v1903 = vunpack.c.l.b16 %v1109
        %v1904 = vunpack.c.h.b16 %v1109
        %v1905 = vunpack.c.l.b16 %v1110
        %v1906 = vunpack.c.l.b16 %v1111
        %v1907 = vunpack.c.h.b16 %v1111
        %v1908 = vunpack.c.l.b16 %v1112
        %v1909 = vunpack.c.l.b16 %v1113
        %v1910 = vunpack.c.h.b16 %v1113
        %v1911 = vunpack.c.l.b16 %v1114
        %v1912 = vunpack.c.l.b16 %v1115
        %v1913 = vunpack.c.h.b16 %v1115
        %v1914 = vunpack.c.l.b16 %v1116
        %v1915 = vunpack.c.l.b16 %v1117
        %v1916 = vunpack.c.h.b16 %v1117
        %v1917 = vunpack.c.l.b16 %v1118
        %v1918 = vunpack.c.l.b16 %v1119
        %v1919 = vunpack.c.h.b16 %v1119
        %v1920 = vunpack.c.l.b16 %v1120
        %v1921 = vunpack.c.l.b16 %v1121
        %v1922 = vunpack.c.h.b16 %v1121
        %v1923 = vunpack.c.l.b16 %v1122
        %v1924 = vunpack.c.l.b16 %v1123
        %v1925 = vunpack.c.h.b16 %v1123
        %v1926 = vunpack.c.l.b16 %v1124
        %v1927 = vunpack.c.l.b16 %v1125
        %v1928 = vunpack.c.h.b16 %v1125
        %v1929 = vunpack.c.l.b16 %v1126
        %v1930 = vunpack.c.l.b16 %v1127
        %v1931 = vunpack.c.h.b16 %v1127
        %v1932 = vunpack.c.l.b16 %v1128
        %v1933 = vunpack.c.l.b16 %v1129
        %v1934 = vunpack.c.h.b16 %v1129
        %v1935 = vunpack.c.l.b16 %v1130
        %v1936 = vunpack.c.l.b16 %v1131
        %v1937 = vunpack.c.h.b16 %v1131
        %v1938 = vunpack.c.l.b16 %v1132
        %v1939 = vunpack.c.l.b16 %v1133
        %v1940 = vunpack.c.h.b16 %v1133
        %v1941 = vunpack.c.l.b16 %v1134
        %v1942 = vunpack.c.l.b16 %v1135
        %v1943 = vunpack.c.h.b16 %v1135
        %v1944 = vunpack.c.l.b16 %v1136
        %v1945 = vunpack.c.l.b16 %v1137
        %v1946 = vunpack.c.h.b16 %v1137
        %v1947 = vunpack.c.l.b16 %v1138
        %v1948 = vunpack.c.l.b16 %v1139
        %v1949 = vunpack.c.h.b16 %v1139
        %v1950 = vunpack.c.l.b16 %v1140
        %v1951 = vunpack.c.l.b16 %v1141
        %v1952 = vunpack.c.h.b16 %v1141
        %v1953 = vunpack.c.l.b16 %v1142
        %v1954 = vunpack.c.l.b16 %v1143
        %v1955 = vunpack.c.h.b16 %v1143
        %v1956 = vunpack.c.l.b16 %v1144
        %v1957 = vunpack.c.l.b16 %v1145
        %v1958 = vunpack.c.h.b16 %v1145
        %v1959 = vunpack.c.l.b16 %v1146
        %v1960 = vunpack.c.l.b16 %v1147
        %v1961 = vunpack.c.h.b16 %v1147
        %v1962 = vunpack.c.l.b16 %v1148
        %v1963 = vunpack.c.l.b16 %v1149
        %v1964 = vunpack.c.h.b16 %v1149
        %v1965 = vunpack.c.l.b16 %v1150
        %v1966 = vunpack.c.l.b16 %v1151
        %v1967 = vunpack.c.h.b16 %v1151
        %v1968 = vunpack.c.l.b16 %v1152
        %v1969 = vunpack.c.l.b16 %v1153
        %v1970 = vunpack.c.h.b16 %v1153
        %v1971 = vunpack.c.l.b16 %v1154
        %v1972 = vunpack.c.l.b16 %v1155
        %v1973 = vunpack.c.h.b16 %v1155
        %v1974 = vunpack.c.l.b16 %v1156
        %v1975 = vunpack.c.l.b16 %v1157
        %v1976 = vunpack.c.h.b16 %v1157
        %v1977 = vunpack.c.l.b16 %v1158
        %v1978 = vunpack.c.l.b16 %v1159
        %v1979 = vunpack.c.h.b16 %v1159
        %v1980 = vunpack.c.l.b16 %v1160
        %v1981 = vunpack.c.l.b16 %v1161
        %v1982 = vunpack.c.h.b16 %v1161
        %v1983 = vunpack.c.l.b16 %v1162
        %v1984 = vunpack.c.l.b16 %v1163
        %v1985 = vunpack.c.h.b16 %v1163
        %v1986 = vunpack.c.l.b16 %v1164
        %v1987 = vunpack.c.l.b16 %v1165
        %v1988 = vunpack.c.h.b16 %v1165
        %v1989 = vunpack.c.l.b16 %v1166
        %v1990 = vunpack.c.l.b16 %v1167
        %v1991 = vunpack.c.h.b16 %v1167
        %v1992 = vunpack.c.l.b16 %v1168
        %v1993 = vunpack.c.l.b16 %v1169
        %v1994 = vunpack.c.h.b16 %v1169
        %v1995 = vunpack.c.l.b16 %v1170
        %v1996 = vunpack.c.l.b16 %v1171
        %v1997 = vunpack.c.h.b16 %v1171
        %v1998 = vunpack.c.l.b16 %v1172
        %v1999 = vunpack.c.l.b16 %v1173
        %v2000 = vunpack.c.h.b16 %v1173
        %v2001 = vunpack.c.l.b16 %v1174
        %v2002 = vunpack.c.l.b16 %v1175
        %v2003 = vunpack.c.h.b16 %v1175
        %v2004 = vunpack.c.l.b16 %v1176
        %v2005 = vunpack.c.l.b16 %v1177
        %v2006 = vunpack.c.h.b16 %v1177
        %v2007 = vunpack.c.l.b16 %v1178
        %v2008 = vunpack.c.l.b16 %v1179
        %v2009 = vunpack.c.h.b16 %v1179
        %v2010 = vunpack.c.l.b16 %v1180
        %v2011 = vunpack.c.l.b16 %v1181
        %v2012 = vunpack.c.h.b16 %v1181
        %v2013 = vunpack.c.l.b16 %v1182
        %v2014 = vunpack.c.l.b16 %v1183
        %v2015 = vunpack.c.h.b16 %v1183
        %v2016 = vunpack.c.l.b16 %v1184
        %v2017 = vunpack.c.l.b16 %v1185
        %v2018 = vunpack.c.h.b16 %v1185
        %v2019 = vunpack.c.l.b16 %v1186
        %v2020 = vunpack.c.l.b16 %v1187
        %v2021 = vunpack.c.h.b16 %v1187
        %v2022 = vunpack.c.l.b16 %v1188
        %v2023 = vunpack.c.l.b16 %v1189
        %v2024 = vunpack.c.h.b16 %v1189
        %v2025 = vunpack.c.l.b16 %v1190
        %v2026 = vunpack.c.l.b16 %v1191
        %v2027 = vunpack.c.h.b16 %v1191
        %v2028 = vunpack.c.l.b16 %v1192
        %v2029 = vunpack.c.l.b16 %v1193
        %v2030 = vunpack.c.h.b16 %v1193
        %v2031 = vunpack.c.l.b16 %v1194
        %v2032 = vunpack.c.l.b16 %v1195
        %v2033 = vunpack.c.h.b16 %v1195
        %v2034 = vunpack.c.l.b16 %v1196
        %v2035 = vunpack.c.l.b16 %v1197
        %v2036 = vunpack.c.h.b16 %v1197
        %v2037 = vunpack.c.l.b16 %v1198
        %v2038 = vunpack.c.l.b16 %v1199
        %v2039 = vunpack.c.h.b16 %v1199
        %v2040 = vunpack.c.l.b16 %v1200
        %v2041 = vunpack.c.l.b16 %v1201
        %v2042 = vunpack.c.h.b16 %v1201
        %v2043 = vunpack.c.l.b16 %v1202
        %v2044 = vunpack.c.l.b16 %v1203
        %v2045 = vunpack.c.h.b16 %v1203
        %v2046 = vunpack.c.l.b16 %v1204
        %v2047 = vunpack.c.l.b16 %v1205
        %v2048 = vunpack.c.h.b16 %v1205
        %v2049 = vunpack.c.l.b16 %v1206
        %v2050 = vunpack.c.l.b16 %v1207
        %v2051 = vunpack.c.h.b16 %v1207
        %v2052 = vunpack.c.l.b16 %v1208
        %v2053 = vunpack.c.l.b16 %v1209
        %v2054 = vunpack.c.h.b16 %v1209
        %v2055 = vunpack.c.l.b16 %v1210
        %v2056 = vunpack.c.l.b16 %v1211
        %v2057 = vunpack.c.h.b16 %v1211
        %v2058 = vunpack.c.l.b16 %v1212
        %v2059 = vunpack.c.l.b16 %v1213
        %v2060 = vunpack.c.h.b16 %v1213
        %v2061 = vunpack.c.l.b16 %v1214
        %v2062 = vunpack.c.l.b16 %v1215
        %v2063 = vunpack.c.h.b16 %v1215
        %v2064 = vunpack.c.l.b16 %v1216
        %v2065 = vunpack.c.l.b16 %v1217
        %v2066 = vunpack.c.h.b16 %v1217
        %v2067 = vunpack.c.l.b16 %v1218
        %v2068 = vunpack.c.l.b16 %v1219
        %v2069 = vunpack.c.h.b16 %v1219
        %v2070 = vunpack.c.l.b16 %v1220
        %v2071 = vunpack.c.l.b16 %v1221
        %v2072 = vunpack.c.h.b16 %v1221
        %v2073 = vunpack.c.l.b16 %v1222
        %v2074 = vunpack.c.l.b16 %v1223
        %v2075 = vunpack.c.h.b16 %v1223
        %v2076 = vunpack.c.l.b16 %v1224
        %v2077 = vunpack.c.l.b16 %v1225
        %v2078 = vunpack.c.h.b16 %v1225
        %v2079 = vunpack.c.l.b16 %v1226
        %v2080 = vunpack.c.l.b16 %v1227
        %v2081 = vunpack.c.h.b16 %v1227
        %v2082 = vunpack.c.l.b16 %v1228
        %v2083 = vunpack.c.l.b16 %v1229
        %v2084 = vunpack.c.h.b16 %v1229
        %v2085 = vunpack.c.l.b16 %v1230
        %v2086 = vunpack.c.l.b16 %v1231
        %v2087 = vunpack.c.h.b16 %v1231
        %v2088 = vunpack.c.l.b16 %v1232
        %v2089 = vunpack.c.l.b16 %v1233
        %v2090 = vunpack.c.h.b16 %v1233
        %v2091 = vunpack.c.l.b16 %v1234
        %v2092 = vunpack.c.l.b16 %v1235
        %v2093 = vunpack.c.h.b16 %v1235
        %v2094 = vunpack.c.l.b16 %v1236
        %v2095 = vunpack.c.l.b16 %v1237
        %v2096 = vunpack.c.h.b16 %v1237
        %v2097 = vunpack.c.l.b16 %v1238
        %v2098 = vunpack.c.l.b16 %v1239
        %v2099 = vunpack.c.h.b16 %v1239
        %v2100 = vunpack.c.l.b16 %v1240
        %v2101 = vunpack.c.l.b16 %v1241
        %v2102 = vunpack.c.h.b16 %v1241
        %v2103 = vunpack.c.l.b16 %v1242
        %v2104 = vunpack.c.l.b16 %v1243
        %v2105 = vunpack.c.h.b16 %v1243
        %v2106 = vunpack.c.l.b16 %v1244
        %v2107 = vunpack.c.l.b16 %v1245
        %v2108 = vunpack.c.h.b16 %v1245
        %v2109 = vunpack.c.l.b16 %v1246
        %v2110 = vunpack.c.l.b16 %v1247
        %v2111 = vunpack.c.h.b16 %v1247
        %v2112 = vunpack.c.l.b16 %v1248
        %v2113 = vunpack.c.l.b16 %v1249
        %v2114 = vunpack.c.h.b16 %v1249
        %v2115 = vunpack.c.l.b16 %v1250
        %v2116 = vunpack.c.l.b16 %v1251
        %v2117 = vunpack.c.h.b16 %v1251
        %v2118 = vunpack.c.l.b16 %v1252
        %v2119 = vunpack.c.l.b16 %v1253
        %v2120 = vunpack.c.h.b16 %v1253
        %v2121 = vunpack.c.l.b16 %v1254
        %v2122 = vunpack.c.l.b16 %v1255
        %v2123 = vunpack.c.h.b16 %v1255
        %v2124 = vunpack.c.l.b16 %v1256
        %v2125 = vunpack.c.l.b16 %v1257
        %v2126 = vunpack.c.h.b16 %v1257
        %v2127 = vunpack.c.l.b16 %v1258
        %v2128 = vunpack.c.l.b16 %v1259
        %v2129 = vunpack.c.h.b16 %v1259
        %v2130 = vunpack.c.l.b16 %v1260
        %v2131 = vunpack.c.l.b16 %v1261
        %v2132 = vunpack.c.h.b16 %v1261
        %v2133 = vunpack.c.l.b16 %v1262
        %v2134 = vunpack.c.l.b16 %v1263
        %v2135 = vunpack.c.h.b16 %v1263
        %v2136 = vunpack.c.l.b16 %v1264
        %v2137 = vunpack.c.l.b16 %v1265
        %v2138 = vunpack.c.h.b16 %v1265
        %v2139 = vunpack.c.l.b16 %v1266
        %v2140 = vunpack.c.l.b16 %v1267
        %v2141 = vunpack.c.h.b16 %v1267
        %v2142 = vunpack.c.l.b16 %v1268
        %v2143 = vunpack.c.l.b16 %v1269
        %v2144 = vunpack.c.h.b16 %v1269
        %v2145 = vunpack.c.l.b16 %v1270
        %v2146 = vunpack.c.l.b16 %v1271
        %v2147 = vunpack.c.h.b16 %v1271
        %v2148 = vunpack.c.l.b16 %v1272
        %v2149 = vunpack.c.l.b16 %v1273
        %v2150 = vunpack.c.h.b16 %v1273
        %v2151 = vunpack.c.l.b16 %v1274
        %v2152 = vunpack.c.l.b16 %v1275
        %v2153 = vunpack.c.h.b16 %v1275
        %v2154 = vunpack.c.l.b16 %v1276
        %v2155 = vunpack.c.l.b16 %v1277
        %v2156 = vunpack.c.h.b16 %v1277
        %v2157 = vunpack.c.l.b16 %v1278
        %v2158 = vunpack.c.l.b16 %v1279
        %v2159 = vunpack.c.h.b16 %v1279
        %v2160 = vunpack.c.l.b16 %v1280
        %v2161 = vunpack.c.l.b16 %v1281
        %v2162 = vunpack.c.h.b16 %v1281
        %v2163 = vunpack.c.l.b16 %v1282
        %v2164 = vunpack.c.l.b16 %v1283
        %v2165 = vunpack.c.h.b16 %v1283
        %v2166 = vunpack.c.l.b16 %v1284
        %v2167 = vunpack.c.l.b16 %v1285
        %v2168 = vunpack.c.h.b16 %v1285
        %v2169 = vunpack.c.l.b16 %v1286
        %v2170 = vunpack.c.l.b16 %v1287
        %v2171 = vunpack.c.h.b16 %v1287
        %v2172 = vunpack.c.l.b16 %v1288
        %v2173 = vunpack.c.l.b16 %v1289
        %v2174 = vunpack.c.h.b16 %v1289
        %v2175 = vunpack.c.l.b16 %v1290
        %v2176 = vunpack.c.l.b16 %v1291
        %v2177 = vunpack.c.h.b16 %v1291
        %v2178 = vunpack.c.l.b16 %v1292
        %v2179 = vunpack.c.l.b16 %v1293
        %v2180 = vunpack.c.h.b16 %v1293
        %v2181 = vunpack.c.l.b16 %v1294
        %v2182 = vunpack.c.l.b16 %v1295
        %v2183 = vunpack.c.h.b16 %v1295
        %v2184 = vunpack.c.l.b16 %v1296
        %v2185 = vunpack.c.l.b16 %v1297
        %v2186 = vunpack.c.h.b16 %v1297
        %v2187 = vunpack.c.l.b16 %v1298
        %v2188 = vunpack.c.l.b16 %v1299
        %v2189 = vunpack.c.h.b16 %v1299
        %v2190 = vunpack.c.l.b16 %v1300
        %v2191 = vunpack.c.l.b16 %v1301
        %v2192 = vunpack.c.h.b16 %v1301
        %v2193 = vunpack.c.l.b16 %v1302
        %v2194 = vunpack.c.l.b16 %v1303
        %v2195 = vunpack.c.h.b16 %v1303
        %v2196 = vunpack.c.l.b16 %v1304
        %v2197 = vunpack.c.l.b16 %v1305
        %v2198 = vunpack.c.h.b16 %v1305
        %v2199 = vunpack.c.l.b16 %v1306
        %v2200 = vunpack.c.l.b16 %v1307
        %v2201 = vunpack.c.h.b16 %v1307
        %v2202 = vunpack.c.l.b16 %v1308
        %v2203 = vunpack.c.l.b16 %v1309
        %v2204 = vunpack.c.h.b16 %v1309
        %v2205 = vunpack.c.l.b16 %v1310
        %v2206 = vunpack.c.l.b16 %v1311
        %v2207 = vunpack.c.h.b16 %v1311
        %v2208 = vunpack.c.l.b16 %v1312
        %v2209 = vunpack.c.l.b16 %v1313
        %v2210 = vunpack.c.h.b16 %v1313
        %v2211 = vunpack.c.l.b16 %v1314
        %v2212 = vunpack.c.l.b16 %v1315
        %v2213 = vunpack.c.h.b16 %v1315
        %v2214 = vunpack.c.l.b16 %v1316
        %v2215 = vunpack.c.l.b16 %v1317
        %v2216 = vunpack.c.h.b16 %v1317
        %v2217 = vunpack.c.l.b16 %v1318
        %v2218 = vunpack.c.l.b16 %v1319
        %v2219 = vunpack.c.h.b16 %v1319
        %v2220 = vunpack.c.l.b16 %v1320
        %v2221 = vunpack.c.l.b16 %v1321
        %v2222 = vunpack.c.h.b16 %v1321
        %v2223 = vunpack.c.l.b16 %v1322
        %v2224 = vunpack.c.l.b16 %v1323
        %v2225 = vunpack.c.h.b16 %v1323
        %v2226 = vunpack.c.l.b16 %v1324
        %v2227 = vunpack.c.l.b16 %v1325
        %v2228 = vunpack.c.h.b16 %v1325
        %v2229 = vunpack.c.l.b16 %v1326
        %v2230 = vunpack.c.l.b16 %v1327
        %v2231 = vunpack.c.h.b16 %v1327
        %v2232 = vunpack.c.l.b16 %v1328
        %v2233 = vunpack.c.l.b16 %v1329
        %v2234 = vunpack.c.h.b16 %v1329
        %v2235 = vunpack.c.l.b16 %v1330
        %v2236 = vunpack.c.l.b16 %v1331
        %v2237 = vunpack.c.h.b16 %v1331
        %v2238 = vunpack.c.l.b16 %v1332
        %v2239 = vunpack.c.l.b16 %v1333
        %v2240 = vunpack.c.h.b16 %v1333
        %v2241 = vunpack.c.l.b16 %v1334
        %v2242 = vunpack.c.l.b16 %v1335
        %v2243 = vunpack.c.h.b16 %v1335
        %v2244 = vunpack.c.l.b16 %v1336
        %v2245 = vunpack.c.l.b16 %v1337
        %v2246 = vunpack.c.h.b16 %v1337
        %v2247 = vunpack.c.l.b16 %v1338
        %v2248 = vunpack.c.l.b16 %v1339
        %v2249 = vunpack.c.h.b16 %v1339
        %v2250 = vunpack.c.l.b16 %v1340
        %v2251 = vunpack.c.l.b16 %v1341
        %v2252 = vunpack.c.h.b16 %v1341
        %v2253 = vunpack.c.l.b16 %v1342
        %v2254 = vunpack.c.l.b16 %v1343
        %v2255 = vunpack.c.h.b16 %v1343
        %v2256 = vunpack.c.l.b16 %v1344
        %v2257 = vunpack.c.l.b16 %v1345
        %v2258 = vunpack.c.h.b16 %v1345
        %v2259 = vunpack.c.l.b16 %v1346
        %v2260 = vunpack.c.l.b16 %v1347
        %v2261 = vunpack.c.h.b16 %v1347
        %v2262 = vunpack.c.l.b16 %v1348
        %v2263 = vunpack.c.l.b16 %v1349
        %v2264 = vunpack.c.h.b16 %v1349
        %v2265 = vunpack.c.l.b16 %v1350
        %v2266 = vunpack.c.l.b16 %v1351
        %v2267 = vunpack.c.h.b16 %v1351
        %v2268 = vunpack.c.l.b16 %v1352
        %v2269 = vunpack.c.l.b16 %v1353
        %v2270 = vunpack.c.h.b16 %v1353
        %v2271 = vunpack.c.l.b16 %v1354
        %v2272 = vunpack.c.l.b16 %v1355
        %v2273 = vunpack.c.h.b16 %v1355
        %v2274 = vunpack.c.l.b16 %v1356
        %v2275 = vunpack.c.l.b16 %v1357
        %v2276 = vunpack.c.h.b16 %v1357
        %v2277 = vunpack.c.l.b16 %v1358
        %v2278 = vunpack.c.l.b16 %v1359
        %v2279 = vunpack.c.h.b16 %v1359
        %v2280 = vunpack.c.l.b16 %v1360
        %v2281 = vunpack.c.l.b16 %v1361
        %v2282 = vunpack.c.h.b16 %v1361
        %v2283 = vunpack.c.l.b16 %v1362
        %v2284 = vunpack.c.l.b16 %v1363
        %v2285 = vunpack.c.h.b16 %v1363
        %v2286 = vunpack.c.l.b16 %v1364
        %v2287 = vunpack.c.l.b16 %v1365
        %v2288 = vunpack.c.h.b16 %v1365
        %v2289 = vunpack.c.l.b16 %v1366
        %v2290 = vunpack.c.l.b16 %v1367
        %v2291 = vunpack.c.h.b16 %v1367
        %v2292 = vunpack.c.l.b16 %v1368
        %v2293 = vunpack.c.l.b16 %v1369
        %v2294 = vunpack.c.h.b16 %v1369
        %v2295 = vunpack.c.l.b16 %v1370
        %v2296 = vunpack.c.l.b16 %v1371
        %v2297 = vunpack.c.h.b16 %v1371
        %v2298 = vunpack.c.l.b16 %v1372
        %v2299 = vunpack.c.l.b16 %v1373
        %v2300 = vunpack.c.h.b16 %v1373
        %v2301 = vunpack.c.l.b16 %v1374
        %v2302 = vunpack.c.l.b16 %v1375
        %v2303 = vunpack.c.h.b16 %v1375
        %v2304 = vunpack.c.l.b16 %v1376
        %v2305 = vunpack.c.l.b16 %v1377
        %v2306 = vunpack.c.h.b16 %v1377
        %v2307 = vunpack.c.l.b16 %v1378
        %v2308 = vunpack.c.l.b16 %v1379
        %v2309 = vunpack.c.h.b16 %v1379
        %v2310 = vunpack.c.l.b16 %v1380
        %v2311 = vunpack.c.l.b16 %v1381
        %v2312 = vunpack.c.h.b16 %v1381
        %v2313 = vunpack.c.l.b16 %v1382
        %v2314 = vunpack.c.l.b16 %v1383
        %v2315 = vunpack.c.h.b16 %v1383
        %v2316 = vunpack.c.l.b16 %v1384
        %v2317 = vunpack.c.l.b16 %v1385
        %v2318 = vunpack.c.h.b16 %v1385
        %v2319 = vunpack.c.l.b16 %v1386
        %v2320 = vunpack.c.l.b16 %v1387
        %v2321 = vunpack.c.h.b16 %v1387
        %v2322 = vunpack.c.l.b16 %v1388
        %v2323 = vunpack.c.l.b16 %v1389
        %v2324 = vunpack.c.h.b16 %v1389
        %v2325 = vunpack.c.l.b16 %v1390
        %v2326 = vunpack.c.l.b16 %v1391
        %v2327 = vunpack.c.h.b16 %v1391
        %v2328 = vunpack.c.l.b16 %v1392
        %v2329 = vunpack.c.l.b16 %v1393
        %v2330 = vunpack.c.h.b16 %v1393
        %v2331 = vunpack.c.l.b16 %v1394
        %v2332 = vunpack.c.l.b16 %v1395
        %v2333 = vunpack.c.h.b16 %v1395
        %v2334 = vunpack.c.l.b16 %v1396
        %v2335 = vunpack.c.l.b16 %v1397
        %v2336 = vunpack.c.h.b16 %v1397
        %v2337 = vunpack.c.l.b16 %v1398
        %v2338 = vunpack.c.l.b16 %v1399
        %v2339 = vunpack.c.h.b16 %v1399
        %v2340 = vunpack.c.l.b16 %v1400
        %v2341 = vunpack.c.l.b16 %v1401
        %v2342 = vunpack.c.h.b16 %v1401
        %v2343 = vunpack.c.l.b16 %v1402
        %v2344 = vunpack.c.l.b16 %v1403
        %v2345 = vunpack.c.h.b16 %v1403
        %v2346 = vunpack.c.l.b16 %v1404
        %v2347 = vunpack.c.l.b16 %v1405
        %v2348 = vunpack.c.h.b16 %v1405
        %v2349 = vunpack.c.l.b16 %v1406
        %v2350 = vunpack.c.l.b16 %v1407
        %v2351 = vunpack.c.h.b16 %v1407
        %v2352 = vunpack.c.l.b16 %v1408
        %v2353 = vunpack.c.l.b16 %v1409
        %v2354 = vunpack.c.h.b16 %v1409
        %v2355 = vunpack.c.l.b16 %v1410
        %v2356 = vunpack.c.l.b16 %v1411
        %v2357 = vunpack.c.h.b16 %v1411
        %v2358 = vunpack.c.l.b16 %v1412
        %v2359 = vunpack.c.l.b16 %v1413
        %v2360 = vunpack.c.h.b16 %v1413
        %v2361 = vunpack.c.l.b16 %v1414
        %v2362 = vunpack.c.l.b16 %v1415
        %v2363 = vunpack.c.h.b16 %v1415
        %v2364 = vunpack.c.l.b16 %v1416
        %v2365 = vunpack.c.l.b16 %v1417
        %v2366 = vunpack.c.h.b16 %v1417
        %v2367 = vunpack.c.l.b16 %v1418
        %v2368 = vunpack.c.l.b16 %v1419
        %v2369 = vunpack.c.h.b16 %v1419
        %v2370 = vunpack.c.l.b16 %v1420
        %v2371 = vpack.c.b16 %v1894, %v1891
        %v2372 = vpack.c.b16 %v1895, %v1892
        %v2373 = vpack.c.b16 %v1896, %v1893
        %v2374 = vpack.c.b16 %v1900, %v1897
        %v2375 = vpack.c.b16 %v1901, %v1898
        %v2376 = vpack.c.b16 %v1902, %v1899
        %v2377 = vpack.c.b16 %v1906, %v1903
        %v2378 = vpack.c.b16 %v1907, %v1904
        %v2379 = vpack.c.b16 %v1908, %v1905
        %v2380 = vpack.c.b16 %v1912, %v1909
        %v2381 = vpack.c.b16 %v1913, %v1910
        %v2382 = vpack.c.b16 %v1914, %v1911
        %v2383 = vpack.c.b16 %v1918, %v1915
        %v2384 = vpack.c.b16 %v1919, %v1916
        %v2385 = vpack.c.b16 %v1920, %v1917
        %v2386 = vpack.c.b16 %v1924, %v1921
        %v2387 = vpack.c.b16 %v1925, %v1922
        %v2388 = vpack.c.b16 %v1926, %v1923
        %v2389 = vpack.c.b16 %v1930, %v1927
        %v2390 = vpack.c.b16 %v1931, %v1928
        %v2391 = vpack.c.b16 %v1932, %v1929
        %v2392 = vpack.c.b16 %v1936, %v1933
        %v2393 = vpack.c.b16 %v1937, %v1934
        %v2394 = vpack.c.b16 %v1938, %v1935
        %v2395 = vpack.c.b16 %v1942, %v1939
        %v2396 = vpack.c.b16 %v1943, %v1940
        %v2397 = vpack.c.b16 %v1944, %v1941
        %v2398 = vpack.c.b16 %v1948, %v1945
        %v2399 = vpack.c.b16 %v1949, %v1946
        %v2400 = vpack.c.b16 %v1950, %v1947
        %v2401 = vpack.c.b16 %v1954, %v1951
        %v2402 = vpack.c.b16 %v1955, %v1952
        %v2403 = vpack.c.b16 %v1956, %v1953
        %v2404 = vpack.c.b16 %v1960, %v1957
        %v2405 = vpack.c.b16 %v1961, %v1958
        %v2406 = vpack.c.b16 %v1962, %v1959
        %v2407 = vpack.c.b16 %v1966, %v1963
        %v2408 = vpack.c.b16 %v1967, %v1964
        %v2409 = vpack.c.b16 %v1968, %v1965
        %v2410 = vpack.c.b16 %v1972, %v1969
        %v2411 = vpack.c.b16 %v1973, %v1970
        %v2412 = vpack.c.b16 %v1974, %v1971
        %v2413 = vpack.c.b16 %v1978, %v1975
        %v2414 = vpack.c.b16 %v1979, %v1976
        %v2415 = vpack.c.b16 %v1980, %v1977
        %v2416 = vpack.c.b16 %v1984, %v1981
        %v2417 = vpack.c.b16 %v1985, %v1982
        %v2418 = vpack.c.b16 %v1986, %v1983
        %v2419 = vpack.c.b16 %v1990, %v1987
        %v2420 = vpack.c.b16 %v1991, %v1988
        %v2421 = vpack.c.b16 %v1992, %v1989
        %v2422 = vpack.c.b16 %v1996, %v1993
        %v2423 = vpack.c.b16 %v1997, %v1994
        %v2424 = vpack.c.b16 %v1998, %v1995
        %v2425 = vpack.c.b16 %v2002, %v1999
        %v2426 = vpack.c.b16 %v2003, %v2000
        %v2427 = vpack.c.b16 %v2004, %v2001
        %v2428 = vpack.c.b16 %v2008, %v2005
        %v2429 = vpack.c.b16 %v2009, %v2006
        %v2430 = vpack.c.b16 %v2010, %v2007
        %v2431 = vpack.c.b16 %v2014, %v2011
        %v2432 = vpack.c.b16 %v2015, %v2012
        %v2433 = vpack.c.b16 %v2016, %v2013
        %v2434 = vpack.c.b16 %v2020, %v2017
        %v2435 = vpack.c.b16 %v2021, %v2018
        %v2436 = vpack.c.b16 %v2022, %v2019
        %v2437 = vpack.c.b16 %v2026, %v2023
        %v2438 = vpack.c.b16 %v2027, %v2024
        %v2439 = vpack.c.b16 %v2028, %v2025
        %v2440 = vpack.c.b16 %v2032, %v2029
        %v2441 = vpack.c.b16 %v2033, %v2030
        %v2442 = vpack.c.b16 %v2034, %v2031
        %v2443 = vpack.c.b16 %v2038, %v2035
        %v2444 = vpack.c.b16 %v2039, %v2036
        %v2445 = vpack.c.b16 %v2040, %v2037
        %v2446 = vpack.c.b16 %v2044, %v2041
        %v2447 = vpack.c.b16 %v2045, %v2042
        %v2448 = vpack.c.b16 %v2046, %v2043
        %v2449 = vpack.c.b16 %v2050, %v2047
        %v2450 = vpack.c.b16 %v2051, %v2048
        %v2451 = vpack.c.b16 %v2052, %v2049
        %v2452 = vpack.c.b16 %v2056, %v2053
        %v2453 = vpack.c.b16 %v2057, %v2054
        %v2454 = vpack.c.b16 %v2058, %v2055
        %v2455 = vpack.c.b16 %v2062, %v2059
        %v2456 = vpack.c.b16 %v2063, %v2060
        %v2457 = vpack.c.b16 %v2064, %v2061
        %v2458 = vpack.c.b16 %v2068, %v2065
        %v2459 = vpack.c.b16 %v2069, %v2066
        %v2460 = vpack.c.b16 %v2070, %v2067
        %v2461 = vpack.c.b16 %v2074, %v2071
        %v2462 = vpack.c.b16 %v2075, %v2072
        %v2463 = vpack.c.b16 %v2076, %v2073
        %v2464 = vpack.c.b16 %v2080, %v2077
        %v2465 = vpack.c.b16 %v2081, %v2078
        %v2466 = vpack.c.b16 %v2082, %v2079
        %v2467 = vpack.c.b16 %v2086, %v2083
        %v2468 = vpack.c.b16 %v2087, %v2084
        %v2469 = vpack.c.b16 %v2088, %v2085
        %v2470 = vpack.c.b16 %v2092, %v2089
        %v2471 = vpack.c.b16 %v2093, %v2090
        %v2472 = vpack.c.b16 %v2094, %v2091
        %v2473 = vpack.c.b16 %v2098, %v2095
        %v2474 = vpack.c.b16 %v2099, %v2096
        %v2475 = vpack.c.b16 %v2100, %v2097
        %v2476 = vpack.c.b16 %v2104, %v2101
        %v2477 = vpack.c.b16 %v2105, %v2102
        %v2478 = vpack.c.b16 %v2106, %v2103
        %v2479 = vpack.c.b16 %v2110, %v2107
        %v2480 = vpack.c.b16 %v2111, %v2108
        %v2481 = vpack.c.b16 %v2112, %v2109
        %v2482 = vpack.c.b16 %v2116, %v2113
        %v2483 = vpack.c.b16 %v2117, %v2114
        %v2484 = vpack.c.b16 %v2118, %v2115
        %v2485 = vpack.c.b16 %v2122, %v2119
        %v2486 = vpack.c.b16 %v2123, %v2120
        %v2487 = vpack.c.b16 %v2124, %v2121
        %v2488 = vpack.c.b16 %v2128, %v2125
        %v2489 = vpack.c.b16 %v2129, %v2126
        %v2490 = vpack.c.b16 %v2130, %v2127
        %v2491 = vpack.c.b16 %v2134, %v2131
        %v2492 = vpack.c.b16 %v2135, %v2132
        %v2493 = vpack.c.b16 %v2136, %v2133
        %v2494 = vpack.c.b16 %v2140, %v2137
        %v2495 = vpack.c.b16 %v2141, %v2138
        %v2496 = vpack.c.b16 %v2142, %v2139
        %v2497 = vpack.c.b16 %v2146, %v2143
        %v2498 = vpack.c.b16 %v2147, %v2144
        %v2499 = vpack.c.b16 %v2148, %v2145
        %v2500 = vpack.c.b16 %v2152, %v2149
        %v2501 = vpack.c.b16 %v2153, %v2150
        %v2502 = vpack.c.b16 %v2154, %v2151
        %v2503 = vpack.c.b16 %v2158, %v2155
        %v2504 = vpack.c.b16 %v2159, %v2156
        %v2505 = vpack.c.b16 %v2160, %v2157
        %v2506 = vpack.c.b16 %v2164, %v2161
        %v2507 = vpack.c.b16 %v2165, %v2162
        %v2508 = vpack.c.b16 %v2166, %v2163
        %v2509 = vpack.c.b16 %v2170, %v2167
        %v2510 = vpack.c.b16 %v2171, %v2168
        %v2511 = vpack.c.b16 %v2172, %v2169
        %v2512 = vpack.c.b16 %v2176, %v2173
        %v2513 = vpack.c.b16 %v2177, %v2174
        %v2514 = vpack.c.b16 %v2178, %v2175
        %v2515 = vpack.c.b16 %v2182, %v2179
        %v2516 = vpack.c.b16 %v2183, %v2180
        %v2517 = vpack.c.b16 %v2184, %v2181
        %v2518 = vpack.c.b16 %v2188, %v2185
        %v2519 = vpack.c.b16 %v2189, %v2186
        %v2520 = vpack.c.b16 %v2190, %v2187
        %v2521 = vpack.c.b16 %v2194, %v2191
        %v2522 = vpack.c.b16 %v2195, %v2192
        %v2523 = vpack.c.b16 %v2196, %v2193
        %v2524 = vpack.c.b16 %v2200, %v2197
        %v2525 = vpack.c.b16 %v2201, %v2198
        %v2526 = vpack.c.b16 %v2202, %v2199
        %v2527 = vpack.c.b16 %v2206, %v2203
        %v2528 = vpack.c.b16 %v2207, %v2204
        %v2529 = vpack.c.b16 %v2208, %v2205
        %v2530 = vpack.c.b16 %v2212, %v2209
        %v2531 = vpack.c.b16 %v2213, %v2210
        %v2532 = vpack.c.b16 %v2214, %v2211
        %v2533 = vpack.c.b16 %v2218, %v2215
        %v2534 = vpack.c.b16 %v2219, %v2216
        %v2535 = vpack.c.b16 %v2220, %v2217
        %v2536 = vpack.c.b16 %v2224, %v2221
        %v2537 = vpack.c.b16 %v2225, %v2222
        %v2538 = vpack.c.b16 %v2226, %v2223
        %v2539 = vpack.c.b16 %v2230, %v2227
        %v2540 = vpack.c.b16 %v2231, %v2228
        %v2541 = vpack.c.b16 %v2232, %v2229
        %v2542 = vpack.c.b16 %v2236, %v2233
        %v2543 = vpack.c.b16 %v2237, %v2234
        %v2544 = vpack.c.b16 %v2238, %v2235
        %v2545 = vpack.c.b16 %v2242, %v2239
        %v2546 = vpack.c.b16 %v2243, %v2240
        %v2547 = vpack.c.b16 %v2244, %v2241
        %v2548 = vpack.c.b16 %v2248, %v2245
        %v2549 = vpack.c.b16 %v2249, %v2246
        %v2550 = vpack.c.b16 %v2250, %v2247
        %v2551 = vpack.c.b16 %v2254, %v2251
        %v2552 = vpack.c.b16 %v2255, %v2252
        %v2553 = vpack.c.b16 %v2256, %v2253
        %v2554 = vpack.c.b16 %v2260, %v2257
        %v2555 = vpack.c.b16 %v2261, %v2258
        %v2556 = vpack.c.b16 %v2262, %v2259
        %v2557 = vpack.c.b16 %v2266, %v2263
        %v2558 = vpack.c.b16 %v2267, %v2264
        %v2559 = vpack.c.b16 %v2268, %v2265
        %v2560 = vpack.c.b16 %v2272, %v2269
        %v2561 = vpack.c.b16 %v2273, %v2270
        %v2562 = vpack.c.b16 %v2274, %v2271
        %v2563 = vpack.c.b16 %v2278, %v2275
        %v2564 = vpack.c.b16 %v2279, %v2276
        %v2565 = vpack.c.b16 %v2280, %v2277
        %v2566 = vpack.c.b16 %v2284, %v2281
        %v2567 = vpack.c.b16 %v2285, %v2282
        %v2568 = vpack.c.b16 %v2286, %v2283
        %v2569 = vpack.c.b16 %v2290, %v2287
        %v2570 = vpack.c.b16 %v2291, %v2288
        %v2571 = vpack.c.b16 %v2292, %v2289
        %v2572 = vpack.c.b16 %v2296, %v2293
        %v2573 = vpack.c.b16 %v2297, %v2294
        %v2574 = vpack.c.b16 %v2298, %v2295
        %v2575 = vpack.c.b16 %v2302, %v2299
        %v2576 = vpack.c.b16 %v2303, %v2300
        %v2577 = vpack.c.b16 %v2304, %v2301
        %v2578 = vpack.c.b16 %v2308, %v2305
        %v2579 = vpack.c.b16 %v2309, %v2306
        %v2580 = vpack.c.b16 %v2310, %v2307
        %v2581 = vpack.c.b16 %v2314, %v2311
        %v2582 = vpack.c.b16 %v2315, %v2312
        %v2583 = vpack.c.b16 %v2316, %v2313
        %v2584 = vpack.c.b16 %v2320, %v2317
        %v2585 = vpack.c.b16 %v2321, %v2318
        %v2586 = vpack.c.b16 %v2322, %v2319
        %v2587 = vpack.c.b16 %v2326, %v2323
        %v2588 = vpack.c.b16 %v2327, %v2324
        %v2589 = vpack.c.b16 %v2328, %v2325
        %v2590 = vpack.c.b16 %v2332, %v2329
        %v2591 = vpack.c.b16 %v2333, %v2330
        %v2592 = vpack.c.b16 %v2334, %v2331
        %v2593 = vpack.c.b16 %v2338, %v2335
        %v2594 = vpack.c.b16 %v2339, %v2336
        %v2595 = vpack.c.b16 %v2340, %v2337
        %v2596 = vpack.c.b16 %v2344, %v2341
        %v2597 = vpack.c.b16 %v2345, %v2342
        %v2598 = vpack.c.b16 %v2346, %v2343
        %v2599 = vpack.c.b16 %v2350, %v2347
        %v2600 = vpack.c.b16 %v2351, %v2348
        %v2601 = vpack.c.b16 %v2352, %v2349
        %v2602 = vpack.c.b16 %v2356, %v2353
        %v2603 = vpack.c.b16 %v2357, %v2354
        %v2604 = vpack.c.b16 %v2358, %v2355
        %v2605 = vpack.c.b16 %v2362, %v2359
        %v2606 = vpack.c.b16 %v2363, %v2360
        %v2607 = vpack.c.b16 %v2364, %v2361
        %v2608 = vpack.c.b16 %v2368, %v2365
        %v2609 = vpack.c.b16 %v2369, %v2366
        %v2610 = vpack.c.b16 %v2370, %v2367
        %2851 = vmatprep.subr.bf16.mxu0 %v2372
        %2852 = vmatpush1.bf16.msra.mxu0 %v2371
        %2853 = vmatprep.subr.bf16.mxu0 %v2375
        %2854 = vmatpush1.bf16.msra.mxu0 %v2374
        %2855 = vmatprep.subr.bf16.mxu0 %v2378
        %2856 = vmatpush1.bf16.msra.mxu0 %v2377
        %2857 = vmatprep.subr.bf16.mxu0 %v2381
        %2858 = vmatpush1.bf16.msra.mxu0 %v2380
        %2859 = vmatprep.subr.bf16.mxu0 %v2384
        %2860 = vmatpush1.bf16.msra.mxu0 %v2383
        %2861 = vmatprep.subr.bf16.mxu0 %v2387
        %2862 = vmatpush1.bf16.msra.mxu0 %v2386
        %2863 = vmatprep.subr.bf16.mxu0 %v2390
        %2864 = vmatpush1.bf16.msra.mxu0 %v2389
        %2865 = vmatprep.subr.bf16.mxu0 %v2393
        %2866 = vmatpush1.bf16.msra.mxu0 %v2392
        %2867 = vmatprep.subr.bf16.mxu0 %v2396
        %2868 = vmatpush1.bf16.msra.mxu0 %v2395
        %2869 = vmatprep.subr.bf16.mxu0 %v2399
        %2870 = vmatpush1.bf16.msra.mxu0 %v2398
        %2871 = vmatprep.subr.bf16.mxu0 %v2402
        %2872 = vmatpush1.bf16.msra.mxu0 %v2401
        %2873 = vmatprep.subr.bf16.mxu0 %v2405
        %2874 = vmatpush1.bf16.msra.mxu0 %v2404
        %2875 = vmatprep.subr.bf16.mxu0 %v2408
        %2876 = vmatpush1.bf16.msra.mxu0 %v2407
        %2877 = vmatprep.subr.bf16.mxu0 %v2411
        %2878 = vmatpush1.bf16.msra.mxu0 %v2410
        %2879 = vmatprep.subr.bf16.mxu0 %v2414
        %2880 = vmatpush1.bf16.msra.mxu0 %v2413
        %2881 = vmatprep.subr.bf16.mxu0 %v2417
        %2882 = vmatpush1.bf16.msra.mxu0 %v2416
        %2883 = vmatprep.mubr.bf16.mxu0 %v1552
        %2884 = vmatmul.mubr.bf16.gmra.mrb[0].mxu0 %v1551
        %v2885 = vpop.f32.mrb[0].mxu0
        %v2886 = vadd.f32 %v1426, %v2885
        %v2887 = vpop.f32.mrb[0].mxu0
        %v2888 = vadd.f32 %v1430, %v2887
        %v2889 = vpop.f32.mrb[0].mxu0
        %v2890 = vpop.f32.mrb[0].mxu0
        %2891 = vdwg.mxu0
        %2892 = vmatprep.subr.bf16.mxu0 %v2420
        %2893 = vmatpush1.bf16.msra.mxu0 %v2419
        %2894 = vmatprep.subr.bf16.mxu0 %v2423
        %2895 = vmatpush1.bf16.msra.mxu0 %v2422
        %2896 = vmatprep.subr.bf16.mxu0 %v2426
        %2897 = vmatpush1.bf16.msra.mxu0 %v2425
        %2898 = vmatprep.subr.bf16.mxu0 %v2429
        %2899 = vmatpush1.bf16.msra.mxu0 %v2428
        %2900 = vmatprep.subr.bf16.mxu0 %v2432
        %2901 = vmatpush1.bf16.msra.mxu0 %v2431
        %2902 = vmatprep.subr.bf16.mxu0 %v2435
        %2903 = vmatpush1.bf16.msra.mxu0 %v2434
        %2904 = vmatprep.subr.bf16.mxu0 %v2438
        %2905 = vmatpush1.bf16.msra.mxu0 %v2437
        %2906 = vmatprep.subr.bf16.mxu0 %v2441
        %2907 = vmatpush1.bf16.msra.mxu0 %v2440
        %2908 = vmatprep.subr.bf16.mxu0 %v2444
        %2909 = vmatpush1.bf16.msra.mxu0 %v2443
        %2910 = vmatprep.subr.bf16.mxu0 %v2447
        %2911 = vmatpush1.bf16.msra.mxu0 %v2446
        %2912 = vmatprep.subr.bf16.mxu0 %v2450
        %2913 = vmatpush1.bf16.msra.mxu0 %v2449
        %2914 = vmatprep.subr.bf16.mxu0 %v2453
        %2915 = vmatpush1.bf16.msra.mxu0 %v2452
        %2916 = vmatprep.subr.bf16.mxu0 %v2456
        %2917 = vmatpush1.bf16.msra.mxu0 %v2455
        %2918 = vmatprep.subr.bf16.mxu0 %v2459
        %2919 = vmatpush1.bf16.msra.mxu0 %v2458
        %2920 = vmatprep.subr.bf16.mxu0 %v2462
        %2921 = vmatpush1.bf16.msra.mxu0 %v2461
        %2922 = vmatprep.subr.bf16.mxu0 %v2465
        %2923 = vmatpush1.bf16.msra.mxu0 %v2464
        %2924 = vmatprep.mubr.bf16.mxu0 %v1554
        %2925 = vmatmul.mubr.bf16.gmra.mrb[0].mxu0 %v1553
        %v2926 = vpop.f32.mrb[0].mxu0
        %v2927 = vadd.f32 %v2886, %v2926
        %v2928 = vpop.f32.mrb[0].mxu0
        %v2929 = vadd.f32 %v2888, %v2928
        %v2930 = vpop.f32.mrb[0].mxu0
        %v2931 = vpop.f32.mrb[0].mxu0
        %2932 = vdwg.mxu0
        %2933 = vmatprep.subr.bf16.mxu0 %v2468
        %2934 = vmatpush1.bf16.msra.mxu0 %v2467
        %2935 = vmatprep.subr.bf16.mxu0 %v2471
        %2936 = vmatpush1.bf16.msra.mxu0 %v2470
        %2937 = vmatprep.subr.bf16.mxu0 %v2474
        %2938 = vmatpush1.bf16.msra.mxu0 %v2473
        %2939 = vmatprep.subr.bf16.mxu0 %v2477
        %2940 = vmatpush1.bf16.msra.mxu0 %v2476
        %2941 = vmatprep.subr.bf16.mxu0 %v2480
        %2942 = vmatpush1.bf16.msra.mxu0 %v2479
        %2943 = vmatprep.subr.bf16.mxu0 %v2483
        %2944 = vmatpush1.bf16.msra.mxu0 %v2482
        %2945 = vmatprep.subr.bf16.mxu0 %v2486
        %2946 = vmatpush1.bf16.msra.mxu0 %v2485
        %2947 = vmatprep.subr.bf16.mxu0 %v2489
        %2948 = vmatpush1.bf16.msra.mxu0 %v2488
        %2949 = vmatprep.subr.bf16.mxu0 %v2492
        %2950 = vmatpush1.bf16.msra.mxu0 %v2491
        %2951 = vmatprep.subr.bf16.mxu0 %v2495
        %2952 = vmatpush1.bf16.msra.mxu0 %v2494
        %2953 = vmatprep.subr.bf16.mxu0 %v2498
        %2954 = vmatpush1.bf16.msra.mxu0 %v2497
        %2955 = vmatprep.subr.bf16.mxu0 %v2501
        %2956 = vmatpush1.bf16.msra.mxu0 %v2500
        %2957 = vmatprep.subr.bf16.mxu0 %v2504
        %2958 = vmatpush1.bf16.msra.mxu0 %v2503
        %2959 = vmatprep.subr.bf16.mxu0 %v2507
        %2960 = vmatpush1.bf16.msra.mxu0 %v2506
        %2961 = vmatprep.subr.bf16.mxu0 %v2510
        %2962 = vmatpush1.bf16.msra.mxu0 %v2509
        %2963 = vmatprep.subr.bf16.mxu0 %v2513
        %2964 = vmatpush1.bf16.msra.mxu0 %v2512
        %2965 = vmatprep.mubr.bf16.mxu0 %v1556
        %2966 = vmatmul.mubr.bf16.gmra.mrb[0].mxu0 %v1555
        %v2967 = vpop.f32.mrb[0].mxu0
        %v2968 = vadd.f32 %v2927, %v2967
        %v2969 = vpop.f32.mrb[0].mxu0
        %v2970 = vadd.f32 %v2929, %v2969
        %v2971 = vpop.f32.mrb[0].mxu0
        %v2972 = vpop.f32.mrb[0].mxu0
        %2973 = vdwg.mxu0
        %2974 = vmatprep.subr.bf16.mxu0 %v2516
        %2975 = vmatpush1.bf16.msra.mxu0 %v2515
        %2976 = vmatprep.subr.bf16.mxu0 %v2519
        %2977 = vmatpush1.bf16.msra.mxu0 %v2518
        %2978 = vmatprep.subr.bf16.mxu0 %v2522
        %2979 = vmatpush1.bf16.msra.mxu0 %v2521
        %2980 = vmatprep.subr.bf16.mxu0 %v2525
        %2981 = vmatpush1.bf16.msra.mxu0 %v2524
        %2982 = vmatprep.subr.bf16.mxu0 %v2528
        %2983 = vmatpush1.bf16.msra.mxu0 %v2527
        %2984 = vmatprep.subr.bf16.mxu0 %v2531
        %2985 = vmatpush1.bf16.msra.mxu0 %v2530
        %2986 = vmatprep.subr.bf16.mxu0 %v2534
        %2987 = vmatpush1.bf16.msra.mxu0 %v2533
        %2988 = vmatprep.subr.bf16.mxu0 %v2537
        %2989 = vmatpush1.bf16.msra.mxu0 %v2536
        %2990 = vmatprep.subr.bf16.mxu0 %v2540
        %2991 = vmatpush1.bf16.msra.mxu0 %v2539
        %2992 = vmatprep.subr.bf16.mxu0 %v2543
        %2993 = vmatpush1.bf16.msra.mxu0 %v2542
        %2994 = vmatprep.subr.bf16.mxu0 %v2546
        %2995 = vmatpush1.bf16.msra.mxu0 %v2545
        %2996 = vmatprep.subr.bf16.mxu0 %v2549
        %2997 = vmatpush1.bf16.msra.mxu0 %v2548
        %2998 = vmatprep.subr.bf16.mxu0 %v2552
        %2999 = vmatpush1.bf16.msra.mxu0 %v2551
        %3000 = vmatprep.subr.bf16.mxu0 %v2555
        %3001 = vmatpush1.bf16.msra.mxu0 %v2554
        %3002 = vmatprep.subr.bf16.mxu0 %v2558
        %3003 = vmatpush1.bf16.msra.mxu0 %v2557
        %3004 = vmatprep.subr.bf16.mxu0 %v2561
        %3005 = vmatpush1.bf16.msra.mxu0 %v2560
        %3006 = vmatprep.mubr.bf16.mxu0 %v1558
        %3007 = vmatmul.mubr.bf16.gmra.mrb[0].mxu0 %v1557
        %v3008 = vpop.f32.mrb[0].mxu0
        %v3009 = vadd.f32 %v2968, %v3008
        %v3010 = vpop.f32.mrb[0].mxu0
        %v3011 = vadd.f32 %v2970, %v3010
        %v3012 = vpop.f32.mrb[0].mxu0
        %v3013 = vpop.f32.mrb[0].mxu0
        %3014 = vdwg.mxu0
        %3015 = vmatprep.subr.bf16.mxu0 %v2564
        %3016 = vmatpush1.bf16.msra.mxu0 %v2563
        %3017 = vmatprep.subr.bf16.mxu0 %v2567
        %3018 = vmatpush1.bf16.msra.mxu0 %v2566
        %3019 = vmatprep.subr.bf16.mxu0 %v2570
        %3020 = vmatpush1.bf16.msra.mxu0 %v2569
        %3021 = vmatprep.subr.bf16.mxu0 %v2573
        %3022 = vmatpush1.bf16.msra.mxu0 %v2572
        %3023 = vmatprep.subr.bf16.mxu0 %v2576
        %3024 = vmatpush1.bf16.msra.mxu0 %v2575
        %3025 = vmatprep.subr.bf16.mxu0 %v2579
        %3026 = vmatpush1.bf16.msra.mxu0 %v2578
        %3027 = vmatprep.subr.bf16.mxu0 %v2582
        %3028 = vmatpush1.bf16.msra.mxu0 %v2581
        %3029 = vmatprep.subr.bf16.mxu0 %v2585
        %3030 = vmatpush1.bf16.msra.mxu0 %v2584
        %3031 = vmatprep.subr.bf16.mxu0 %v2588
        %3032 = vmatpush1.bf16.msra.mxu0 %v2587
        %3033 = vmatprep.subr.bf16.mxu0 %v2591
        %3034 = vmatpush1.bf16.msra.mxu0 %v2590
        %3035 = vmatprep.subr.bf16.mxu0 %v2594
        %3036 = vmatpush1.bf16.msra.mxu0 %v2593
        %3037 = vmatprep.subr.bf16.mxu0 %v2597
        %3038 = vmatpush1.bf16.msra.mxu0 %v2596
        %3039 = vmatprep.subr.bf16.mxu0 %v2600
        %3040 = vmatpush1.bf16.msra.mxu0 %v2599
        %3041 = vmatprep.subr.bf16.mxu0 %v2603
        %3042 = vmatpush1.bf16.msra.mxu0 %v2602
        %3043 = vmatprep.subr.bf16.mxu0 %v2606
        %3044 = vmatpush1.bf16.msra.mxu0 %v2605
        %3045 = vmatprep.subr.bf16.mxu0 %v2609
        %3046 = vmatpush1.bf16.msra.mxu0 %v2608
        %3047 = vmatprep.mubr.bf16.mxu0 %v1560
        %3048 = vmatmul.mubr.bf16.gmra.mrb[0].mxu0 %v1559
        %v3049 = vpop.f32.mrb[0].mxu0
        %v3050 = vadd.f32 %v3009, %v3049
        %v3051 = vpop.f32.mrb[0].mxu0
        %v3052 = vadd.f32 %v3011, %v3051
        %v3053 = vpop.f32.mrb[0].mxu0
        %v3054 = vpop.f32.mrb[0].mxu0
        %3055 = vdwg.mxu0
        %3056 = vmatprep.subr.bf16.mxu0 0
        %3057 = vmatpush1.bf16.msra.mxu0 %v2373
        %3058 = vmatprep.subr.bf16.mxu0 0
        %3059 = vmatpush1.bf16.msra.mxu0 %v2376
        %3060 = vmatprep.subr.bf16.mxu0 0
        %3061 = vmatpush1.bf16.msra.mxu0 %v2379
        %3062 = vmatprep.subr.bf16.mxu0 0
        %3063 = vmatpush1.bf16.msra.mxu0 %v2382
        %3064 = vmatprep.subr.bf16.mxu0 0
        %3065 = vmatpush1.bf16.msra.mxu0 %v2385
        %3066 = vmatprep.subr.bf16.mxu0 0
        %3067 = vmatpush1.bf16.msra.mxu0 %v2388
        %3068 = vmatprep.subr.bf16.mxu0 0
        %3069 = vmatpush1.bf16.msra.mxu0 %v2391
        %3070 = vmatprep.subr.bf16.mxu0 0
        %3071 = vmatpush1.bf16.msra.mxu0 %v2394
        %3072 = vmatprep.subr.bf16.mxu0 0
        %3073 = vmatpush1.bf16.msra.mxu0 %v2397
        %3074 = vmatprep.subr.bf16.mxu0 0
        %3075 = vmatpush1.bf16.msra.mxu0 %v2400
        %3076 = vmatprep.subr.bf16.mxu0 0
        %3077 = vmatpush1.bf16.msra.mxu0 %v2403
        %3078 = vmatprep.subr.bf16.mxu0 0
        %3079 = vmatpush1.bf16.msra.mxu0 %v2406
        %3080 = vmatprep.subr.bf16.mxu0 0
        %3081 = vmatpush1.bf16.msra.mxu0 %v2409
        %3082 = vmatprep.subr.bf16.mxu0 0
        %3083 = vmatpush1.bf16.msra.mxu0 %v2412
        %3084 = vmatprep.subr.bf16.mxu0 0
        %3085 = vmatpush1.bf16.msra.mxu0 %v2415
        %3086 = vmatprep.subr.bf16.mxu0 0
        %3087 = vmatpush1.bf16.msra.mxu0 %v2418
        %3088 = vmatprep.mubr.bf16.mxu0 %v1552
        %3089 = vmatmul.mubr.bf16.gmra.mrb[0].mxu0 %v1551
        %v3090 = vpop.f32.mrb[0].mxu0
        %v3091 = vadd.f32 %v1434, %v3090
        %v3092 = vpop.f32.mrb[0].mxu0
        %v3093 = vpop.f32.mrb[0].mxu0
        %v3094 = vpop.f32.mrb[0].mxu0
        %3095 = vdwg.mxu0
        %3096 = vmatprep.subr.bf16.mxu0 0
        %3097 = vmatpush1.bf16.msra.mxu0 %v2421
        %3098 = vmatprep.subr.bf16.mxu0 0
        %3099 = vmatpush1.bf16.msra.mxu0 %v2424
        %3100 = vmatprep.subr.bf16.mxu0 0
        %3101 = vmatpush1.bf16.msra.mxu0 %v2427
        %3102 = vmatprep.subr.bf16.mxu0 0
        %3103 = vmatpush1.bf16.msra.mxu0 %v2430
        %3104 = vmatprep.subr.bf16.mxu0 0
        %3105 = vmatpush1.bf16.msra.mxu0 %v2433
        %3106 = vmatprep.subr.bf16.mxu0 0
        %3107 = vmatpush1.bf16.msra.mxu0 %v2436
        %3108 = vmatprep.subr.bf16.mxu0 0
        %3109 = vmatpush1.bf16.msra.mxu0 %v2439
        %3110 = vmatprep.subr.bf16.mxu0 0
        %3111 = vmatpush1.bf16.msra.mxu0 %v2442
        %3112 = vmatprep.subr.bf16.mxu0 0
        %3113 = vmatpush1.bf16.msra.mxu0 %v2445
        %3114 = vmatprep.subr.bf16.mxu0 0
        %3115 = vmatpush1.bf16.msra.mxu0 %v2448
        %3116 = vmatprep.subr.bf16.mxu0 0
        %3117 = vmatpush1.bf16.msra.mxu0 %v2451
        %3118 = vmatprep.subr.bf16.mxu0 0
        %3119 = vmatpush1.bf16.msra.mxu0 %v2454
        %3120 = vmatprep.subr.bf16.mxu0 0
        %3121 = vmatpush1.bf16.msra.mxu0 %v2457
        %3122 = vmatprep.subr.bf16.mxu0 0
        %3123 = vmatpush1.bf16.msra.mxu0 %v2460
        %3124 = vmatprep.subr.bf16.mxu0 0
        %3125 = vmatpush1.bf16.msra.mxu0 %v2463
        %3126 = vmatprep.subr.bf16.mxu0 0
        %3127 = vmatpush1.bf16.msra.mxu0 %v2466
        %3128 = vmatprep.mubr.bf16.mxu0 %v1554
        %3129 = vmatmul.mubr.bf16.gmra.mrb[0].mxu0 %v1553
        %v3130 = vpop.f32.mrb[0].mxu0
        %v3131 = vadd.f32 %v3091, %v3130
        %v3132 = vpop.f32.mrb[0].mxu0
        %v3133 = vpop.f32.mrb[0].mxu0
        %v3134 = vpop.f32.mrb[0].mxu0
        %3135 = vdwg.mxu0
        %3136 = vmatprep.subr.bf16.mxu0 0
        %3137 = vmatpush1.bf16.msra.mxu0 %v2469
        %3138 = vmatprep.subr.bf16.mxu0 0
        %3139 = vmatpush1.bf16.msra.mxu0 %v2472
        %3140 = vmatprep.subr.bf16.mxu0 0
        %3141 = vmatpush1.bf16.msra.mxu0 %v2475
        %3142 = vmatprep.subr.bf16.mxu0 0
        %3143 = vmatpush1.bf16.msra.mxu0 %v2478
        %3144 = vmatprep.subr.bf16.mxu0 0
        %3145 = vmatpush1.bf16.msra.mxu0 %v2481
        %3146 = vmatprep.subr.bf16.mxu0 0
        %3147 = vmatpush1.bf16.msra.mxu0 %v2484
        %3148 = vmatprep.subr.bf16.mxu0 0
        %3149 = vmatpush1.bf16.msra.mxu0 %v2487
        %3150 = vmatprep.subr.bf16.mxu0 0
        %3151 = vmatpush1.bf16.msra.mxu0 %v2490
        %3152 = vmatprep.subr.bf16.mxu0 0
        %3153 = vmatpush1.bf16.msra.mxu0 %v2493
        %3154 = vmatprep.subr.bf16.mxu0 0
        %3155 = vmatpush1.bf16.msra.mxu0 %v2496
        %3156 = vmatprep.subr.bf16.mxu0 0
        %3157 = vmatpush1.bf16.msra.mxu0 %v2499
        %3158 = vmatprep.subr.bf16.mxu0 0
        %3159 = vmatpush1.bf16.msra.mxu0 %v2502
        %3160 = vmatprep.subr.bf16.mxu0 0
        %3161 = vmatpush1.bf16.msra.mxu0 %v2505
        %3162 = vmatprep.subr.bf16.mxu0 0
        %3163 = vmatpush1.bf16.msra.mxu0 %v2508
        %3164 = vmatprep.subr.bf16.mxu0 0
        %3165 = vmatpush1.bf16.msra.mxu0 %v2511
        %3166 = vmatprep.subr.bf16.mxu0 0
        %3167 = vmatpush1.bf16.msra.mxu0 %v2514
        %3168 = vmatprep.mubr.bf16.mxu0 %v1556
        %3169 = vmatmul.mubr.bf16.gmra.mrb[0].mxu0 %v1555
        %v3170 = vpop.f32.mrb[0].mxu0
        %v3171 = vadd.f32 %v3131, %v3170
        %v3172 = vpop.f32.mrb[0].mxu0
        %v3173 = vpop.f32.mrb[0].mxu0
        %v3174 = vpop.f32.mrb[0].mxu0
        %3175 = vdwg.mxu0
        %3176 = vmatprep.subr.bf16.mxu0 0
        %3177 = vmatpush1.bf16.msra.mxu0 %v2517
        %3178 = vmatprep.subr.bf16.mxu0 0
        %3179 = vmatpush1.bf16.msra.mxu0 %v2520
        %3180 = vmatprep.subr.bf16.mxu0 0
        %3181 = vmatpush1.bf16.msra.mxu0 %v2523
        %3182 = vmatprep.subr.bf16.mxu0 0
        %3183 = vmatpush1.bf16.msra.mxu0 %v2526
        %3184 = vmatprep.subr.bf16.mxu0 0
        %3185 = vmatpush1.bf16.msra.mxu0 %v2529
        %3186 = vmatprep.subr.bf16.mxu0 0
        %3187 = vmatpush1.bf16.msra.mxu0 %v2532
        %3188 = vmatprep.subr.bf16.mxu0 0
        %3189 = vmatpush1.bf16.msra.mxu0 %v2535
        %3190 = vmatprep.subr.bf16.mxu0 0
        %3191 = vmatpush1.bf16.msra.mxu0 %v2538
        %3192 = vmatprep.subr.bf16.mxu0 0
        %3193 = vmatpush1.bf16.msra.mxu0 %v2541
        %3194 = vmatprep.subr.bf16.mxu0 0
        %3195 = vmatpush1.bf16.msra.mxu0 %v2544
        %3196 = vmatprep.subr.bf16.mxu0 0
        %3197 = vmatpush1.bf16.msra.mxu0 %v2547
        %3198 = vmatprep.subr.bf16.mxu0 0
        %3199 = vmatpush1.bf16.msra.mxu0 %v2550
        %3200 = vmatprep.subr.bf16.mxu0 0
        %3201 = vmatpush1.bf16.msra.mxu0 %v2553
        %3202 = vmatprep.subr.bf16.mxu0 0
        %3203 = vmatpush1.bf16.msra.mxu0 %v2556
        %3204 = vmatprep.subr.bf16.mxu0 0
        %3205 = vmatpush1.bf16.msra.mxu0 %v2559
        %3206 = vmatprep.subr.bf16.mxu0 0
        %3207 = vmatpush1.bf16.msra.mxu0 %v2562
        %3208 = vmatprep.mubr.bf16.mxu0 %v1558
        %3209 = vmatmul.mubr.bf16.gmra.mrb[0].mxu0 %v1557
        %v3210 = vpop.f32.mrb[0].mxu0
        %v3211 = vadd.f32 %v3171, %v3210
        %v3212 = vpop.f32.mrb[0].mxu0
        %v3213 = vpop.f32.mrb[0].mxu0
        %v3214 = vpop.f32.mrb[0].mxu0
        %3215 = vdwg.mxu0
        %3216 = vmatprep.subr.bf16.mxu0 0
        %3217 = vmatpush1.bf16.msra.mxu0 %v2565
        %3218 = vmatprep.subr.bf16.mxu0 0
        %3219 = vmatpush1.bf16.msra.mxu0 %v2568
        %3220 = vmatprep.subr.bf16.mxu0 0
        %3221 = vmatpush1.bf16.msra.mxu0 %v2571
        %3222 = vmatprep.subr.bf16.mxu0 0
        %3223 = vmatpush1.bf16.msra.mxu0 %v2574
        %3224 = vmatprep.subr.bf16.mxu0 0
        %3225 = vmatpush1.bf16.msra.mxu0 %v2577
        %3226 = vmatprep.subr.bf16.mxu0 0
        %3227 = vmatpush1.bf16.msra.mxu0 %v2580
        %3228 = vmatprep.subr.bf16.mxu0 0
        %3229 = vmatpush1.bf16.msra.mxu0 %v2583
        %3230 = vmatprep.subr.bf16.mxu0 0
        %3231 = vmatpush1.bf16.msra.mxu0 %v2586
        %3232 = vmatprep.subr.bf16.mxu0 0
        %3233 = vmatpush1.bf16.msra.mxu0 %v2589
        %3234 = vmatprep.subr.bf16.mxu0 0
        %3235 = vmatpush1.bf16.msra.mxu0 %v2592
        %3236 = vmatprep.subr.bf16.mxu0 0
        %3237 = vmatpush1.bf16.msra.mxu0 %v2595
        %3238 = vmatprep.subr.bf16.mxu0 0
        %3239 = vmatpush1.bf16.msra.mxu0 %v2598
        %3240 = vmatprep.subr.bf16.mxu0 0
        %3241 = vmatpush1.bf16.msra.mxu0 %v2601
        %3242 = vmatprep.subr.bf16.mxu0 0
        %3243 = vmatpush1.bf16.msra.mxu0 %v2604
        %3244 = vmatprep.subr.bf16.mxu0 0
        %3245 = vmatpush1.bf16.msra.mxu0 %v2607
        %3246 = vmatprep.subr.bf16.mxu0 0
        %3247 = vmatpush1.bf16.msra.mxu0 %v2610
        %3248 = vmatprep.mubr.bf16.mxu0 %v1560
        %3249 = vmatmul.mubr.bf16.gmra.mrb[0].mxu0 %v1559
        %v3250 = vpop.f32.mrb[0].mxu0
        %v3251 = vadd.f32 %v3211, %v3250
        %v3252 = vpop.f32.mrb[0].mxu0
        %v3253 = vpop.f32.mrb[0].mxu0
        %v3254 = vpop.f32.mrb[0].mxu0
        %3255 = vdwg.mxu0
        %v3256 = vld [vmem:[#allocation7] sm:$0xff]
        %v3257 = vld [vmem:[#allocation7 + $0x8] sm:$0xf]
        %v3258 = vld [vmem:[#allocation7 + $0xc] sm:$0xff]
        %v3259 = vld [vmem:[#allocation7 + $0x14] sm:$0xf]
        %v3260 = vld [vmem:[#allocation7 + $0x18] sm:$0xff]
        %v3261 = vld [vmem:[#allocation7 + $0x20] sm:$0xf]
        %v3262 = vld [vmem:[#allocation7 + $0x24] sm:$0xff]
        %v3263 = vld [vmem:[#allocation7 + $0x2c] sm:$0xf]
        %v3264 = vld [vmem:[#allocation7 + $0x30] sm:$0xff]
        %v3265 = vld [vmem:[#allocation7 + $0x38] sm:$0xf]
        %v3266 = vld [vmem:[#allocation7 + $0x3c] sm:$0xff]
        %v3267 = vld [vmem:[#allocation7 + $0x44] sm:$0xf]
        %v3268 = vld [vmem:[#allocation7 + $0x48] sm:$0xff]
        %v3269 = vld [vmem:[#allocation7 + $0x50] sm:$0xf]
        %v3270 = vld [vmem:[#allocation7 + $0x54] sm:$0xff]
        %v3271 = vld [vmem:[#allocation7 + $0x5c] sm:$0xf]
        %v3272 = vld [vmem:[#allocation7 + $0x60] sm:$0xff]
        %v3273 = vld [vmem:[#allocation7 + $0x68] sm:$0xf]
        %v3274 = vld [vmem:[#allocation7 + $0x6c] sm:$0xff]
        %v3275 = vld [vmem:[#allocation7 + $0x74] sm:$0xf]
        %v3276 = vld [vmem:[#allocation7 + $0x78] sm:$0xff]
        %v3277 = vld [vmem:[#allocation7 + $0x80] sm:$0xf]
        %v3278 = vld [vmem:[#allocation7 + $0x84] sm:$0xff]
        %v3279 = vld [vmem:[#allocation7 + $0x8c] sm:$0xf]
        %v3280 = vld [vmem:[#allocation7 + $0x90] sm:$0xff]
        %v3281 = vld [vmem:[#allocation7 + $0x98] sm:$0xf]
        %v3282 = vld [vmem:[#allocation7 + $0x9c] sm:$0xff]
        %v3283 = vld [vmem:[#allocation7 + $0xa4] sm:$0xf]
        %v3284 = vld [vmem:[#allocation7 + $0xa8] sm:$0xff]
        %v3285 = vld [vmem:[#allocation7 + $0xb0] sm:$0xf]
        %v3286 = vld [vmem:[#allocation7 + $0xb4] sm:$0xff]
        %v3287 = vld [vmem:[#allocation7 + $0xbc] sm:$0xf]
        %v3288 = vld [vmem:[%s4] sm:$0x1]
        %v3321 = vunpack.c.l.b16 %v3256
        %v3322 = vunpack.c.h.b16 %v3256
        %v3323 = vunpack.c.l.b16 %v3257
        %v3324 = vunpack.c.l.b16 %v3258
        %v3325 = vunpack.c.h.b16 %v3258
        %v3326 = vunpack.c.l.b16 %v3259
        %v3327 = vunpack.c.l.b16 %v3260
        %v3328 = vunpack.c.h.b16 %v3260
        %v3329 = vunpack.c.l.b16 %v3261
        %v3330 = vunpack.c.l.b16 %v3262
        %v3331 = vunpack.c.h.b16 %v3262
        %v3332 = vunpack.c.l.b16 %v3263
        %v3333 = vunpack.c.l.b16 %v3264
        %v3334 = vunpack.c.h.b16 %v3264
        %v3335 = vunpack.c.l.b16 %v3265
        %v3336 = vunpack.c.l.b16 %v3266
        %v3337 = vunpack.c.h.b16 %v3266
        %v3338 = vunpack.c.l.b16 %v3267
        %v3339 = vunpack.c.l.b16 %v3268
        %v3340 = vunpack.c.h.b16 %v3268
        %v3341 = vunpack.c.l.b16 %v3269
        %v3342 = vunpack.c.l.b16 %v3270
        %v3343 = vunpack.c.h.b16 %v3270
        %v3344 = vunpack.c.l.b16 %v3271
        %v3345 = vunpack.c.l.b16 %v3272
        %v3346 = vunpack.c.h.b16 %v3272
        %v3347 = vunpack.c.l.b16 %v3273
        %v3348 = vunpack.c.l.b16 %v3274
        %v3349 = vunpack.c.h.b16 %v3274
        %v3350 = vunpack.c.l.b16 %v3275
        %v3351 = vunpack.c.l.b16 %v3276
        %v3352 = vunpack.c.h.b16 %v3276
        %v3353 = vunpack.c.l.b16 %v3277
        %v3354 = vunpack.c.l.b16 %v3278
        %v3355 = vunpack.c.h.b16 %v3278
        %v3356 = vunpack.c.l.b16 %v3279
        %v3357 = vunpack.c.l.b16 %v3280
        %v3358 = vunpack.c.h.b16 %v3280
        %v3359 = vunpack.c.l.b16 %v3281
        %v3360 = vunpack.c.l.b16 %v3282
        %v3361 = vunpack.c.h.b16 %v3282
        %v3362 = vunpack.c.l.b16 %v3283
        %v3363 = vunpack.c.l.b16 %v3284
        %v3364 = vunpack.c.h.b16 %v3284
        %v3365 = vunpack.c.l.b16 %v3285
        %v3366 = vunpack.c.l.b16 %v3286
        %v3367 = vunpack.c.h.b16 %v3286
        %v3368 = vunpack.c.l.b16 %v3287
        %v3369 = vpack.c.b16 %v3324, %v3321
        %v3370 = vpack.c.b16 %v3325, %v3322
        %v3371 = vpack.c.b16 %v3326, %v3323
        %v3372 = vpack.c.b16 %v3330, %v3327
        %v3373 = vpack.c.b16 %v3331, %v3328
        %v3374 = vpack.c.b16 %v3332, %v3329
        %v3375 = vpack.c.b16 %v3336, %v3333
        %v3376 = vpack.c.b16 %v3337, %v3334
        %v3377 = vpack.c.b16 %v3338, %v3335
        %v3378 = vpack.c.b16 %v3342, %v3339
        %v3379 = vpack.c.b16 %v3343, %v3340
        %v3380 = vpack.c.b16 %v3344, %v3341
        %v3381 = vpack.c.b16 %v3348, %v3345
        %v3382 = vpack.c.b16 %v3349, %v3346
        %v3383 = vpack.c.b16 %v3350, %v3347
        %v3384 = vpack.c.b16 %v3354, %v3351
        %v3385 = vpack.c.b16 %v3355, %v3352
        %v3386 = vpack.c.b16 %v3356, %v3353
        %v3387 = vpack.c.b16 %v3360, %v3357
        %v3388 = vpack.c.b16 %v3361, %v3358
        %v3389 = vpack.c.b16 %v3362, %v3359
        %v3390 = vpack.c.b16 %v3366, %v3363
        %v3391 = vpack.c.b16 %v3367, %v3364
        %v3392 = vpack.c.b16 %v3368, %v3365
        %3417 = vmatprep.subr.bf16.mxu0 %v3370
        %3418 = vmatpush1.bf16.msra.mxu0 %v3369
        %3419 = vmatprep.subr.bf16.mxu0 %v3373
        %3420 = vmatpush1.bf16.msra.mxu0 %v3372
        %3421 = vmatprep.subr.bf16.mxu0 %v3376
        %3422 = vmatpush1.bf16.msra.mxu0 %v3375
        %3423 = vmatprep.subr.bf16.mxu0 %v3379
        %3424 = vmatpush1.bf16.msra.mxu0 %v3378
        %3425 = vmatprep.subr.bf16.mxu0 %v3382
        %3426 = vmatpush1.bf16.msra.mxu0 %v3381
        %3427 = vmatprep.subr.bf16.mxu0 %v3385
        %3428 = vmatpush1.bf16.msra.mxu0 %v3384
        %3429 = vmatprep.subr.bf16.mxu0 %v3388
        %3430 = vmatpush1.bf16.msra.mxu0 %v3387
        %3431 = vmatprep.subr.bf16.mxu0 %v3391
        %3432 = vmatpush1.bf16.msra.mxu0 %v3390
        %3433 = vmatprep.subr.bf16.mxu0 0
        %3434 = vmatpush1.bf16.msra.mxu0 0
        %3435 = vmatprep.subr.bf16.mxu0 0
        %3436 = vmatpush1.bf16.msra.mxu0 0
        %3437 = vmatprep.subr.bf16.mxu0 0
        %3438 = vmatpush1.bf16.msra.mxu0 0
        %3439 = vmatprep.subr.bf16.mxu0 0
        %3440 = vmatpush1.bf16.msra.mxu0 0
        %3441 = vmatprep.subr.bf16.mxu0 0
        %3442 = vmatpush1.bf16.msra.mxu0 0
        %3443 = vmatprep.subr.bf16.mxu0 0
        %3444 = vmatpush1.bf16.msra.mxu0 0
        %3445 = vmatprep.subr.bf16.mxu0 0
        %3446 = vmatpush1.bf16.msra.mxu0 0
        %3447 = vmatprep.subr.bf16.mxu0 0
        %3448 = vmatpush1.bf16.msra.mxu0 0
        %3449 = vmatprep.mubr.bf16.mxu0 0
        %3450 = vmatmul.mubr.bf16.gmra.mrb[0].mxu0 0
        %v3451 = vpop.f32.mrb[0].mxu0
        %v3452 = vadd.f32 0.0, %v3451
        %v3453 = vpop.f32.mrb[0].mxu0
        %v3454 = vadd.f32 0.0, %v3453
        %v3455 = vpop.f32.mrb[0].mxu0
        %v3456 = vpop.f32.mrb[0].mxu0
        %3457 = vdwg.mxu0
        %3458 = vmatprep.subr.bf16.mxu0 0
        %3459 = vmatpush1.bf16.msra.mxu0 %v3371
        %3460 = vmatprep.subr.bf16.mxu0 0
        %3461 = vmatpush1.bf16.msra.mxu0 %v3374
        %3462 = vmatprep.subr.bf16.mxu0 0
        %3463 = vmatpush1.bf16.msra.mxu0 %v3377
        %3464 = vmatprep.subr.bf16.mxu0 0
        %3465 = vmatpush1.bf16.msra.mxu0 %v3380
        %3466 = vmatprep.subr.bf16.mxu0 0
        %3467 = vmatpush1.bf16.msra.mxu0 %v3383
        %3468 = vmatprep.subr.bf16.mxu0 0
        %3469 = vmatpush1.bf16.msra.mxu0 %v3386
        %3470 = vmatprep.subr.bf16.mxu0 0
        %3471 = vmatpush1.bf16.msra.mxu0 %v3389
        %3472 = vmatprep.subr.bf16.mxu0 0
        %3473 = vmatpush1.bf16.msra.mxu0 %v3392
        %3474 = vmatprep.subr.bf16.mxu0 0
        %3475 = vmatpush1.bf16.msra.mxu0 0
        %3476 = vmatprep.subr.bf16.mxu0 0
        %3477 = vmatpush1.bf16.msra.mxu0 0
        %3478 = vmatprep.subr.bf16.mxu0 0
        %3479 = vmatpush1.bf16.msra.mxu0 0
        %3480 = vmatprep.subr.bf16.mxu0 0
        %3481 = vmatpush1.bf16.msra.mxu0 0
        %3482 = vmatprep.subr.bf16.mxu0 0
        %3483 = vmatpush1.bf16.msra.mxu0 0
        %3484 = vmatprep.subr.bf16.mxu0 0
        %3485 = vmatpush1.bf16.msra.mxu0 0
        %3486 = vmatprep.subr.bf16.mxu0 0
        %3487 = vmatpush1.bf16.msra.mxu0 0
        %3488 = vmatprep.subr.bf16.mxu0 0
        %3489 = vmatpush1.bf16.msra.mxu0 0
        %3490 = vmatprep.mubr.bf16.mxu0 0
        %3491 = vmatmul.mubr.bf16.gmra.mrb[0].mxu0 0
        %v3492 = vpop.f32.mrb[0].mxu0
        %v3493 = vadd.f32 0.0, %v3492
        %v3494 = vpop.f32.mrb[0].mxu0
        %v3495 = vpop.f32.mrb[0].mxu0
        %v3496 = vpop.f32.mrb[0].mxu0
        %3497 = vdwg.mxu0
        %v3498 = vadd.f32 %v3050, %v3452
        %v3499 = vxor.u32 %v3498, 2147483648
        %v3500 = vmul.f32 %v3499, 1.442695
        %v3501 = vpow.pop %v3500
        %v3502 = vadd.f32 %v3501, 1.0
        %v3503 = vrcp.pop %v3502
        %v3504 = vmul.f32 1.0, %v3503
        %v3505 = vadd.f32 %v3052, %v3454
        %v3506 = vxor.u32 %v3505, 2147483648
        %v3507 = vmul.f32 %v3506, 1.442695
        %v3508 = vpow.pop %v3507
        %v3509 = vadd.f32 %v3508, 1.0
        %v3510 = vrcp.pop %v3509
        %v3511 = vmul.f32 1.0, %v3510
        %v3512 = vadd.f32 %v3493, %v3288
        %v3513 = vmul.f32 %v3504, %v3512
        %v3514 = vadd.f32 %v3251, %v3513
        %v3515 = vtanh.pop %v3514
        %v3516 = vsub.f32 1.0, %v3511
        %v3517 = vmul.f32 %v3516, %v3515
        %v3518 = vmul.f32 %v3511, 0.0
        %v3519 = vadd.f32 %v3517, %v3518
        %v3520 = vpack.c.bf16 %v3519, %v3519
        %3521 = vmatprep.subr.bf16.mxu0 %v3370
        %3522 = vmatpush1.bf16.msra.mxu0 %v3369
        %3523 = vmatprep.subr.bf16.mxu0 %v3373
        %3524 = vmatpush1.bf16.msra.mxu0 %v3372
        %3525 = vmatprep.subr.bf16.mxu0 %v3376
        %3526 = vmatpush1.bf16.msra.mxu0 %v3375
        %3527 = vmatprep.subr.bf16.mxu0 %v3379
        %3528 = vmatpush1.bf16.msra.mxu0 %v3378
        %3529 = vmatprep.subr.bf16.mxu0 %v3382
        %3530 = vmatpush1.bf16.msra.mxu0 %v3381
        %3531 = vmatprep.subr.bf16.mxu0 %v3385
        %3532 = vmatpush1.bf16.msra.mxu0 %v3384
        %3533 = vmatprep.subr.bf16.mxu0 %v3388
        %3534 = vmatpush1.bf16.msra.mxu0 %v3387
        %3535 = vmatprep.subr.bf16.mxu0 %v3391
        %3536 = vmatpush1.bf16.msra.mxu0 %v3390
        %3537 = vmatprep.subr.bf16.mxu0 0
        %3538 = vmatpush1.bf16.msra.mxu0 0
        %3539 = vmatprep.subr.bf16.mxu0 0
        %3540 = vmatpush1.bf16.msra.mxu0 0
        %3541 = vmatprep.subr.bf16.mxu0 0
        %3542 = vmatpush1.bf16.msra.mxu0 0
        %3543 = vmatprep.subr.bf16.mxu0 0
        %3544 = vmatpush1.bf16.msra.mxu0 0
        %3545 = vmatprep.subr.bf16.mxu0 0
        %3546 = vmatpush1.bf16.msra.mxu0 0
        %3547 = vmatprep.subr.bf16.mxu0 0
        %3548 = vmatpush1.bf16.msra.mxu0 0
        %3549 = vmatprep.subr.bf16.mxu0 0
        %3550 = vmatpush1.bf16.msra.mxu0 0
        %3551 = vmatprep.subr.bf16.mxu0 0
        %3552 = vmatpush1.bf16.msra.mxu0 0
        %3553 = vmatprep.mubr.bf16.mxu0 0
        %3554 = vmatmul.mubr.bf16.gmra.mrb[0].mxu0 %v3520
        %v3555 = vpop.f32.mrb[0].mxu0
        %v3556 = vadd.f32 0.0, %v3555
        %v3557 = vpop.f32.mrb[0].mxu0
        %v3558 = vadd.f32 0.0, %v3557
        %v3559 = vpop.f32.mrb[0].mxu0
        %v3560 = vpop.f32.mrb[0].mxu0
        %3561 = vdwg.mxu0
        %3562 = vmatprep.subr.bf16.mxu0 0
        %3563 = vmatpush1.bf16.msra.mxu0 %v3371
        %3564 = vmatprep.subr.bf16.mxu0 0
        %3565 = vmatpush1.bf16.msra.mxu0 %v3374
        %3566 = vmatprep.subr.bf16.mxu0 0
        %3567 = vmatpush1.bf16.msra.mxu0 %v3377
        %3568 = vmatprep.subr.bf16.mxu0 0
        %3569 = vmatpush1.bf16.msra.mxu0 %v3380
        %3570 = vmatprep.subr.bf16.mxu0 0
        %3571 = vmatpush1.bf16.msra.mxu0 %v3383
        %3572 = vmatprep.subr.bf16.mxu0 0
        %3573 = vmatpush1.bf16.msra.mxu0 %v3386
        %3574 = vmatprep.subr.bf16.mxu0 0
        %3575 = vmatpush1.bf16.msra.mxu0 %v3389
        %3576 = vmatprep.subr.bf16.mxu0 0
        %3577 = vmatpush1.bf16.msra.mxu0 %v3392
        %3578 = vmatprep.subr.bf16.mxu0 0
        %3579 = vmatpush1.bf16.msra.mxu0 0
        %3580 = vmatprep.subr.bf16.mxu0 0
        %3581 = vmatpush1.bf16.msra.mxu0 0
        %3582 = vmatprep.subr.bf16.mxu0 0
        %3583 = vmatpush1.bf16.msra.mxu0 0
        %3584 = vmatprep.subr.bf16.mxu0 0
        %3585 = vmatpush1.bf16.msra.mxu0 0
        %3586 = vmatprep.subr.bf16.mxu0 0
        %3587 = vmatpush1.bf16.msra.mxu0 0
        %3588 = vmatprep.subr.bf16.mxu0 0
        %3589 = vmatpush1.bf16.msra.mxu0 0
        %3590 = vmatprep.subr.bf16.mxu0 0
        %3591 = vmatpush1.bf16.msra.mxu0 0
        %3592 = vmatprep.subr.bf16.mxu0 0
        %3593 = vmatpush1.bf16.msra.mxu0 0
        %3594 = vmatprep.mubr.bf16.mxu0 0
        %3595 = vmatmul.mubr.bf16.gmra.mrb[0].mxu0 %v3520
        %v3596 = vpop.f32.mrb[0].mxu0
        %v3597 = vadd.f32 0.0, %v3596
        %v3598 = vpop.f32.mrb[0].mxu0
        %v3599 = vpop.f32.mrb[0].mxu0
        %v3600 = vpop.f32.mrb[0].mxu0
        %3601 = vdwg.mxu0
        %v3603 = vrot.slane %v3556, 7
        %v3605 = vadd.f32 %v3050, %v3603
        %v3606 = vxor.u32 %v3605, 2147483648
        %v3607 = vmul.f32 %v3606, 1.442695
        %v3608 = vpow.pop %v3607
        %v3609 = vadd.f32 %v3608, 1.0
        %v3610 = vrcp.pop %v3609
        %v3611 = vmul.f32 1.0, %v3610
        %v3613 = vrot.slane %v3558, 7
        %v3615 = vadd.f32 %v3052, %v3613
        %v3616 = vxor.u32 %v3615, 2147483648
        %v3617 = vmul.f32 %v3616, 1.442695
        %v3618 = vpow.pop %v3617
        %v3619 = vadd.f32 %v3618, 1.0
        %v3620 = vrcp.pop %v3619
        %v3621 = vmul.f32 1.0, %v3620
        %v3622 = vadd.f32 %v3597, %v3288
        %v3624 = vrot.slane %v3622, 7
        %v3626 = vmul.f32 %v3611, %v3624
        %v3627 = vadd.f32 %v3251, %v3626
        %v3628 = vtanh.pop %v3627
        %v3629 = vsub.f32 1.0, %v3621
        %v3630 = vmul.f32 %v3629, %v3628
        %v3632 = vrot.slane %v3519, 7
        %v3634 = vmul.f32 %v3621, %v3632
        %v3635 = vadd.f32 %v3630, %v3634
        %v3636 = vpack.c.bf16 %v3635, %v3635
        %v3638 = vshrl.u32 %v3636, 16
        %3641 = vmatprep.subr.bf16.mxu0 %v3370
        %3642 = vmatpush1.bf16.msra.mxu0 %v3369
        %3643 = vmatprep.subr.bf16.mxu0 %v3373
        %3644 = vmatpush1.bf16.msra.mxu0 %v3372
        %3645 = vmatprep.subr.bf16.mxu0 %v3376
        %3646 = vmatpush1.bf16.msra.mxu0 %v3375
        %3647 = vmatprep.subr.bf16.mxu0 %v3379
        %3648 = vmatpush1.bf16.msra.mxu0 %v3378
        %3649 = vmatprep.subr.bf16.mxu0 %v3382
        %3650 = vmatpush1.bf16.msra.mxu0 %v3381
        %3651 = vmatprep.subr.bf16.mxu0 %v3385
        %3652 = vmatpush1.bf16.msra.mxu0 %v3384
        %3653 = vmatprep.subr.bf16.mxu0 %v3388
        %3654 = vmatpush1.bf16.msra.mxu0 %v3387
        %3655 = vmatprep.subr.bf16.mxu0 %v3391
        %3656 = vmatpush1.bf16.msra.mxu0 %v3390
        %3657 = vmatprep.subr.bf16.mxu0 0
        %3658 = vmatpush1.bf16.msra.mxu0 0
        %3659 = vmatprep.subr.bf16.mxu0 0
        %3660 = vmatpush1.bf16.msra.mxu0 0
        %3661 = vmatprep.subr.bf16.mxu0 0
        %3662 = vmatpush1.bf16.msra.mxu0 0
        %3663 = vmatprep.subr.bf16.mxu0 0
        %3664 = vmatpush1.bf16.msra.mxu0 0
        %3665 = vmatprep.subr.bf16.mxu0 0
        %3666 = vmatpush1.bf16.msra.mxu0 0
        %3667 = vmatprep.subr.bf16.mxu0 0
        %3668 = vmatpush1.bf16.msra.mxu0 0
        %3669 = vmatprep.subr.bf16.mxu0 0
        %3670 = vmatpush1.bf16.msra.mxu0 0
        %3671 = vmatprep.subr.bf16.mxu0 0
        %3672 = vmatpush1.bf16.msra.mxu0 0
        %3673 = vmatprep.mubr.bf16.mxu0 0
        %3674 = vmatmul.mubr.bf16.gmra.mrb[0].mxu0 %v3638
        %v3675 = vpop.f32.mrb[0].mxu0
        %v3676 = vadd.f32 0.0, %v3675
        %v3677 = vpop.f32.mrb[0].mxu0
        %v3678 = vadd.f32 0.0, %v3677
        %v3679 = vpop.f32.mrb[0].mxu0
        %v3680 = vpop.f32.mrb[0].mxu0
        %3681 = vdwg.mxu0
        %3682 = vmatprep.subr.bf16.mxu0 0
        %3683 = vmatpush1.bf16.msra.mxu0 %v3371
        %3684 = vmatprep.subr.bf16.mxu0 0
        %3685 = vmatpush1.bf16.msra.mxu0 %v3374
        %3686 = vmatprep.subr.bf16.mxu0 0
        %3687 = vmatpush1.bf16.msra.mxu0 %v3377
        %3688 = vmatprep.subr.bf16.mxu0 0
        %3689 = vmatpush1.bf16.msra.mxu0 %v3380
        %3690 = vmatprep.subr.bf16.mxu0 0
        %3691 = vmatpush1.bf16.msra.mxu0 %v3383
        %3692 = vmatprep.subr.bf16.mxu0 0
        %3693 = vmatpush1.bf16.msra.mxu0 %v3386
        %3694 = vmatprep.subr.bf16.mxu0 0
        %3695 = vmatpush1.bf16.msra.mxu0 %v3389
        %3696 = vmatprep.subr.bf16.mxu0 0
        %3697 = vmatpush1.bf16.msra.mxu0 %v3392
        %3698 = vmatprep.subr.bf16.mxu0 0
        %3699 = vmatpush1.bf16.msra.mxu0 0
        %3700 = vmatprep.subr.bf16.mxu0 0
        %3701 = vmatpush1.bf16.msra.mxu0 0
        %3702 = vmatprep.subr.bf16.mxu0 0
        %3703 = vmatpush1.bf16.msra.mxu0 0
        %3704 = vmatprep.subr.bf16.mxu0 0
        %3705 = vmatpush1.bf16.msra.mxu0 0
        %3706 = vmatprep.subr.bf16.mxu0 0
        %3707 = vmatpush1.bf16.msra.mxu0 0
        %3708 = vmatprep.subr.bf16.mxu0 0
        %3709 = vmatpush1.bf16.msra.mxu0 0
        %3710 = vmatprep.subr.bf16.mxu0 0
        %3711 = vmatpush1.bf16.msra.mxu0 0
        %3712 = vmatprep.subr.bf16.mxu0 0
        %3713 = vmatpush1.bf16.msra.mxu0 0
        %3714 = vmatprep.mubr.bf16.mxu0 0
        %3715 = vmatmul.mubr.bf16.gmra.mrb[0].mxu0 %v3638
        %v3716 = vpop.f32.mrb[0].mxu0
        %v3717 = vadd.f32 0.0, %v3716
        %v3718 = vpop.f32.mrb[0].mxu0
        %v3719 = vpop.f32.mrb[0].mxu0
        %v3720 = vpop.f32.mrb[0].mxu0
        %3721 = vdwg.mxu0
        %v3723 = vrot.slane %v3676, 6
        %v3725 = vadd.f32 %v3050, %v3723
        %v3726 = vxor.u32 %v3725, 2147483648
        %v3727 = vmul.f32 %v3726, 1.442695
        %v3728 = vpow.pop %v3727
        %v3729 = vadd.f32 %v3728, 1.0
        %v3730 = vrcp.pop %v3729
        %v3731 = vmul.f32 1.0, %v3730
        %v3733 = vrot.slane %v3678, 6
        %v3735 = vadd.f32 %v3052, %v3733
        %v3736 = vxor.u32 %v3735, 2147483648
        %v3737 = vmul.f32 %v3736, 1.442695
        %v3738 = vpow.pop %v3737
        %v3739 = vadd.f32 %v3738, 1.0
        %v3740 = vrcp.pop %v3739
        %v3741 = vmul.f32 1.0, %v3740
        %v3742 = vadd.f32 %v3717, %v3288
        %v3744 = vrot.slane %v3742, 6
        %v3746 = vmul.f32 %v3731, %v3744
        %v3747 = vadd.f32 %v3251, %v3746
        %v3748 = vtanh.pop %v3747
        %v3749 = vsub.f32 1.0, %v3741
        %v3750 = vmul.f32 %v3749, %v3748
        %v3752 = vrot.slane %v3635, 7
        %v3754 = vmul.f32 %v3741, %v3752
        %v3755 = vadd.f32 %v3750, %v3754
        %v3756 = vpack.c.bf16 %v3755, %v3755
        %v3758 = vrot.slane %v3756, 1
        %3760 = vmatprep.subr.bf16.mxu0 %v3370
        %3761 = vmatpush1.bf16.msra.mxu0 %v3369
        %3762 = vmatprep.subr.bf16.mxu0 %v3373
        %3763 = vmatpush1.bf16.msra.mxu0 %v3372
        %3764 = vmatprep.subr.bf16.mxu0 %v3376
        %3765 = vmatpush1.bf16.msra.mxu0 %v3375
        %3766 = vmatprep.subr.bf16.mxu0 %v3379
        %3767 = vmatpush1.bf16.msra.mxu0 %v3378
        %3768 = vmatprep.subr.bf16.mxu0 %v3382
        %3769 = vmatpush1.bf16.msra.mxu0 %v3381
        %3770 = vmatprep.subr.bf16.mxu0 %v3385
        %3771 = vmatpush1.bf16.msra.mxu0 %v3384
        %3772 = vmatprep.subr.bf16.mxu0 %v3388
        %3773 = vmatpush1.bf16.msra.mxu0 %v3387
        %3774 = vmatprep.subr.bf16.mxu0 %v3391
        %3775 = vmatpush1.bf16.msra.mxu0 %v3390
        %3776 = vmatprep.subr.bf16.mxu0 0
        %3777 = vmatpush1.bf16.msra.mxu0 0
        %3778 = vmatprep.subr.bf16.mxu0 0
        %3779 = vmatpush1.bf16.msra.mxu0 0
        %3780 = vmatprep.subr.bf16.mxu0 0
        %3781 = vmatpush1.bf16.msra.mxu0 0
        %3782 = vmatprep.subr.bf16.mxu0 0
        %3783 = vmatpush1.bf16.msra.mxu0 0
        %3784 = vmatprep.subr.bf16.mxu0 0
        %3785 = vmatpush1.bf16.msra.mxu0 0
        %3786 = vmatprep.subr.bf16.mxu0 0
        %3787 = vmatpush1.bf16.msra.mxu0 0
        %3788 = vmatprep.subr.bf16.mxu0 0
        %3789 = vmatpush1.bf16.msra.mxu0 0
        %3790 = vmatprep.subr.bf16.mxu0 0
        %3791 = vmatpush1.bf16.msra.mxu0 0
        %3792 = vmatprep.mubr.bf16.mxu0 0
        %3793 = vmatmul.mubr.bf16.gmra.mrb[0].mxu0 %v3758
        %v3794 = vpop.f32.mrb[0].mxu0
        %v3795 = vadd.f32 0.0, %v3794
        %v3796 = vpop.f32.mrb[0].mxu0
        %v3797 = vadd.f32 0.0, %v3796
        %v3798 = vpop.f32.mrb[0].mxu0
        %v3799 = vpop.f32.mrb[0].mxu0
        %3800 = vdwg.mxu0
        %3801 = vmatprep.subr.bf16.mxu0 0
        %3802 = vmatpush1.bf16.msra.mxu0 %v3371
        %3803 = vmatprep.subr.bf16.mxu0 0
        %3804 = vmatpush1.bf16.msra.mxu0 %v3374
        %3805 = vmatprep.subr.bf16.mxu0 0
        %3806 = vmatpush1.bf16.msra.mxu0 %v3377
        %3807 = vmatprep.subr.bf16.mxu0 0
        %3808 = vmatpush1.bf16.msra.mxu0 %v3380
        %3809 = vmatprep.subr.bf16.mxu0 0
        %3810 = vmatpush1.bf16.msra.mxu0 %v3383
        %3811 = vmatprep.subr.bf16.mxu0 0
        %3812 = vmatpush1.bf16.msra.mxu0 %v3386
        %3813 = vmatprep.subr.bf16.mxu0 0
        %3814 = vmatpush1.bf16.msra.mxu0 %v3389
        %3815 = vmatprep.subr.bf16.mxu0 0
        %3816 = vmatpush1.bf16.msra.mxu0 %v3392
        %3817 = vmatprep.subr.bf16.mxu0 0
        %3818 = vmatpush1.bf16.msra.mxu0 0
        %3819 = vmatprep.subr.bf16.mxu0 0
        %3820 = vmatpush1.bf16.msra.mxu0 0
        %3821 = vmatprep.subr.bf16.mxu0 0
        %3822 = vmatpush1.bf16.msra.mxu0 0
        %3823 = vmatprep.subr.bf16.mxu0 0
        %3824 = vmatpush1.bf16.msra.mxu0 0
        %3825 = vmatprep.subr.bf16.mxu0 0
        %3826 = vmatpush1.bf16.msra.mxu0 0
        %3827 = vmatprep.subr.bf16.mxu0 0
        %3828 = vmatpush1.bf16.msra.mxu0 0
        %3829 = vmatprep.subr.bf16.mxu0 0
        %3830 = vmatpush1.bf16.msra.mxu0 0
        %3831 = vmatprep.subr.bf16.mxu0 0
        %3832 = vmatpush1.bf16.msra.mxu0 0
        %3833 = vmatprep.mubr.bf16.mxu0 0
        %3834 = vmatmul.mubr.bf16.gmra.mrb[0].mxu0 %v3758
        %v3835 = vpop.f32.mrb[0].mxu0
        %v3836 = vadd.f32 0.0, %v3835
        %v3837 = vpop.f32.mrb[0].mxu0
        %v3838 = vpop.f32.mrb[0].mxu0
        %v3839 = vpop.f32.mrb[0].mxu0
        %3840 = vdwg.mxu0
        %v3842 = vrot.slane %v3795, 5
        %v3844 = vadd.f32 %v3050, %v3842
        %v3845 = vxor.u32 %v3844, 2147483648
        %v3846 = vmul.f32 %v3845, 1.442695
        %v3847 = vpow.pop %v3846
        %v3848 = vadd.f32 %v3847, 1.0
        %v3849 = vrcp.pop %v3848
        %v3850 = vmul.f32 1.0, %v3849
        %v3852 = vrot.slane %v3797, 5
        %v3854 = vadd.f32 %v3052, %v3852
        %v3855 = vxor.u32 %v3854, 2147483648
        %v3856 = vmul.f32 %v3855, 1.442695
        %v3857 = vpow.pop %v3856
        %v3858 = vadd.f32 %v3857, 1.0
        %v3859 = vrcp.pop %v3858
        %v3860 = vmul.f32 1.0, %v3859
        %v3861 = vadd.f32 %v3836, %v3288
        %v3863 = vrot.slane %v3861, 5
        %v3865 = vmul.f32 %v3850, %v3863
        %v3866 = vadd.f32 %v3251, %v3865
        %v3867 = vtanh.pop %v3866
        %v3868 = vsub.f32 1.0, %v3860
        %v3869 = vmul.f32 %v3868, %v3867
        %v3871 = vrot.slane %v3755, 7
        %v3873 = vmul.f32 %v3860, %v3871
        %v3874 = vadd.f32 %v3869, %v3873
        %v3875 = vpack.c.bf16 %v3874, %v3874
        %v3876 = vld [vmem:[%s5] sm:$0xf]
        %v3877 = vld [vmem:[%s5 + $0x4] sm:$0xf]
        %v3878 = vld [vmem:[%s5 + $0x8] sm:$0xf]
        %v3879 = vld [vmem:[%s5 + $0xc] sm:$0xf]
        %v3880 = vld [vmem:[%s5 + $0x10] sm:$0xf]
        %v3881 = vld [vmem:[%s5 + $0x14] sm:$0xf]
        %v3882 = vld [vmem:[%s5 + $0x18] sm:$0xf]
        %v3883 = vld [vmem:[%s5 + $0x1c] sm:$0xf]
        %v3884 = vld [vmem:[%s5 + $0x20] sm:$0xf]
        %v3885 = vld [vmem:[%s5 + $0x24] sm:$0xf]
        %v3886 = vld [vmem:[%s5 + $0x28] sm:$0xf]
        %v3887 = vld [vmem:[%s5 + $0x2c] sm:$0xf]
        %v3888 = vld [vmem:[%s5 + $0x30] sm:$0xf]
        %v3889 = vld [vmem:[%s5 + $0x34] sm:$0xf]
        %v3890 = vld [vmem:[%s5 + $0x38] sm:$0xf]
        %v3891 = vld [vmem:[%s5 + $0x3c] sm:$0xf]
        %v3892 = vld [vmem:[%s6] sm:$0x1]
        %v3894 = vshrl.u32 %v3875, 16
        %v3896 = vrot.slane %v3894, 1
        %v3914 = vunpack.c.l.b16 %v3876
        %v3915 = vunpack.c.l.b16 %v3877
        %v3916 = vunpack.c.l.b16 %v3878
        %v3917 = vunpack.c.l.b16 %v3879
        %v3918 = vunpack.c.l.b16 %v3880
        %v3919 = vunpack.c.l.b16 %v3881
        %v3920 = vunpack.c.l.b16 %v3882
        %v3921 = vunpack.c.l.b16 %v3883
        %v3922 = vunpack.c.l.b16 %v3884
        %v3923 = vunpack.c.l.b16 %v3885
        %v3924 = vunpack.c.l.b16 %v3886
        %v3925 = vunpack.c.l.b16 %v3887
        %v3926 = vunpack.c.l.b16 %v3888
        %v3927 = vunpack.c.l.b16 %v3889
        %v3928 = vunpack.c.l.b16 %v3890
        %v3929 = vunpack.c.l.b16 %v3891
        %v3930 = vpack.c.b16 %v3915, %v3914
        %v3931 = vpack.c.b16 %v3917, %v3916
        %v3932 = vpack.c.b16 %v3919, %v3918
        %v3933 = vpack.c.b16 %v3921, %v3920
        %v3934 = vpack.c.b16 %v3923, %v3922
        %v3935 = vpack.c.b16 %v3925, %v3924
        %v3936 = vpack.c.b16 %v3927, %v3926
        %v3937 = vpack.c.b16 %v3929, %v3928
        %3946 = vmatprep.subr.bf16.mxu0 0
        %3947 = vmatpush1.bf16.msra.mxu0 %v3930
        %3948 = vmatprep.subr.bf16.mxu0 0
        %3949 = vmatpush1.bf16.msra.mxu0 %v3931
        %3950 = vmatprep.subr.bf16.mxu0 0
        %3951 = vmatpush1.bf16.msra.mxu0 %v3932
        %3952 = vmatprep.subr.bf16.mxu0 0
        %3953 = vmatpush1.bf16.msra.mxu0 %v3933
        %3954 = vmatprep.subr.bf16.mxu0 0
        %3955 = vmatpush1.bf16.msra.mxu0 %v3934
        %3956 = vmatprep.subr.bf16.mxu0 0
        %3957 = vmatpush1.bf16.msra.mxu0 %v3935
        %3958 = vmatprep.subr.bf16.mxu0 0
        %3959 = vmatpush1.bf16.msra.mxu0 %v3936
        %3960 = vmatprep.subr.bf16.mxu0 0
        %3961 = vmatpush1.bf16.msra.mxu0 %v3937
        %3962 = vmatprep.subr.bf16.mxu0 0
        %3963 = vmatpush1.bf16.msra.mxu0 0
        %3964 = vmatprep.subr.bf16.mxu0 0
        %3965 = vmatpush1.bf16.msra.mxu0 0
        %3966 = vmatprep.subr.bf16.mxu0 0
        %3967 = vmatpush1.bf16.msra.mxu0 0
        %3968 = vmatprep.subr.bf16.mxu0 0
        %3969 = vmatpush1.bf16.msra.mxu0 0
        %3970 = vmatprep.subr.bf16.mxu0 0
        %3971 = vmatpush1.bf16.msra.mxu0 0
        %3972 = vmatprep.subr.bf16.mxu0 0
        %3973 = vmatpush1.bf16.msra.mxu0 0
        %3974 = vmatprep.subr.bf16.mxu0 0
        %3975 = vmatpush1.bf16.msra.mxu0 0
        %3976 = vmatprep.subr.bf16.mxu0 0
        %3977 = vmatpush1.bf16.msra.mxu0 0
        %3978 = vmatprep.mubr.bf16.mxu0 0
        %3979 = vmatmul.mubr.bf16.gmra.mrb[0].mxu0 %v3896
        %v3980 = vpop.f32.mrb[0].mxu0
        %v3981 = vadd.f32 %v3892, %v3980
        %v3982 = vpop.f32.mrb[0].mxu0
        %v3983 = vpop.f32.mrb[0].mxu0
        %v3984 = vpop.f32.mrb[0].mxu0
        %3985 = vdwg.mxu0
        %v3986 = vmax.f32 %v3981, 0.0
        %v3987 = vld [vmem:[%s7] sm:$0x1]
        %v3988 = vmul.f32 %v3986, %v3987
        %vm3989 = vcmask 516096
        %v3990 = vsel %vm3989, %v3988, 0.0
        %3991 = vadd.xlane.f32.xlu0 %v3990
        %v3992 = vpop.xlane.xlu0 %3991
        %v3993 = vld [vmem:[#allocation2] sm:$0x1]
        %v3994 = vadd.f32 %v3992, %v3993
        %v3995 = vxor.u32 %v3994, 2147483648
        %v3996 = vmul.f32 %v3995, 1.442695
        %v3997 = vpow.pop %v3996
        %v3998 = vadd.f32 %v3997, 1.0
        %v3999 = vrcp.pop %v3998
        %v4000 = vmul.f32 1.0, %v3999
        %v4001 = vlaneseq
        %v4002 = vshrl.u32 %v4001, 7
        %v4003 = vlaneseq
        %v4004 = vand.u32 %v4003, 127
        %vm4005 = vcmp.eq.s32.totalorder %v4002, %v4004
        %v4006 = vsel %vm4005, %v4000, 0.0
        %v4007 = vadd.f32 %v4006, 0.0
        %vm4008 = vcmask 0
        %4009 = vst.msk [vmem:[%s379] sm:$0x1] %vm4008, %v4007
        %p4010 = scmp.lt.s32.totalorder %s26, 1
        %s4011 = scalar_select %p4010, %s26, 1
        %s4012 = scalar_lea.vmem %s9, %s4011
        // Predicated region
        $region69: #{tpu_custom_call.1} parent=55 // pred_check
          %p4013 = pneg %p238
        $region70: #{tpu_custom_call.1} parent=55 // pred_check_branch
          %4015 = sbr.rel (%p4013) target = $region72
        $region71: #{tpu_custom_call.1} parent=55 // pred_region
          _
        $region72: #{tpu_custom_call.1} parent=55 // pred_fallthru
          _
      $region56: #{tpu_custom_call.1} parent=5 // pred_fallthru
        _
      %p4016 = scmp.le.s32.totalorder 2, %s21
      // Predicated region
      $region73: #{tpu_custom_call.1} parent=5 // pred_check
        %p4017 = pneg %p4016
      $region74: #{tpu_custom_call.1} parent=5 // pred_check_branch
        %4019 = sbr.rel (%p4017) target = $region76
      $region75: #{tpu_custom_call.1} parent=5 // pred_region
        %s4020 = ssub.s32 %s21, 2
        // Predicated region
        $region77: #{tpu_custom_call.1} parent=75 // pred_check
          %p4021 = pneg %p244
        $region78: #{tpu_custom_call.1} parent=75 // pred_check_branch
          %4023 = sbr.rel (%p4021) target = $region80
        $region79: #{tpu_custom_call.1} parent=75 // pred_region
          %p4024 = scmp.lt.s32.totalorder %s27, 1
          %s4025 = scalar_select %p4024, %s27, 1
          %s4026 = scalar_lea.vmem %s9, %s4025
        $region80: #{tpu_custom_call.1} parent=75 // pred_fallthru
          _
      $region76: #{tpu_custom_call.1} parent=5 // pred_fallthru
        _
    $region6: #{tpu_custom_call.1} parent=1 // loop_footer
      %s25 = sadd.s32 1, %s21
    $region7: #{tpu_custom_call.1} parent=1 // loop_footer_branch
      %20 = sbr.rel target = $region3
    $region8: #{tpu_custom_call.1} parent=1 // loop_exit
      _
    %4027 = vsyncpa [#allocation4], 1
    %s4028 = scalar_lea.sflag [#allocation4], 1
    %4029 = vsyncpa %s4028, 1
    %4030 = vsyncpa [#allocation6], 1

</llo_original>
